<compile_context>
chip_gen: v7x
topology: tpu7x:2x2x1
jax: 0.10.0
libtpu: 0.0.40
codegen_flags: <defaults>
</compile_context>

<pallas_src>
import functools
import math

import jax
import jax.numpy as jnp
from jax.experimental import pallas as pl
from jax.experimental.pallas import tpu as pltpu

LANE = 128


def _round_up(x, m):
    return (x + m - 1) // m * m


def _vmem_bytes(shape, itemsize):
    """Rough VMEM footprint of a buffer (last dim -> 128 lanes, 2nd-last -> 8)."""
    if len(shape) == 0:
        return 4 * 128 * itemsize
    dims = list(shape)
    dims[-1] = _round_up(dims[-1], 128)
    if len(dims) >= 2:
        dims[-2] = _round_up(dims[-2], 8)
    n = 1
    for d in dims:
        n *= d
    return n * itemsize


# ---------------------------------------------------------------------------
# Fused DoubleConv kernel (block_n images per grid step)
# ---------------------------------------------------------------------------
def _double_conv_kernel(xcol_ref, w1_ref, w2_ref, b2_ref, o_ref, b_scr,
                        *, H, Wp, C1, C2, C2p):
    # xcol_ref: (Nb, H*Wp, 9*Cin+1) bf16  conv1 im2col (+ bias/valid-mask col)
    # w1_ref  : (9*Cin+1, C1)       bf16  conv1 weights, BN folded, bias as row
    # w2_ref  : (3, 3*C1, C2)       bf16  conv2 weights, dx folded into K
    # b2_ref  : (1, C2)             f32   conv2 folded bias
    # o_ref   : (Nb, H*Wp, C2p)     bf16  lane-dense output block
    # b_scr   : (Nb, (H+2)*Wp, 3*C1) bf16 dx-folded conv1 activation (persistent)
    Nb = xcol_ref.shape[0]
    HWp = H * Wp
    FLAT = (H + 2) * Wp
    M = Nb * HWp
    K1 = xcol_ref.shape[-1]
    K2 = 3 * C1

    # Re-zero only the top/bottom border row-bands of the dx-folded scratch
    # that conv2's matmuls read but the interior store below never writes.
    # (Cheaper than a full re-zero; safe even when the "parallel" batch axis
    #  is split across TensorCores, unlike a program_id==0-only zero.)
    zt = Wp + 8
    zb = (H + 1) * Wp - 8
    b_scr[:, 0:zt, :] = jnp.zeros((Nb, zt, K2), b_scr.dtype)
    b_scr[:, zb:FLAT, :] = jnp.zeros((Nb, FLAT - zb, K2), b_scr.dtype)

    # ----- conv1: one MXU matmul, K = 9*Cin + 1 (bias rides the mask column;
    #       pad columns of the flat grid come out as exact zeros).
    lhs1 = xcol_ref[...].reshape(M, K1)
    a1 = jnp.dot(lhs1, w1_ref[...], preferred_element_type=jnp.float32)
    a1 = jnp.maximum(a1, 0.0).astype(b_scr.dtype).reshape(Nb, HWp, C1)

    # ----- scatter a1 into the dx-folded buffer: channel block `dx` holds the
    #       padded activation map shifted by dx along the flat row axis.
    for dx in range(3):
        off = Wp + 1 - dx
        b_scr[:, off:off + HWp, dx * C1:(dx + 1) * C1] = a1

    # ----- conv2: 3 matmuls (one per dy), K = 3*C1; register accumulation at
    #       the true channel width C2 (no 128-wide f32 round-trips).
    acc = jnp.dot(b_scr[:, 0:HWp, :].reshape(M, K2), w2_ref[0],
                  preferred_element_type=jnp.float32)
    acc += jnp.dot(b_scr[:, Wp:Wp + HWp, :].reshape(M, K2), w2_ref[1],
                   preferred_element_type=jnp.float32)
    acc += jnp.dot(b_scr[:, 2 * Wp:2 * Wp + HWp, :].reshape(M, K2), w2_ref[2],
                   preferred_element_type=jnp.float32)

    y = jnp.maximum(acc + b2_ref[...], 0.0).astype(o_ref.dtype)
    if C2p > C2:
        # Zero-pad channels so the store is a full 128-lane (unmasked) vst.
        y = jnp.concatenate([y, jnp.zeros((M, C2p - C2), o_ref.dtype)], axis=-1)
    o_ref[...] = y.reshape(Nb, HWp, C2p)


# ---------------------------------------------------------------------------
# Wrapper
# ---------------------------------------------------------------------------
def double_conv_forward(x_nchw, params, *, out_ch, block_n=None):
    """DoubleConv forward: (conv3x3 -> BN(eval) -> ReLU) x 2. NCHW in/out (bf16 out)."""
    N, Cin, H, W = x_nchw.shape
    w1, w2, b2 = params["w1cat"], params["w2cat"], params["b2"]
    C1 = w1.shape[-1]
    C2 = out_ch
    K1 = w1.shape[0]                         # 9*Cin + 1
    assert K1 == 9 * Cin + 1 and w2.shape == (3, 3 * C1, C2)

    Wp = _round_up(W + 2, 8)                 # sublane-aligned flat row width
    HWp = H * Wp
    FLAT = (H + 2) * Wp
    C2p = _round_up(C2, LANE)

    if block_n is None:
        block_n = math.gcd(N, 8)
    assert N % block_n == 0

    # --- NCHW -> NHWC bf16 + conv1 im2col over the (H, Wp) flat grid ------
    x = jnp.transpose(x_nchw, (0, 2, 3, 1)).astype(jnp.bfloat16)
    xp = jnp.pad(x, ((0, 0), (1, 1), (1, 1), (0, 0)))
    taps = [xp[:, dy:dy + H, dx:dx + W, :]
            for dy in range(3) for dx in range(3)]
    ones = jnp.ones((N, H, W, 1), jnp.bfloat16)          # bias / valid-pixel col
    xcol = jnp.concatenate(taps + [ones], axis=-1)        # (N, H, W, 9*Cin+1)
    xcol = jnp.pad(xcol, ((0, 0), (0, 0), (0, Wp - W), (0, 0)))
    xcol = xcol.reshape(N, HWp, K1)

    kernel = functools.partial(_double_conv_kernel, H=H, Wp=Wp,
                               C1=C1, C2=C2, C2p=C2p)

    # --- VMEM budget: actual double-buffered footprint, clamped to 3/4 of
    #     physical VMEM (never hard-code a full-VMEM limit).
    in_b = _vmem_bytes((block_n, HWp, K1), 2)
    out_b = _vmem_bytes((block_n, HWp, C2p), 2)
    w_b = (_vmem_bytes(w1.shape, 2) + _vmem_bytes(w2.shape, 2)
           + _vmem_bytes(b2.shape, 4))
    scr_b = _vmem_bytes((block_n, FLAT, 3 * C1), 2)
    footprint = 2 * (in_b + out_b) + 2 * w_b + scr_b
    try:
        phys = int(pltpu.get_tpu_info().vmem_capacity_bytes)
    except Exception:
        phys = 64 * 1024 * 1024
    vmem_limit = int(min(phys * 3 // 4, 2 * footprint + (8 << 20)))

    out = pl.pallas_call(
        kernel,
        out_shape=jax.ShapeDtypeStruct((N, HWp, C2p), jnp.bfloat16),
        grid=(N // block_n,),
        in_specs=[
            pl.BlockSpec((block_n, HWp, K1), lambda i: (i, 0, 0)),  # im2col x
            pl.BlockSpec((K1, C1), lambda i: (0, 0)),               # w1 (+bias row)
            pl.BlockSpec((3, 3 * C1, C2), lambda i: (0, 0, 0)),     # w2 (dx-folded)
            pl.BlockSpec((1, C2), lambda i: (0, 0)),                # b2
        ],
        out_specs=pl.BlockSpec((block_n, HWp, C2p), lambda i: (i, 0, 0)),
        scratch_shapes=[pltpu.VMEM((block_n, FLAT, 3 * C1), jnp.bfloat16)],
        compiler_params=pltpu.CompilerParams(
            dimension_semantics=("parallel",),     # batch across v7x's 2 TCs
            vmem_limit_bytes=vmem_limit),
    )(xcol, w1, w2, b2)

    # (N, H*Wp, C2p) -> crop pad columns & padded channels -> NCHW (bf16).
    out = out.reshape(N, H, Wp, C2p)[:, :, :W, :C2]
    return jnp.transpose(out, (0, 3, 1, 2))


# ---------------------------------------------------------------------------
# Deterministic synthetic parameters (Conv + eval-mode BN, folded & packed)
# ---------------------------------------------------------------------------
def make_double_conv_params(key, in_ch, out_ch, eps=1e-5):
    def layer(k, cin, cout):
        kw, kb, kg, kbe, km, kv = jax.random.split(k, 6)
        w = jax.random.normal(kw, (3, 3, cin, cout), jnp.float32) \
            * (2.0 / (9 * cin)) ** 0.5
        b = 0.05 * jax.random.normal(kb, (cout,), jnp.float32)
        gamma = 1.0 + 0.1 * jax.random.normal(kg, (cout,), jnp.float32)
        beta = 0.1 * jax.random.normal(kbe, (cout,), jnp.float32)
        mean = 0.1 * jax.random.normal(km, (cout,), jnp.float32)
        var = 1.0 + 0.1 * jax.random.uniform(kv, (cout,), jnp.float32)
        scale = gamma / jnp.sqrt(var + eps)                    # BN fold
        w_eff = (w * scale).astype(jnp.bfloat16)               # MXU operand dtype
        b_eff = ((b - mean) * scale + beta).astype(jnp.float32)
        return w_eff, b_eff

    k1, k2 = jax.random.split(key)
    w1, b1 = layer(k1, in_ch, out_ch)
    w2, b2 = layer(k2, out_ch, out_ch)
    C1 = out_ch

    b1_bf16 = b1.astype(jnp.bfloat16)        # rides inside the bf16 weight matrix
    w1cat = jnp.concatenate(
        [w1.reshape(9 * in_ch, C1), b1_bf16.reshape(1, C1)], axis=0)
    w2cat = w2.reshape(3, 3 * C1, out_ch)    # (dy, dx*C1 + c, cout)

    params = {"w1cat": w1cat, "w2cat": w2cat, "b2": b2.reshape(1, out_ch)}
    ref = {"w1": w1.astype(jnp.float32), "b1": b1_bf16.astype(jnp.float32),
           "w2": w2.astype(jnp.float32), "b2": b2}
    return params, ref


# ---------------------------------------------------------------------------
# Pure-JAX reference (mirrors the kernel's bf16 quantisation points)
# ---------------------------------------------------------------------------
def double_conv_reference(x_nchw, ref_params):
    x = jnp.transpose(x_nchw, (0, 2, 3, 1)).astype(jnp.bfloat16).astype(jnp.float32)

    def conv_bias_relu(xv, w, b):
        y = jax.lax.conv_general_dilated(
            xv, w, window_strides=(1, 1), padding=((1, 1), (1, 1)),
            dimension_numbers=("NHWC", "HWIO", "NHWC"))
        return jnp.maximum(y + b.reshape(1, 1, 1, -1), 0.0)

    a1 = conv_bias_relu(x, ref_params["w1"], ref_params["b1"])
    a1 = a1.astype(jnp.bfloat16).astype(jnp.float32)
    a2 = conv_bias_relu(a1, ref_params["w2"], ref_params["b2"])
    return jnp.transpose(a2, (0, 3, 1, 2))


# ---------------------------------------------------------------------------
if __name__ == "__main__":
    key = jax.random.PRNGKey(0)
    k_in, k_par = jax.random.split(key)

    N, C_IN, H, W = 2, 4, 16, 16
    C_OUT = 32

    x = jax.random.normal(k_in, (N, C_IN, H, W), jnp.float32)
    params, ref_params = make_double_conv_params(k_par, C_IN, C_OUT)

    fwd = jax.jit(double_conv_forward, static_argnames=("out_ch", "block_n"))

    # Batched grid step: both images folded into the matmul M dimension.
    out = jax.block_until_ready(fwd(x, params, out_ch=C_OUT, block_n=2))
    assert out.shape == (N, C_OUT, H, W), out.shape
    out_f32 = out.astype(jnp.float32)
    assert bool(jnp.all(jnp.isfinite(out_f32)))
    assert bool(jnp.all(out_f32 >= 0.0))                    # ReLU range

    ref = double_conv_reference(x, ref_params)
    err = float(jnp.max(jnp.abs(out_f32 - ref) / (1.0 + jnp.abs(ref))))
    assert err < 1e-2, f"max rel err vs reference: {err}"

    # One-image-per-step path (multi-step grid, persistent scratch re-use).
    out1 = jax.block_until_ready(fwd(x, params, out_ch=C_OUT, block_n=1))
    err1 = float(jnp.max(jnp.abs(out1.astype(jnp.float32) - ref)
                         / (1.0 + jnp.abs(ref))))
    assert err1 < 1e-2, f"max rel err vs reference (block_n=1): {err1}"

    print("KERNEL_OK")
</pallas_src>

<mosaic_0001>
module attributes {stable_mosaic.version = 11 : i64} {
  func.func @_double_conv_kernel(%arg0: i32, %arg1: memref<2x384x37xbf16, #tpu.memory_space<vmem>>, %arg2: memref<37x32xbf16, #tpu.memory_space<vmem>>, %arg3: memref<3x96x32xbf16, #tpu.memory_space<vmem>>, %arg4: memref<1x32xf32, #tpu.memory_space<vmem>>, %arg5: memref<2x384x128xbf16, #tpu.memory_space<vmem>>, %arg6: memref<2x432x96xbf16, #tpu.memory_space<vmem>>) attributes {dimension_semantics = [#tpu.dimension_semantics<parallel>], iteration_bounds = array<i64: 1>, scalar_prefetch = 0 : i64, scratch_operands = 1 : i64, tpu.core_type = #tpu.core_type<tc>, window_params = [{transform_indices = @transform_0, window_bounds = array<i64: 2, 384, 37>}, {pipeline_mode = #tpu.pipeline_mode<synchronous>, transform_indices = @transform_1, window_bounds = array<i64: 37, 32>}, {pipeline_mode = #tpu.pipeline_mode<synchronous>, transform_indices = @transform_2, window_bounds = array<i64: 3, 96, 32>}, {pipeline_mode = #tpu.pipeline_mode<synchronous>, transform_indices = @transform_3, window_bounds = array<i64: 1, 32>}, {transform_indices = @transform_4, window_bounds = array<i64: 2, 384, 128>}]} {
    %cst = arith.constant 0.000000e+00 : bf16
    %0 = vector.broadcast %cst : bf16 to vector<2x32x96xbf16>
    %c0 = arith.constant 0 : index
    %c0_0 = arith.constant 0 : index
    %c0_1 = arith.constant 0 : index
    %1 = vector.load %arg6[%c0, %c0_0, %c0_1] : memref<2x432x96xbf16, #tpu.memory_space<vmem>>, vector<2x32x96xbf16>
    tpu.vector_store %arg6[%c0, %c0_0, %c0_1], %0 {strides = array<i32>} : memref<2x432x96xbf16, #tpu.memory_space<vmem>>, vector<2x32x96xbf16>,
    %cst_2 = arith.constant 0.000000e+00 : bf16
    %2 = vector.broadcast %cst_2 : bf16 to vector<2x32x96xbf16>
    %c0_3 = arith.constant 0 : index
    %c400 = arith.constant 400 : index
    %c0_4 = arith.constant 0 : index
    %3 = vector.load %arg6[%c0_3, %c400, %c0_4] : memref<2x432x96xbf16, #tpu.memory_space<vmem>>, vector<2x32x96xbf16>
    tpu.vector_store %arg6[%c0_3, %c400, %c0_4], %2 {strides = array<i32>} : memref<2x432x96xbf16, #tpu.memory_space<vmem>>, vector<2x32x96xbf16>,
    %c0_5 = arith.constant 0 : index
    %c0_6 = arith.constant 0 : index
    %c0_7 = arith.constant 0 : index
    %4 = vector.load %arg1[%c0_5, %c0_6, %c0_7] : memref<2x384x37xbf16, #tpu.memory_space<vmem>>, vector<2x384x37xbf16>
    %5 = vector.shape_cast %4 : vector<2x384x37xbf16> to vector<768x37xbf16>
    %c0_8 = arith.constant 0 : index
    %c0_9 = arith.constant 0 : index
    %6 = vector.load %arg2[%c0_8, %c0_9] : memref<37x32xbf16, #tpu.memory_space<vmem>>, vector<37x32xbf16>
    %cst_10 = arith.constant dense<0.000000e+00> : vector<768x32xf32>
    %7 = tpu.matmul %5, %6, %cst_10 {dimension_numbers = #tpu.dot_dimension_numbers<[1], [0], [0], [1], [0, 0, 1, 1], [], []>} : vector<768x37xbf16>, vector<37x32xbf16>, vector<768x32xf32> -> vector<768x32xf32>
    %cst_11 = arith.constant 0.000000e+00 : f32
    %8 = vector.broadcast %cst_11 : f32 to vector<768x32xf32>
    %9 = arith.maximumf %7, %8 : vector<768x32xf32>
    %10 = arith.truncf %9 : vector<768x32xf32> to vector<768x32xbf16>
    %11 = vector.shape_cast %10 : vector<768x32xbf16> to vector<2x384x32xbf16>
    %c0_12 = arith.constant 0 : index
    %c25 = arith.constant 25 : index
    %c0_13 = arith.constant 0 : index
    %12 = vector.load %arg6[%c0_12, %c25, %c0_13] : memref<2x432x96xbf16, #tpu.memory_space<vmem>>, vector<2x384x32xbf16>
    tpu.vector_store %arg6[%c0_12, %c25, %c0_13], %11 {strides = array<i32>} : memref<2x432x96xbf16, #tpu.memory_space<vmem>>, vector<2x384x32xbf16>,
    %c0_14 = arith.constant 0 : index
    %c24 = arith.constant 24 : index
    %c32 = arith.constant 32 : index
    %13 = vector.load %arg6[%c0_14, %c24, %c32] : memref<2x432x96xbf16, #tpu.memory_space<vmem>>, vector<2x384x32xbf16>
    tpu.vector_store %arg6[%c0_14, %c24, %c32], %11 {strides = array<i32>} : memref<2x432x96xbf16, #tpu.memory_space<vmem>>, vector<2x384x32xbf16>,
    %c0_15 = arith.constant 0 : index
    %c23 = arith.constant 23 : index
    %c64 = arith.constant 64 : index
    %14 = vector.load %arg6[%c0_15, %c23, %c64] : memref<2x432x96xbf16, #tpu.memory_space<vmem>>, vector<2x384x32xbf16>
    tpu.vector_store %arg6[%c0_15, %c23, %c64], %11 {strides = array<i32>} : memref<2x432x96xbf16, #tpu.memory_space<vmem>>, vector<2x384x32xbf16>,
    %c0_16 = arith.constant 0 : index
    %c0_17 = arith.constant 0 : index
    %c0_18 = arith.constant 0 : index
    %15 = vector.load %arg6[%c0_16, %c0_17, %c0_18] : memref<2x432x96xbf16, #tpu.memory_space<vmem>>, vector<2x384x96xbf16>
    %16 = vector.shape_cast %15 : vector<2x384x96xbf16> to vector<768x96xbf16>
    %c0_19 = arith.constant 0 : index
    %c0_20 = arith.constant 0 : index
    %c0_21 = arith.constant 0 : index
    %17 = vector.load %arg3[%c0_19, %c0_20, %c0_21] : memref<3x96x32xbf16, #tpu.memory_space<vmem>>, vector<1x96x32xbf16>
    %18 = vector.shape_cast %17 : vector<1x96x32xbf16> to vector<96x32xbf16>
    %cst_22 = arith.constant dense<0.000000e+00> : vector<768x32xf32>
    %19 = tpu.matmul %16, %18, %cst_22 {dimension_numbers = #tpu.dot_dimension_numbers<[1], [0], [0], [1], [0, 0, 1, 1], [], []>} : vector<768x96xbf16>, vector<96x32xbf16>, vector<768x32xf32> -> vector<768x32xf32>
    %c0_23 = arith.constant 0 : index
    %c24_24 = arith.constant 24 : index
    %c0_25 = arith.constant 0 : index
    %20 = vector.load %arg6[%c0_23, %c24_24, %c0_25] : memref<2x432x96xbf16, #tpu.memory_space<vmem>>, vector<2x384x96xbf16>
    %21 = vector.shape_cast %20 : vector<2x384x96xbf16> to vector<768x96xbf16>
    %c1 = arith.constant 1 : index
    %c0_26 = arith.constant 0 : index
    %c0_27 = arith.constant 0 : index
    %22 = vector.load %arg3[%c1, %c0_26, %c0_27] : memref<3x96x32xbf16, #tpu.memory_space<vmem>>, vector<1x96x32xbf16>
    %23 = vector.shape_cast %22 : vector<1x96x32xbf16> to vector<96x32xbf16>
    %cst_28 = arith.constant dense<0.000000e+00> : vector<768x32xf32>
    %24 = tpu.matmul %21, %23, %cst_28 {dimension_numbers = #tpu.dot_dimension_numbers<[1], [0], [0], [1], [0, 0, 1, 1], [], []>} : vector<768x96xbf16>, vector<96x32xbf16>, vector<768x32xf32> -> vector<768x32xf32>
    %25 = arith.addf %19, %24 : vector<768x32xf32>
    %c0_29 = arith.constant 0 : index
    %c48 = arith.constant 48 : index
    %c0_30 = arith.constant 0 : index
    %26 = vector.load %arg6[%c0_29, %c48, %c0_30] : memref<2x432x96xbf16, #tpu.memory_space<vmem>>, vector<2x384x96xbf16>
    %27 = vector.shape_cast %26 : vector<2x384x96xbf16> to vector<768x96xbf16>
    %c2 = arith.constant 2 : index
    %c0_31 = arith.constant 0 : index
    %c0_32 = arith.constant 0 : index
    %28 = vector.load %arg3[%c2, %c0_31, %c0_32] : memref<3x96x32xbf16, #tpu.memory_space<vmem>>, vector<1x96x32xbf16>
    %29 = vector.shape_cast %28 : vector<1x96x32xbf16> to vector<96x32xbf16>
    %cst_33 = arith.constant dense<0.000000e+00> : vector<768x32xf32>
    %30 = tpu.matmul %27, %29, %cst_33 {dimension_numbers = #tpu.dot_dimension_numbers<[1], [0], [0], [1], [0, 0, 1, 1], [], []>} : vector<768x96xbf16>, vector<96x32xbf16>, vector<768x32xf32> -> vector<768x32xf32>
    %31 = arith.addf %25, %30 : vector<768x32xf32>
    %c0_34 = arith.constant 0 : index
    %c0_35 = arith.constant 0 : index
    %32 = vector.load %arg4[%c0_34, %c0_35] : memref<1x32xf32, #tpu.memory_space<vmem>>, vector<1x32xf32>
    %33 = vector.broadcast %32 : vector<1x32xf32> to vector<768x32xf32>
    %34 = arith.addf %31, %33 : vector<768x32xf32>
    %cst_36 = arith.constant 0.000000e+00 : f32
    %35 = vector.broadcast %cst_36 : f32 to vector<768x32xf32>
    %36 = arith.maximumf %34, %35 : vector<768x32xf32>
    %37 = arith.truncf %36 : vector<768x32xf32> to vector<768x32xbf16>
    %cst_37 = arith.constant 0.000000e+00 : bf16
    %38 = vector.broadcast %cst_37 : bf16 to vector<768x96xbf16>
    %39 = tpu.concatenate %37, %38 in 1 : vector<768x32xbf16>, vector<768x96xbf16> -> vector<768x128xbf16>
    %40 = vector.shape_cast %39 : vector<768x128xbf16> to vector<2x384x128xbf16>
    %c0_38 = arith.constant 0 : index
    %c0_39 = arith.constant 0 : index
    %c0_40 = arith.constant 0 : index
    %41 = vector.load %arg5[%c0_38, %c0_39, %c0_40] : memref<2x384x128xbf16, #tpu.memory_space<vmem>>, vector<2x384x128xbf16>
    tpu.vector_store %arg5[%c0_38, %c0_39, %c0_40], %40 {strides = array<i32>} : memref<2x384x128xbf16, #tpu.memory_space<vmem>>, vector<2x384x128xbf16>,
    return
  }
  func.func @transform_0(%arg0: i32) -> (i32, i32, i32) {
    %c0_i32 = arith.constant 0 : i32
    %c0_i32_0 = arith.constant 0 : i32
    %c0_i32_1 = arith.constant 0 : i32
    return %arg0, %c0_i32, %c0_i32_0 : i32, i32, i32
  }
  func.func @transform_1(%arg0: i32) -> (i32, i32) {
    %c0_i32 = arith.constant 0 : i32
    %c0_i32_0 = arith.constant 0 : i32
    %c0_i32_1 = arith.constant 0 : i32
    return %c0_i32, %c0_i32_0 : i32, i32
  }
  func.func @transform_2(%arg0: i32) -> (i32, i32, i32) {
    %c0_i32 = arith.constant 0 : i32
    %c0_i32_0 = arith.constant 0 : i32
    %c0_i32_1 = arith.constant 0 : i32
    %c0_i32_2 = arith.constant 0 : i32
    return %c0_i32, %c0_i32_0, %c0_i32_1 : i32, i32, i32
  }
  func.func @transform_3(%arg0: i32) -> (i32, i32) {
    %c0_i32 = arith.constant 0 : i32
    %c0_i32_0 = arith.constant 0 : i32
    %c0_i32_1 = arith.constant 0 : i32
    return %c0_i32, %c0_i32_0 : i32, i32
  }
  func.func @transform_4(%arg0: i32) -> (i32, i32, i32) {
    %c0_i32 = arith.constant 0 : i32
    %c0_i32_0 = arith.constant 0 : i32
    %c0_i32_1 = arith.constant 0 : i32
    return %arg0, %c0_i32, %c0_i32_0 : i32, i32, i32
  }
}

</mosaic_0001>

<llo_original>
// kernel: double_conv_forward.1
$region0: #{double_conv_forward.1}
  #allocation0 [shape = 'u32[]', space=smem, size = 0x4, offset = 0x4, fixed_abs, tag = 'smem constant byte address 0x4 - core index']
  #allocation1 [shape = 'u32[144,128]{1,0:T(1,128)}', space=vmem, size = 0x12000, scoped, tag = 'internal scratch']
  #allocation2 [shape = 'bf16[2,432,96]{2,1,0:T(16,128)(2,1)}', space=vmem, size = 0x36000, scoped, tag = 'scratch operand']
  %s0 = inlined_call_operand.vmem [shape: bf16[2,384,37], index: 0, kind: input, shape index: {}]
  %s1 = inlined_call_operand.vmem [shape: bf16[37,32], index: 1, kind: input, shape index: {}]
  %s2 = inlined_call_operand.vmem [shape: bf16[3,96,32], index: 2, kind: input, shape index: {}]
  %s3 = inlined_call_operand.vmem [shape: f32[1,32], index: 3, kind: input, shape index: {}]
  %s4 = inlined_call_operand.vmem [shape: bf16[2,384,128], index: 4, kind: output, shape index: {}]
  %s5 = sld [smem:[#allocation0]]
  $region26: #{double_conv_forward.1} parent=0
    _
  %s7 = ssub.s32 1, %s5
  %s8 = scalar_select 0, %s7, %s5
  // Predicated region
  $region2: #{double_conv_forward.1} parent=0 // pred_check
    _
  $region3: #{double_conv_forward.1} parent=0 // pred_check_branch
    %10 = sbr.rel (0) target = $region5
  $region4: #{double_conv_forward.1} parent=0 // pred_region
    _
  $region5: #{double_conv_forward.1} parent=0 // pred_fallthru
    _
  // Predicated region
  $region6: #{double_conv_forward.1} parent=0 // pred_check
    _
  $region7: #{double_conv_forward.1} parent=0 // pred_check_branch
    %12 = sbr.rel (0) target = $region9
  $region8: #{double_conv_forward.1} parent=0 // pred_region
    _
  $region9: #{double_conv_forward.1} parent=0 // pred_fallthru
    _
  // Predicated region
  $region10: #{double_conv_forward.1} parent=0 // pred_check
    _
  $region11: #{double_conv_forward.1} parent=0 // pred_check_branch
    %14 = sbr.rel (0) target = $region13
  $region12: #{double_conv_forward.1} parent=0 // pred_region
    _
  $region13: #{double_conv_forward.1} parent=0 // pred_fallthru
    _
  // Predicated region
  $region14: #{double_conv_forward.1} parent=0 // pred_check
    _
  $region15: #{double_conv_forward.1} parent=0 // pred_check_branch
    %16 = sbr.rel (0) target = $region17
  $region16: #{double_conv_forward.1} parent=0 // pred_region
    _
  $region17: #{double_conv_forward.1} parent=0 // pred_fallthru
    _
  %vm18 = vcmask 785408
  %19 = vst.msk [vmem:[#allocation2] sm:$0xff] %vm18, 0
  %20 = vst.msk [vmem:[#allocation2 + $0x8] sm:$0xff] %vm18, 0
  %21 = vst.msk [vmem:[#allocation2 + $0xd8] sm:$0xff] %vm18, 0
  %22 = vst.msk [vmem:[#allocation2 + $0xe0] sm:$0xff] %vm18, 0
  %23 = vst.msk [vmem:[#allocation2 + $0xc8] sm:$0xff] %vm18, 0
  %24 = vst.msk [vmem:[#allocation2 + $0xd0] sm:$0xff] %vm18, 0
  %25 = vst.msk [vmem:[#allocation2 + $0x1a0] sm:$0xff] %vm18, 0
  %26 = vst.msk [vmem:[#allocation2 + $0x1a8] sm:$0xff] %vm18, 0
  %v27 = vld [vmem:[%s0] sm:$0xf]
  %v28 = vld [vmem:[%s0 + $0x4] sm:$0xf]
  %v29 = vld [vmem:[%s0 + $0x8] sm:$0xf]
  %v30 = vld [vmem:[%s0 + $0xc] sm:$0xf]
  %v31 = vld [vmem:[%s0 + $0x10] sm:$0xf]
  %v32 = vld [vmem:[%s0 + $0x14] sm:$0xf]
  %v33 = vld [vmem:[%s0 + $0x18] sm:$0xf]
  %v34 = vld [vmem:[%s0 + $0x1c] sm:$0xf]
  %v35 = vld [vmem:[%s0 + $0x20] sm:$0xf]
  %v36 = vld [vmem:[%s0 + $0x24] sm:$0xf]
  %v37 = vld [vmem:[%s0 + $0x28] sm:$0xf]
  %v38 = vld [vmem:[%s0 + $0x2c] sm:$0xf]
  %v39 = vld [vmem:[%s0 + $0x30] sm:$0xf]
  %v40 = vld [vmem:[%s0 + $0x34] sm:$0xf]
  %v41 = vld [vmem:[%s0 + $0x38] sm:$0xf]
  %v42 = vld [vmem:[%s0 + $0x3c] sm:$0xf]
  %v43 = vld [vmem:[%s0 + $0x40] sm:$0xf]
  %v44 = vld [vmem:[%s0 + $0x44] sm:$0xf]
  %v45 = vld [vmem:[%s0 + $0x48] sm:$0xf]
  %v46 = vld [vmem:[%s0 + $0x4c] sm:$0xf]
  %v47 = vld [vmem:[%s0 + $0x50] sm:$0xf]
  %v48 = vld [vmem:[%s0 + $0x54] sm:$0xf]
  %v49 = vld [vmem:[%s0 + $0x58] sm:$0xf]
  %v50 = vld [vmem:[%s0 + $0x5c] sm:$0xf]
  %v51 = vld [vmem:[%s0 + $0x60] sm:$0xf]
  %v52 = vld [vmem:[%s0 + $0x64] sm:$0xf]
  %v53 = vld [vmem:[%s0 + $0x68] sm:$0xf]
  %v54 = vld [vmem:[%s0 + $0x6c] sm:$0xf]
  %v55 = vld [vmem:[%s0 + $0x70] sm:$0xf]
  %v56 = vld [vmem:[%s0 + $0x74] sm:$0xf]
  %v57 = vld [vmem:[%s0 + $0x78] sm:$0xf]
  %v58 = vld [vmem:[%s0 + $0x7c] sm:$0xf]
  %v59 = vld [vmem:[%s0 + $0x80] sm:$0xf]
  %v60 = vld [vmem:[%s0 + $0x84] sm:$0xf]
  %v61 = vld [vmem:[%s0 + $0x88] sm:$0xf]
  %v62 = vld [vmem:[%s0 + $0x8c] sm:$0xf]
  %v63 = vld [vmem:[%s0 + $0x90] sm:$0xf]
  %v64 = vld [vmem:[%s0 + $0x94] sm:$0xf]
  %v65 = vld [vmem:[%s0 + $0x98] sm:$0xf]
  %v66 = vld [vmem:[%s0 + $0x9c] sm:$0xf]
  %v67 = vld [vmem:[%s0 + $0xa0] sm:$0xf]
  %v68 = vld [vmem:[%s0 + $0xa4] sm:$0xf]
  %v69 = vld [vmem:[%s0 + $0xa8] sm:$0xf]
  %v70 = vld [vmem:[%s0 + $0xac] sm:$0xf]
  %v71 = vld [vmem:[%s0 + $0xb0] sm:$0xf]
  %v72 = vld [vmem:[%s0 + $0xb4] sm:$0xf]
  %v73 = vld [vmem:[%s0 + $0xb8] sm:$0xf]
  %v74 = vld [vmem:[%s0 + $0xbc] sm:$0xf]
  %v75 = vld [vmem:[%s0 + $0xc0] sm:$0xf]
  %v76 = vld [vmem:[%s0 + $0xc4] sm:$0xf]
  %v77 = vld [vmem:[%s0 + $0xc8] sm:$0xf]
  %v78 = vld [vmem:[%s0 + $0xcc] sm:$0xf]
  %v79 = vld [vmem:[%s0 + $0xd0] sm:$0xf]
  %v80 = vld [vmem:[%s0 + $0xd4] sm:$0xf]
  %v81 = vld [vmem:[%s0 + $0xd8] sm:$0xf]
  %v82 = vld [vmem:[%s0 + $0xdc] sm:$0xf]
  %v83 = vld [vmem:[%s0 + $0xe0] sm:$0xf]
  %v84 = vld [vmem:[%s0 + $0xe4] sm:$0xf]
  %v85 = vld [vmem:[%s0 + $0xe8] sm:$0xf]
  %v86 = vld [vmem:[%s0 + $0xec] sm:$0xf]
  %v87 = vld [vmem:[%s0 + $0xf0] sm:$0xf]
  %v88 = vld [vmem:[%s0 + $0xf4] sm:$0xf]
  %v89 = vld [vmem:[%s0 + $0xf8] sm:$0xf]
  %v90 = vld [vmem:[%s0 + $0xfc] sm:$0xf]
  %v91 = vld [vmem:[%s0 + $0x100] sm:$0xf]
  %v92 = vld [vmem:[%s0 + $0x104] sm:$0xf]
  %v93 = vld [vmem:[%s0 + $0x108] sm:$0xf]
  %v94 = vld [vmem:[%s0 + $0x10c] sm:$0xf]
  %v95 = vld [vmem:[%s0 + $0x110] sm:$0xf]
  %v96 = vld [vmem:[%s0 + $0x114] sm:$0xf]
  %v97 = vld [vmem:[%s0 + $0x118] sm:$0xf]
  %v98 = vld [vmem:[%s0 + $0x11c] sm:$0xf]
  %v99 = vld [vmem:[%s0 + $0x120] sm:$0xf]
  %v100 = vld [vmem:[%s0 + $0x124] sm:$0xf]
  %v101 = vld [vmem:[%s0 + $0x128] sm:$0xf]
  %v102 = vld [vmem:[%s0 + $0x12c] sm:$0xf]
  %v103 = vld [vmem:[%s0 + $0x130] sm:$0xf]
  %v104 = vld [vmem:[%s0 + $0x134] sm:$0xf]
  %v105 = vld [vmem:[%s0 + $0x138] sm:$0xf]
  %v106 = vld [vmem:[%s0 + $0x13c] sm:$0xf]
  %v107 = vld [vmem:[%s0 + $0x140] sm:$0xf]
  %v108 = vld [vmem:[%s0 + $0x144] sm:$0xf]
  %v109 = vld [vmem:[%s0 + $0x148] sm:$0xf]
  %v110 = vld [vmem:[%s0 + $0x14c] sm:$0xf]
  %v111 = vld [vmem:[%s0 + $0x150] sm:$0xf]
  %v112 = vld [vmem:[%s0 + $0x154] sm:$0xf]
  %v113 = vld [vmem:[%s0 + $0x158] sm:$0xf]
  %v114 = vld [vmem:[%s0 + $0x15c] sm:$0xf]
  %v115 = vld [vmem:[%s0 + $0x160] sm:$0xf]
  %v116 = vld [vmem:[%s0 + $0x164] sm:$0xf]
  %v117 = vld [vmem:[%s0 + $0x168] sm:$0xf]
  %v118 = vld [vmem:[%s0 + $0x16c] sm:$0xf]
  %v119 = vld [vmem:[%s0 + $0x170] sm:$0xf]
  %v120 = vld [vmem:[%s0 + $0x174] sm:$0xf]
  %v121 = vld [vmem:[%s0 + $0x178] sm:$0xf]
  %v122 = vld [vmem:[%s0 + $0x17c] sm:$0xf]
  %v123 = vld [vmem:[%s1] sm:$0xf]
  %v124 = vld [vmem:[%s1 + $0x4] sm:$0xf]
  %v125 = vld [vmem:[%s1 + $0x8] sm:$0xf]
  %v126 = vld [vmem:[%s1 + $0xc] sm:$0xf]
  %v127 = vld [vmem:[%s1 + $0x10] sm:$0x7]
  %v224 = vunpack.c.l.b16 %v27
  %v225 = vunpack.c.l.b16 %v28
  %v226 = vunpack.c.l.b16 %v29
  %v227 = vunpack.c.l.b16 %v30
  %v228 = vunpack.c.l.b16 %v31
  %v229 = vunpack.c.l.b16 %v32
  %v230 = vunpack.c.l.b16 %v33
  %v231 = vunpack.c.l.b16 %v34
  %v232 = vunpack.c.l.b16 %v35
  %v233 = vunpack.c.l.b16 %v36
  %v234 = vunpack.c.l.b16 %v37
  %v235 = vunpack.c.l.b16 %v38
  %v236 = vunpack.c.l.b16 %v39
  %v237 = vunpack.c.l.b16 %v40
  %v238 = vunpack.c.l.b16 %v41
  %v239 = vunpack.c.l.b16 %v42
  %v240 = vunpack.c.l.b16 %v43
  %v241 = vunpack.c.l.b16 %v44
  %v242 = vunpack.c.l.b16 %v45
  %v243 = vunpack.c.l.b16 %v46
  %v244 = vunpack.c.l.b16 %v47
  %v245 = vunpack.c.l.b16 %v48
  %v246 = vunpack.c.l.b16 %v49
  %v247 = vunpack.c.l.b16 %v50
  %v248 = vunpack.c.l.b16 %v51
  %v249 = vunpack.c.l.b16 %v52
  %v250 = vunpack.c.l.b16 %v53
  %v251 = vunpack.c.l.b16 %v54
  %v252 = vunpack.c.l.b16 %v55
  %v253 = vunpack.c.l.b16 %v56
  %v254 = vunpack.c.l.b16 %v57
  %v255 = vunpack.c.l.b16 %v58
  %v256 = vunpack.c.l.b16 %v59
  %v257 = vunpack.c.l.b16 %v60
  %v258 = vunpack.c.l.b16 %v61
  %v259 = vunpack.c.l.b16 %v62
  %v260 = vunpack.c.l.b16 %v63
  %v261 = vunpack.c.l.b16 %v64
  %v262 = vunpack.c.l.b16 %v65
  %v263 = vunpack.c.l.b16 %v66
  %v264 = vunpack.c.l.b16 %v67
  %v265 = vunpack.c.l.b16 %v68
  %v266 = vunpack.c.l.b16 %v69
  %v267 = vunpack.c.l.b16 %v70
  %v268 = vunpack.c.l.b16 %v71
  %v269 = vunpack.c.l.b16 %v72
  %v270 = vunpack.c.l.b16 %v73
  %v271 = vunpack.c.l.b16 %v74
  %v272 = vunpack.c.l.b16 %v75
  %v273 = vunpack.c.l.b16 %v76
  %v274 = vunpack.c.l.b16 %v77
  %v275 = vunpack.c.l.b16 %v78
  %v276 = vunpack.c.l.b16 %v79
  %v277 = vunpack.c.l.b16 %v80
  %v278 = vunpack.c.l.b16 %v81
  %v279 = vunpack.c.l.b16 %v82
  %v280 = vunpack.c.l.b16 %v83
  %v281 = vunpack.c.l.b16 %v84
  %v282 = vunpack.c.l.b16 %v85
  %v283 = vunpack.c.l.b16 %v86
  %v284 = vunpack.c.l.b16 %v87
  %v285 = vunpack.c.l.b16 %v88
  %v286 = vunpack.c.l.b16 %v89
  %v287 = vunpack.c.l.b16 %v90
  %v288 = vunpack.c.l.b16 %v91
  %v289 = vunpack.c.l.b16 %v92
  %v290 = vunpack.c.l.b16 %v93
  %v291 = vunpack.c.l.b16 %v94
  %v292 = vunpack.c.l.b16 %v95
  %v293 = vunpack.c.l.b16 %v96
  %v294 = vunpack.c.l.b16 %v97
  %v295 = vunpack.c.l.b16 %v98
  %v296 = vunpack.c.l.b16 %v99
  %v297 = vunpack.c.l.b16 %v100
  %v298 = vunpack.c.l.b16 %v101
  %v299 = vunpack.c.l.b16 %v102
  %v300 = vunpack.c.l.b16 %v103
  %v301 = vunpack.c.l.b16 %v104
  %v302 = vunpack.c.l.b16 %v105
  %v303 = vunpack.c.l.b16 %v106
  %v304 = vunpack.c.l.b16 %v107
  %v305 = vunpack.c.l.b16 %v108
  %v306 = vunpack.c.l.b16 %v109
  %v307 = vunpack.c.l.b16 %v110
  %v308 = vunpack.c.l.b16 %v111
  %v309 = vunpack.c.l.b16 %v112
  %v310 = vunpack.c.l.b16 %v113
  %v311 = vunpack.c.l.b16 %v114
  %v312 = vunpack.c.l.b16 %v115
  %v313 = vunpack.c.l.b16 %v116
  %v314 = vunpack.c.l.b16 %v117
  %v315 = vunpack.c.l.b16 %v118
  %v316 = vunpack.c.l.b16 %v119
  %v317 = vunpack.c.l.b16 %v120
  %v318 = vunpack.c.l.b16 %v121
  %v319 = vunpack.c.l.b16 %v122
  %v320 = vpack.c.b16 %v225, %v224
  %v321 = vpack.c.b16 %v227, %v226
  %v322 = vpack.c.b16 %v229, %v228
  %v323 = vpack.c.b16 %v231, %v230
  %v324 = vpack.c.b16 %v233, %v232
  %v325 = vpack.c.b16 %v235, %v234
  %v326 = vpack.c.b16 %v237, %v236
  %v327 = vpack.c.b16 %v239, %v238
  %v328 = vpack.c.b16 %v241, %v240
  %v329 = vpack.c.b16 %v243, %v242
  %v330 = vpack.c.b16 %v245, %v244
  %v331 = vpack.c.b16 %v247, %v246
  %v332 = vpack.c.b16 %v249, %v248
  %v333 = vpack.c.b16 %v251, %v250
  %v334 = vpack.c.b16 %v253, %v252
  %v335 = vpack.c.b16 %v255, %v254
  %v336 = vpack.c.b16 %v257, %v256
  %v337 = vpack.c.b16 %v259, %v258
  %v338 = vpack.c.b16 %v261, %v260
  %v339 = vpack.c.b16 %v263, %v262
  %v340 = vpack.c.b16 %v265, %v264
  %v341 = vpack.c.b16 %v267, %v266
  %v342 = vpack.c.b16 %v269, %v268
  %v343 = vpack.c.b16 %v271, %v270
  %v344 = vpack.c.b16 %v273, %v272
  %v345 = vpack.c.b16 %v275, %v274
  %v346 = vpack.c.b16 %v277, %v276
  %v347 = vpack.c.b16 %v279, %v278
  %v348 = vpack.c.b16 %v281, %v280
  %v349 = vpack.c.b16 %v283, %v282
  %v350 = vpack.c.b16 %v285, %v284
  %v351 = vpack.c.b16 %v287, %v286
  %v352 = vpack.c.b16 %v289, %v288
  %v353 = vpack.c.b16 %v291, %v290
  %v354 = vpack.c.b16 %v293, %v292
  %v355 = vpack.c.b16 %v295, %v294
  %v356 = vpack.c.b16 %v297, %v296
  %v357 = vpack.c.b16 %v299, %v298
  %v358 = vpack.c.b16 %v301, %v300
  %v359 = vpack.c.b16 %v303, %v302
  %v360 = vpack.c.b16 %v305, %v304
  %v361 = vpack.c.b16 %v307, %v306
  %v362 = vpack.c.b16 %v309, %v308
  %v363 = vpack.c.b16 %v311, %v310
  %v364 = vpack.c.b16 %v313, %v312
  %v365 = vpack.c.b16 %v315, %v314
  %v366 = vpack.c.b16 %v317, %v316
  %v367 = vpack.c.b16 %v319, %v318
  %v373 = vunpack.c.l.b16 %v123
  %v374 = vunpack.c.l.b16 %v124
  %v375 = vunpack.c.l.b16 %v125
  %v376 = vunpack.c.l.b16 %v126
  %v377 = vunpack.c.l.b16 %v127
  %v378 = vpack.c.b16 %v374, %v373
  %v379 = vpack.c.b16 %v376, %v375
  %v380 = vpack.c.b16 %v377, %v377
  %vm383 = vcmask 302080
  %v385 = vsel %vm383, %v320, 0
  %v388 = vsel %vm383, %v321, 0
  %v391 = vsel %vm383, %v322, 0
  %v394 = vsel %vm383, %v323, 0
  %v397 = vsel %vm383, %v324, 0
  %v400 = vsel %vm383, %v325, 0
  %v403 = vsel %vm383, %v326, 0
  %v406 = vsel %vm383, %v327, 0
  %v409 = vsel %vm383, %v328, 0
  %v412 = vsel %vm383, %v329, 0
  %v415 = vsel %vm383, %v330, 0
  %v418 = vsel %vm383, %v331, 0
  %v421 = vsel %vm383, %v332, 0
  %v424 = vsel %vm383, %v333, 0
  %v427 = vsel %vm383, %v334, 0
  %v430 = vsel %vm383, %v335, 0
  %v433 = vsel %vm383, %v336, 0
  %v436 = vsel %vm383, %v337, 0
  %v439 = vsel %vm383, %v338, 0
  %v442 = vsel %vm383, %v339, 0
  %v445 = vsel %vm383, %v340, 0
  %v448 = vsel %vm383, %v341, 0
  %v451 = vsel %vm383, %v342, 0
  %v454 = vsel %vm383, %v343, 0
  %v457 = vsel %vm383, %v344, 0
  %v460 = vsel %vm383, %v345, 0
  %v463 = vsel %vm383, %v346, 0
  %v466 = vsel %vm383, %v347, 0
  %v469 = vsel %vm383, %v348, 0
  %v472 = vsel %vm383, %v349, 0
  %v475 = vsel %vm383, %v350, 0
  %v478 = vsel %vm383, %v351, 0
  %v481 = vsel %vm383, %v352, 0
  %v484 = vsel %vm383, %v353, 0
  %v487 = vsel %vm383, %v354, 0
  %v490 = vsel %vm383, %v355, 0
  %v493 = vsel %vm383, %v356, 0
  %v496 = vsel %vm383, %v357, 0
  %v499 = vsel %vm383, %v358, 0
  %v502 = vsel %vm383, %v359, 0
  %v505 = vsel %vm383, %v360, 0
  %v508 = vsel %vm383, %v361, 0
  %v511 = vsel %vm383, %v362, 0
  %v514 = vsel %vm383, %v363, 0
  %v517 = vsel %vm383, %v364, 0
  %v520 = vsel %vm383, %v365, 0
  %v523 = vsel %vm383, %v366, 0
  %v526 = vsel %vm383, %v367, 0
  %vm528 = vcmask 1041408
  %vm529 = vcmask 1042432
  %v530 = vsel %vm528, 4294967295, 65535
  %v531 = vsel %vm529, %v530, 0
  %v533 = vand.u32 %v380, %v531
  %535 = vmatprep.subr.bf16.mxu0 0
  %536 = vmatpush1.bf16.msra.mxu0 %v378
  %537 = vmatprep.subr.bf16.mxu0 0
  %538 = vmatpush1.bf16.msra.mxu0 %v379
  %539 = vmatprep.subr.bf16.mxu0 0
  %540 = vmatpush1.bf16.msra.mxu0 %v533
  %541 = vmatprep.subr.bf16.mxu0 0
  %542 = vmatpush1.bf16.msra.mxu0 0
  %543 = vmatprep.subr.bf16.mxu0 0
  %544 = vmatpush1.bf16.msra.mxu0 0
  %545 = vmatprep.subr.bf16.mxu0 0
  %546 = vmatpush1.bf16.msra.mxu0 0
  %547 = vmatprep.subr.bf16.mxu0 0
  %548 = vmatpush1.bf16.msra.mxu0 0
  %549 = vmatprep.subr.bf16.mxu0 0
  %550 = vmatpush1.bf16.msra.mxu0 0
  %551 = vmatprep.subr.bf16.mxu0 0
  %552 = vmatpush1.bf16.msra.mxu0 0
  %553 = vmatprep.subr.bf16.mxu0 0
  %554 = vmatpush1.bf16.msra.mxu0 0
  %555 = vmatprep.subr.bf16.mxu0 0
  %556 = vmatpush1.bf16.msra.mxu0 0
  %557 = vmatprep.subr.bf16.mxu0 0
  %558 = vmatpush1.bf16.msra.mxu0 0
  %559 = vmatprep.subr.bf16.mxu0 0
  %560 = vmatpush1.bf16.msra.mxu0 0
  %561 = vmatprep.subr.bf16.mxu0 0
  %562 = vmatpush1.bf16.msra.mxu0 0
  %563 = vmatprep.subr.bf16.mxu0 0
  %564 = vmatpush1.bf16.msra.mxu0 0
  %565 = vmatprep.subr.bf16.mxu0 0
  %566 = vmatpush1.bf16.msra.mxu0 0
  %567 = vmatprep.mubr.bf16.mxu0 0
  %568 = vmatmul.mubr.bf16.gmra.mrb[0].mxu0 %v385
  %v569 = vpop.f32.mrb[0].mxu0
  %v570 = vadd.f32 0.0, %v569
  %v571 = vpop.f32.mrb[0].mxu0
  %v572 = vpop.f32.mrb[0].mxu0
  %v573 = vadd.f32 0.0, %v572
  %v574 = vpop.f32.mrb[0].mxu0
  %575 = vmatprep.mubr.bf16.mxu0 0
  %576 = vmatmul.mubr.bf16.gmra.mrb[0].mxu0 %v388
  %v577 = vpop.f32.mrb[0].mxu0
  %v578 = vadd.f32 0.0, %v577
  %v579 = vpop.f32.mrb[0].mxu0
  %v580 = vpop.f32.mrb[0].mxu0
  %v581 = vadd.f32 0.0, %v580
  %v582 = vpop.f32.mrb[0].mxu0
  %583 = vmatprep.mubr.bf16.mxu0 0
  %584 = vmatmul.mubr.bf16.gmra.mrb[0].mxu0 %v391
  %v585 = vpop.f32.mrb[0].mxu0
  %v586 = vadd.f32 0.0, %v585
  %v587 = vpop.f32.mrb[0].mxu0
  %v588 = vpop.f32.mrb[0].mxu0
  %v589 = vadd.f32 0.0, %v588
  %v590 = vpop.f32.mrb[0].mxu0
  %591 = vmatprep.mubr.bf16.mxu0 0
  %592 = vmatmul.mubr.bf16.gmra.mrb[0].mxu0 %v394
  %v593 = vpop.f32.mrb[0].mxu0
  %v594 = vadd.f32 0.0, %v593
  %v595 = vpop.f32.mrb[0].mxu0
  %v596 = vpop.f32.mrb[0].mxu0
  %v597 = vadd.f32 0.0, %v596
  %v598 = vpop.f32.mrb[0].mxu0
  %599 = vmatprep.mubr.bf16.mxu0 0
  %600 = vmatmul.mubr.bf16.gmra.mrb[0].mxu0 %v397
  %v601 = vpop.f32.mrb[0].mxu0
  %v602 = vadd.f32 0.0, %v601
  %v603 = vpop.f32.mrb[0].mxu0
  %v604 = vpop.f32.mrb[0].mxu0
  %v605 = vadd.f32 0.0, %v604
  %v606 = vpop.f32.mrb[0].mxu0
  %607 = vmatprep.mubr.bf16.mxu0 0
  %608 = vmatmul.mubr.bf16.gmra.mrb[0].mxu0 %v400
  %v609 = vpop.f32.mrb[0].mxu0
  %v610 = vadd.f32 0.0, %v609
  %v611 = vpop.f32.mrb[0].mxu0
  %v612 = vpop.f32.mrb[0].mxu0
  %v613 = vadd.f32 0.0, %v612
  %v614 = vpop.f32.mrb[0].mxu0
  %615 = vmatprep.mubr.bf16.mxu0 0
  %616 = vmatmul.mubr.bf16.gmra.mrb[0].mxu0 %v403
  %v617 = vpop.f32.mrb[0].mxu0
  %v618 = vadd.f32 0.0, %v617
  %v619 = vpop.f32.mrb[0].mxu0
  %v620 = vpop.f32.mrb[0].mxu0
  %v621 = vadd.f32 0.0, %v620
  %v622 = vpop.f32.mrb[0].mxu0
  %623 = vmatprep.mubr.bf16.mxu0 0
  %624 = vmatmul.mubr.bf16.gmra.mrb[0].mxu0 %v406
  %v625 = vpop.f32.mrb[0].mxu0
  %v626 = vadd.f32 0.0, %v625
  %v627 = vpop.f32.mrb[0].mxu0
  %v628 = vpop.f32.mrb[0].mxu0
  %v629 = vadd.f32 0.0, %v628
  %v630 = vpop.f32.mrb[0].mxu0
  %631 = vmatprep.mubr.bf16.mxu0 0
  %632 = vmatmul.mubr.bf16.gmra.mrb[0].mxu0 %v409
  %v633 = vpop.f32.mrb[0].mxu0
  %v634 = vadd.f32 0.0, %v633
  %v635 = vpop.f32.mrb[0].mxu0
  %v636 = vpop.f32.mrb[0].mxu0
  %v637 = vadd.f32 0.0, %v636
  %v638 = vpop.f32.mrb[0].mxu0
  %639 = vmatprep.mubr.bf16.mxu0 0
  %640 = vmatmul.mubr.bf16.gmra.mrb[0].mxu0 %v412
  %v641 = vpop.f32.mrb[0].mxu0
  %v642 = vadd.f32 0.0, %v641
  %v643 = vpop.f32.mrb[0].mxu0
  %v644 = vpop.f32.mrb[0].mxu0
  %v645 = vadd.f32 0.0, %v644
  %v646 = vpop.f32.mrb[0].mxu0
  %647 = vmatprep.mubr.bf16.mxu0 0
  %648 = vmatmul.mubr.bf16.gmra.mrb[0].mxu0 %v415
  %v649 = vpop.f32.mrb[0].mxu0
  %v650 = vadd.f32 0.0, %v649
  %v651 = vpop.f32.mrb[0].mxu0
  %v652 = vpop.f32.mrb[0].mxu0
  %v653 = vadd.f32 0.0, %v652
  %v654 = vpop.f32.mrb[0].mxu0
  %655 = vmatprep.mubr.bf16.mxu0 0
  %656 = vmatmul.mubr.bf16.gmra.mrb[0].mxu0 %v418
  %v657 = vpop.f32.mrb[0].mxu0
  %v658 = vadd.f32 0.0, %v657
  %v659 = vpop.f32.mrb[0].mxu0
  %v660 = vpop.f32.mrb[0].mxu0
  %v661 = vadd.f32 0.0, %v660
  %v662 = vpop.f32.mrb[0].mxu0
  %663 = vmatprep.mubr.bf16.mxu0 0
  %664 = vmatmul.mubr.bf16.gmra.mrb[0].mxu0 %v421
  %v665 = vpop.f32.mrb[0].mxu0
  %v666 = vadd.f32 0.0, %v665
  %v667 = vpop.f32.mrb[0].mxu0
  %v668 = vpop.f32.mrb[0].mxu0
  %v669 = vadd.f32 0.0, %v668
  %v670 = vpop.f32.mrb[0].mxu0
  %671 = vmatprep.mubr.bf16.mxu0 0
  %672 = vmatmul.mubr.bf16.gmra.mrb[0].mxu0 %v424
  %v673 = vpop.f32.mrb[0].mxu0
  %v674 = vadd.f32 0.0, %v673
  %v675 = vpop.f32.mrb[0].mxu0
  %v676 = vpop.f32.mrb[0].mxu0
  %v677 = vadd.f32 0.0, %v676
  %v678 = vpop.f32.mrb[0].mxu0
  %679 = vmatprep.mubr.bf16.mxu0 0
  %680 = vmatmul.mubr.bf16.gmra.mrb[0].mxu0 %v427
  %v681 = vpop.f32.mrb[0].mxu0
  %v682 = vadd.f32 0.0, %v681
  %v683 = vpop.f32.mrb[0].mxu0
  %v684 = vpop.f32.mrb[0].mxu0
  %v685 = vadd.f32 0.0, %v684
  %v686 = vpop.f32.mrb[0].mxu0
  %687 = vmatprep.mubr.bf16.mxu0 0
  %688 = vmatmul.mubr.bf16.gmra.mrb[0].mxu0 %v430
  %v689 = vpop.f32.mrb[0].mxu0
  %v690 = vadd.f32 0.0, %v689
  %v691 = vpop.f32.mrb[0].mxu0
  %v692 = vpop.f32.mrb[0].mxu0
  %v693 = vadd.f32 0.0, %v692
  %v694 = vpop.f32.mrb[0].mxu0
  %695 = vmatprep.mubr.bf16.mxu0 0
  %696 = vmatmul.mubr.bf16.gmra.mrb[0].mxu0 %v433
  %v697 = vpop.f32.mrb[0].mxu0
  %v698 = vadd.f32 0.0, %v697
  %v699 = vpop.f32.mrb[0].mxu0
  %v700 = vpop.f32.mrb[0].mxu0
  %v701 = vadd.f32 0.0, %v700
  %v702 = vpop.f32.mrb[0].mxu0
  %703 = vmatprep.mubr.bf16.mxu0 0
  %704 = vmatmul.mubr.bf16.gmra.mrb[0].mxu0 %v436
  %v705 = vpop.f32.mrb[0].mxu0
  %v706 = vadd.f32 0.0, %v705
  %v707 = vpop.f32.mrb[0].mxu0
  %v708 = vpop.f32.mrb[0].mxu0
  %v709 = vadd.f32 0.0, %v708
  %v710 = vpop.f32.mrb[0].mxu0
  %711 = vmatprep.mubr.bf16.mxu0 0
  %712 = vmatmul.mubr.bf16.gmra.mrb[0].mxu0 %v439
  %v713 = vpop.f32.mrb[0].mxu0
  %v714 = vadd.f32 0.0, %v713
  %v715 = vpop.f32.mrb[0].mxu0
  %v716 = vpop.f32.mrb[0].mxu0
  %v717 = vadd.f32 0.0, %v716
  %v718 = vpop.f32.mrb[0].mxu0
  %719 = vmatprep.mubr.bf16.mxu0 0
  %720 = vmatmul.mubr.bf16.gmra.mrb[0].mxu0 %v442
  %v721 = vpop.f32.mrb[0].mxu0
  %v722 = vadd.f32 0.0, %v721
  %v723 = vpop.f32.mrb[0].mxu0
  %v724 = vpop.f32.mrb[0].mxu0
  %v725 = vadd.f32 0.0, %v724
  %v726 = vpop.f32.mrb[0].mxu0
  %727 = vmatprep.mubr.bf16.mxu0 0
  %728 = vmatmul.mubr.bf16.gmra.mrb[0].mxu0 %v445
  %v729 = vpop.f32.mrb[0].mxu0
  %v730 = vadd.f32 0.0, %v729
  %v731 = vpop.f32.mrb[0].mxu0
  %v732 = vpop.f32.mrb[0].mxu0
  %v733 = vadd.f32 0.0, %v732
  %v734 = vpop.f32.mrb[0].mxu0
  %735 = vmatprep.mubr.bf16.mxu0 0
  %736 = vmatmul.mubr.bf16.gmra.mrb[0].mxu0 %v448
  %v737 = vpop.f32.mrb[0].mxu0
  %v738 = vadd.f32 0.0, %v737
  %v739 = vpop.f32.mrb[0].mxu0
  %v740 = vpop.f32.mrb[0].mxu0
  %v741 = vadd.f32 0.0, %v740
  %v742 = vpop.f32.mrb[0].mxu0
  %743 = vmatprep.mubr.bf16.mxu0 0
  %744 = vmatmul.mubr.bf16.gmra.mrb[0].mxu0 %v451
  %v745 = vpop.f32.mrb[0].mxu0
  %v746 = vadd.f32 0.0, %v745
  %v747 = vpop.f32.mrb[0].mxu0
  %v748 = vpop.f32.mrb[0].mxu0
  %v749 = vadd.f32 0.0, %v748
  %v750 = vpop.f32.mrb[0].mxu0
  %751 = vmatprep.mubr.bf16.mxu0 0
  %752 = vmatmul.mubr.bf16.gmra.mrb[0].mxu0 %v454
  %v753 = vpop.f32.mrb[0].mxu0
  %v754 = vadd.f32 0.0, %v753
  %v755 = vpop.f32.mrb[0].mxu0
  %v756 = vpop.f32.mrb[0].mxu0
  %v757 = vadd.f32 0.0, %v756
  %v758 = vpop.f32.mrb[0].mxu0
  %759 = vmatprep.mubr.bf16.mxu0 0
  %760 = vmatmul.mubr.bf16.gmra.mrb[0].mxu0 %v457
  %v761 = vpop.f32.mrb[0].mxu0
  %v762 = vadd.f32 0.0, %v761
  %v763 = vpop.f32.mrb[0].mxu0
  %v764 = vpop.f32.mrb[0].mxu0
  %v765 = vadd.f32 0.0, %v764
  %v766 = vpop.f32.mrb[0].mxu0
  %767 = vmatprep.mubr.bf16.mxu0 0
  %768 = vmatmul.mubr.bf16.gmra.mrb[0].mxu0 %v460
  %v769 = vpop.f32.mrb[0].mxu0
  %v770 = vadd.f32 0.0, %v769
  %v771 = vpop.f32.mrb[0].mxu0
  %v772 = vpop.f32.mrb[0].mxu0
  %v773 = vadd.f32 0.0, %v772
  %v774 = vpop.f32.mrb[0].mxu0
  %775 = vmatprep.mubr.bf16.mxu0 0
  %776 = vmatmul.mubr.bf16.gmra.mrb[0].mxu0 %v463
  %v777 = vpop.f32.mrb[0].mxu0
  %v778 = vadd.f32 0.0, %v777
  %v779 = vpop.f32.mrb[0].mxu0
  %v780 = vpop.f32.mrb[0].mxu0
  %v781 = vadd.f32 0.0, %v780
  %v782 = vpop.f32.mrb[0].mxu0
  %783 = vmatprep.mubr.bf16.mxu0 0
  %784 = vmatmul.mubr.bf16.gmra.mrb[0].mxu0 %v466
  %v785 = vpop.f32.mrb[0].mxu0
  %v786 = vadd.f32 0.0, %v785
  %v787 = vpop.f32.mrb[0].mxu0
  %v788 = vpop.f32.mrb[0].mxu0
  %v789 = vadd.f32 0.0, %v788
  %v790 = vpop.f32.mrb[0].mxu0
  %791 = vmatprep.mubr.bf16.mxu0 0
  %792 = vmatmul.mubr.bf16.gmra.mrb[0].mxu0 %v469
  %v793 = vpop.f32.mrb[0].mxu0
  %v794 = vadd.f32 0.0, %v793
  %v795 = vpop.f32.mrb[0].mxu0
  %v796 = vpop.f32.mrb[0].mxu0
  %v797 = vadd.f32 0.0, %v796
  %v798 = vpop.f32.mrb[0].mxu0
  %799 = vmatprep.mubr.bf16.mxu0 0
  %800 = vmatmul.mubr.bf16.gmra.mrb[0].mxu0 %v472
  %v801 = vpop.f32.mrb[0].mxu0
  %v802 = vadd.f32 0.0, %v801
  %v803 = vpop.f32.mrb[0].mxu0
  %v804 = vpop.f32.mrb[0].mxu0
  %v805 = vadd.f32 0.0, %v804
  %v806 = vpop.f32.mrb[0].mxu0
  %807 = vmatprep.mubr.bf16.mxu0 0
  %808 = vmatmul.mubr.bf16.gmra.mrb[0].mxu0 %v475
  %v809 = vpop.f32.mrb[0].mxu0
  %v810 = vadd.f32 0.0, %v809
  %v811 = vpop.f32.mrb[0].mxu0
  %v812 = vpop.f32.mrb[0].mxu0
  %v813 = vadd.f32 0.0, %v812
  %v814 = vpop.f32.mrb[0].mxu0
  %815 = vmatprep.mubr.bf16.mxu0 0
  %816 = vmatmul.mubr.bf16.gmra.mrb[0].mxu0 %v478
  %v817 = vpop.f32.mrb[0].mxu0
  %v818 = vadd.f32 0.0, %v817
  %v819 = vpop.f32.mrb[0].mxu0
  %v820 = vpop.f32.mrb[0].mxu0
  %v821 = vadd.f32 0.0, %v820
  %v822 = vpop.f32.mrb[0].mxu0
  %823 = vmatprep.mubr.bf16.mxu0 0
  %824 = vmatmul.mubr.bf16.gmra.mrb[0].mxu0 %v481
  %v825 = vpop.f32.mrb[0].mxu0
  %v826 = vadd.f32 0.0, %v825
  %v827 = vpop.f32.mrb[0].mxu0
  %v828 = vpop.f32.mrb[0].mxu0
  %v829 = vadd.f32 0.0, %v828
  %v830 = vpop.f32.mrb[0].mxu0
  %831 = vmatprep.mubr.bf16.mxu0 0
  %832 = vmatmul.mubr.bf16.gmra.mrb[0].mxu0 %v484
  %v833 = vpop.f32.mrb[0].mxu0
  %v834 = vadd.f32 0.0, %v833
  %v835 = vpop.f32.mrb[0].mxu0
  %v836 = vpop.f32.mrb[0].mxu0
  %v837 = vadd.f32 0.0, %v836
  %v838 = vpop.f32.mrb[0].mxu0
  %839 = vmatprep.mubr.bf16.mxu0 0
  %840 = vmatmul.mubr.bf16.gmra.mrb[0].mxu0 %v487
  %v841 = vpop.f32.mrb[0].mxu0
  %v842 = vadd.f32 0.0, %v841
  %v843 = vpop.f32.mrb[0].mxu0
  %v844 = vpop.f32.mrb[0].mxu0
  %v845 = vadd.f32 0.0, %v844
  %v846 = vpop.f32.mrb[0].mxu0
  %847 = vmatprep.mubr.bf16.mxu0 0
  %848 = vmatmul.mubr.bf16.gmra.mrb[0].mxu0 %v490
  %v849 = vpop.f32.mrb[0].mxu0
  %v850 = vadd.f32 0.0, %v849
  %v851 = vpop.f32.mrb[0].mxu0
  %v852 = vpop.f32.mrb[0].mxu0
  %v853 = vadd.f32 0.0, %v852
  %v854 = vpop.f32.mrb[0].mxu0
  %855 = vmatprep.mubr.bf16.mxu0 0
  %856 = vmatmul.mubr.bf16.gmra.mrb[0].mxu0 %v493
  %v857 = vpop.f32.mrb[0].mxu0
  %v858 = vadd.f32 0.0, %v857
  %v859 = vpop.f32.mrb[0].mxu0
  %v860 = vpop.f32.mrb[0].mxu0
  %v861 = vadd.f32 0.0, %v860
  %v862 = vpop.f32.mrb[0].mxu0
  %863 = vmatprep.mubr.bf16.mxu0 0
  %864 = vmatmul.mubr.bf16.gmra.mrb[0].mxu0 %v496
  %v865 = vpop.f32.mrb[0].mxu0
  %v866 = vadd.f32 0.0, %v865
  %v867 = vpop.f32.mrb[0].mxu0
  %v868 = vpop.f32.mrb[0].mxu0
  %v869 = vadd.f32 0.0, %v868
  %v870 = vpop.f32.mrb[0].mxu0
  %871 = vmatprep.mubr.bf16.mxu0 0
  %872 = vmatmul.mubr.bf16.gmra.mrb[0].mxu0 %v499
  %v873 = vpop.f32.mrb[0].mxu0
  %v874 = vadd.f32 0.0, %v873
  %v875 = vpop.f32.mrb[0].mxu0
  %v876 = vpop.f32.mrb[0].mxu0
  %v877 = vadd.f32 0.0, %v876
  %v878 = vpop.f32.mrb[0].mxu0
  %879 = vmatprep.mubr.bf16.mxu0 0
  %880 = vmatmul.mubr.bf16.gmra.mrb[0].mxu0 %v502
  %v881 = vpop.f32.mrb[0].mxu0
  %v882 = vadd.f32 0.0, %v881
  %v883 = vpop.f32.mrb[0].mxu0
  %v884 = vpop.f32.mrb[0].mxu0
  %v885 = vadd.f32 0.0, %v884
  %v886 = vpop.f32.mrb[0].mxu0
  %887 = vmatprep.mubr.bf16.mxu0 0
  %888 = vmatmul.mubr.bf16.gmra.mrb[0].mxu0 %v505
  %v889 = vpop.f32.mrb[0].mxu0
  %v890 = vadd.f32 0.0, %v889
  %v891 = vpop.f32.mrb[0].mxu0
  %v892 = vpop.f32.mrb[0].mxu0
  %v893 = vadd.f32 0.0, %v892
  %v894 = vpop.f32.mrb[0].mxu0
  %895 = vmatprep.mubr.bf16.mxu0 0
  %896 = vmatmul.mubr.bf16.gmra.mrb[0].mxu0 %v508
  %v897 = vpop.f32.mrb[0].mxu0
  %v898 = vadd.f32 0.0, %v897
  %v899 = vpop.f32.mrb[0].mxu0
  %v900 = vpop.f32.mrb[0].mxu0
  %v901 = vadd.f32 0.0, %v900
  %v902 = vpop.f32.mrb[0].mxu0
  %903 = vmatprep.mubr.bf16.mxu0 0
  %904 = vmatmul.mubr.bf16.gmra.mrb[0].mxu0 %v511
  %v905 = vpop.f32.mrb[0].mxu0
  %v906 = vadd.f32 0.0, %v905
  %v907 = vpop.f32.mrb[0].mxu0
  %v908 = vpop.f32.mrb[0].mxu0
  %v909 = vadd.f32 0.0, %v908
  %v910 = vpop.f32.mrb[0].mxu0
  %911 = vmatprep.mubr.bf16.mxu0 0
  %912 = vmatmul.mubr.bf16.gmra.mrb[0].mxu0 %v514
  %v913 = vpop.f32.mrb[0].mxu0
  %v914 = vadd.f32 0.0, %v913
  %v915 = vpop.f32.mrb[0].mxu0
  %v916 = vpop.f32.mrb[0].mxu0
  %v917 = vadd.f32 0.0, %v916
  %v918 = vpop.f32.mrb[0].mxu0
  %919 = vmatprep.mubr.bf16.mxu0 0
  %920 = vmatmul.mubr.bf16.gmra.mrb[0].mxu0 %v517
  %v921 = vpop.f32.mrb[0].mxu0
  %v922 = vadd.f32 0.0, %v921
  %v923 = vpop.f32.mrb[0].mxu0
  %v924 = vpop.f32.mrb[0].mxu0
  %v925 = vadd.f32 0.0, %v924
  %v926 = vpop.f32.mrb[0].mxu0
  %927 = vmatprep.mubr.bf16.mxu0 0
  %928 = vmatmul.mubr.bf16.gmra.mrb[0].mxu0 %v520
  %v929 = vpop.f32.mrb[0].mxu0
  %v930 = vadd.f32 0.0, %v929
  %v931 = vpop.f32.mrb[0].mxu0
  %v932 = vpop.f32.mrb[0].mxu0
  %v933 = vadd.f32 0.0, %v932
  %v934 = vpop.f32.mrb[0].mxu0
  %935 = vmatprep.mubr.bf16.mxu0 0
  %936 = vmatmul.mubr.bf16.gmra.mrb[0].mxu0 %v523
  %v937 = vpop.f32.mrb[0].mxu0
  %v938 = vadd.f32 0.0, %v937
  %v939 = vpop.f32.mrb[0].mxu0
  %v940 = vpop.f32.mrb[0].mxu0
  %v941 = vadd.f32 0.0, %v940
  %v942 = vpop.f32.mrb[0].mxu0
  %943 = vmatprep.mubr.bf16.mxu0 0
  %944 = vmatmul.mubr.bf16.gmra.mrb[0].mxu0 %v526
  %v945 = vpop.f32.mrb[0].mxu0
  %v946 = vadd.f32 0.0, %v945
  %v947 = vpop.f32.mrb[0].mxu0
  %v948 = vpop.f32.mrb[0].mxu0
  %v949 = vadd.f32 0.0, %v948
  %v950 = vpop.f32.mrb[0].mxu0
  %951 = vdwg.mxu0
  %v952 = vmax.f32 %v570, 0.0
  %v953 = vmax.f32 %v573, 0.0
  %v954 = vmax.f32 %v578, 0.0
  %v955 = vmax.f32 %v581, 0.0
  %v956 = vmax.f32 %v586, 0.0
  %v957 = vmax.f32 %v589, 0.0
  %v958 = vmax.f32 %v594, 0.0
  %v959 = vmax.f32 %v597, 0.0
  %v960 = vmax.f32 %v602, 0.0
  %v961 = vmax.f32 %v605, 0.0
  %v962 = vmax.f32 %v610, 0.0
  %v963 = vmax.f32 %v613, 0.0
  %v964 = vmax.f32 %v618, 0.0
  %v965 = vmax.f32 %v621, 0.0
  %v966 = vmax.f32 %v626, 0.0
  %v967 = vmax.f32 %v629, 0.0
  %v968 = vmax.f32 %v634, 0.0
  %v969 = vmax.f32 %v637, 0.0
  %v970 = vmax.f32 %v642, 0.0
  %v971 = vmax.f32 %v645, 0.0
  %v972 = vmax.f32 %v650, 0.0
  %v973 = vmax.f32 %v653, 0.0
  %v974 = vmax.f32 %v658, 0.0
  %v975 = vmax.f32 %v661, 0.0
  %v976 = vmax.f32 %v666, 0.0
  %v977 = vmax.f32 %v669, 0.0
  %v978 = vmax.f32 %v674, 0.0
  %v979 = vmax.f32 %v677, 0.0
  %v980 = vmax.f32 %v682, 0.0
  %v981 = vmax.f32 %v685, 0.0
  %v982 = vmax.f32 %v690, 0.0
  %v983 = vmax.f32 %v693, 0.0
  %v984 = vmax.f32 %v698, 0.0
  %v985 = vmax.f32 %v701, 0.0
  %v986 = vmax.f32 %v706, 0.0
  %v987 = vmax.f32 %v709, 0.0
  %v988 = vmax.f32 %v714, 0.0
  %v989 = vmax.f32 %v717, 0.0
  %v990 = vmax.f32 %v722, 0.0
  %v991 = vmax.f32 %v725, 0.0
  %v992 = vmax.f32 %v730, 0.0
  %v993 = vmax.f32 %v733, 0.0
  %v994 = vmax.f32 %v738, 0.0
  %v995 = vmax.f32 %v741, 0.0
  %v996 = vmax.f32 %v746, 0.0
  %v997 = vmax.f32 %v749, 0.0
  %v998 = vmax.f32 %v754, 0.0
  %v999 = vmax.f32 %v757, 0.0
  %v1000 = vmax.f32 %v762, 0.0
  %v1001 = vmax.f32 %v765, 0.0
  %v1002 = vmax.f32 %v770, 0.0
  %v1003 = vmax.f32 %v773, 0.0
  %v1004 = vmax.f32 %v778, 0.0
  %v1005 = vmax.f32 %v781, 0.0
  %v1006 = vmax.f32 %v786, 0.0
  %v1007 = vmax.f32 %v789, 0.0
  %v1008 = vmax.f32 %v794, 0.0
  %v1009 = vmax.f32 %v797, 0.0
  %v1010 = vmax.f32 %v802, 0.0
  %v1011 = vmax.f32 %v805, 0.0
  %v1012 = vmax.f32 %v810, 0.0
  %v1013 = vmax.f32 %v813, 0.0
  %v1014 = vmax.f32 %v818, 0.0
  %v1015 = vmax.f32 %v821, 0.0
  %v1016 = vmax.f32 %v826, 0.0
  %v1017 = vmax.f32 %v829, 0.0
  %v1018 = vmax.f32 %v834, 0.0
  %v1019 = vmax.f32 %v837, 0.0
  %v1020 = vmax.f32 %v842, 0.0
  %v1021 = vmax.f32 %v845, 0.0
  %v1022 = vmax.f32 %v850, 0.0
  %v1023 = vmax.f32 %v853, 0.0
  %v1024 = vmax.f32 %v858, 0.0
  %v1025 = vmax.f32 %v861, 0.0
  %v1026 = vmax.f32 %v866, 0.0
  %v1027 = vmax.f32 %v869, 0.0
  %v1028 = vmax.f32 %v874, 0.0
  %v1029 = vmax.f32 %v877, 0.0
  %v1030 = vmax.f32 %v882, 0.0
  %v1031 = vmax.f32 %v885, 0.0
  %v1032 = vmax.f32 %v890, 0.0
  %v1033 = vmax.f32 %v893, 0.0
  %v1034 = vmax.f32 %v898, 0.0
  %v1035 = vmax.f32 %v901, 0.0
  %v1036 = vmax.f32 %v906, 0.0
  %v1037 = vmax.f32 %v909, 0.0
  %v1038 = vmax.f32 %v914, 0.0
  %v1039 = vmax.f32 %v917, 0.0
  %v1040 = vmax.f32 %v922, 0.0
  %v1041 = vmax.f32 %v925, 0.0
  %v1042 = vmax.f32 %v930, 0.0
  %v1043 = vmax.f32 %v933, 0.0
  %v1044 = vmax.f32 %v938, 0.0
  %v1045 = vmax.f32 %v941, 0.0
  %v1046 = vmax.f32 %v946, 0.0
  %v1047 = vmax.f32 %v949, 0.0
  %v1048 = vpack.c.bf16 %v953, %v952
  %v1049 = vpack.c.bf16 %v955, %v954
  %v1050 = vpack.c.bf16 %v957, %v956
  %v1051 = vpack.c.bf16 %v959, %v958
  %v1052 = vpack.c.bf16 %v961, %v960
  %v1053 = vpack.c.bf16 %v963, %v962
  %v1054 = vpack.c.bf16 %v965, %v964
  %v1055 = vpack.c.bf16 %v967, %v966
  %v1056 = vpack.c.bf16 %v969, %v968
  %v1057 = vpack.c.bf16 %v971, %v970
  %v1058 = vpack.c.bf16 %v973, %v972
  %v1059 = vpack.c.bf16 %v975, %v974
  %v1060 = vpack.c.bf16 %v977, %v976
  %v1061 = vpack.c.bf16 %v979, %v978
  %v1062 = vpack.c.bf16 %v981, %v980
  %v1063 = vpack.c.bf16 %v983, %v982
  %v1064 = vpack.c.bf16 %v985, %v984
  %v1065 = vpack.c.bf16 %v987, %v986
  %v1066 = vpack.c.bf16 %v989, %v988
  %v1067 = vpack.c.bf16 %v991, %v990
  %v1068 = vpack.c.bf16 %v993, %v992
  %v1069 = vpack.c.bf16 %v995, %v994
  %v1070 = vpack.c.bf16 %v997, %v996
  %v1071 = vpack.c.bf16 %v999, %v998
  %v1072 = vpack.c.bf16 %v1001, %v1000
  %v1073 = vpack.c.bf16 %v1003, %v1002
  %v1074 = vpack.c.bf16 %v1005, %v1004
  %v1075 = vpack.c.bf16 %v1007, %v1006
  %v1076 = vpack.c.bf16 %v1009, %v1008
  %v1077 = vpack.c.bf16 %v1011, %v1010
  %v1078 = vpack.c.bf16 %v1013, %v1012
  %v1079 = vpack.c.bf16 %v1015, %v1014
  %v1080 = vpack.c.bf16 %v1017, %v1016
  %v1081 = vpack.c.bf16 %v1019, %v1018
  %v1082 = vpack.c.bf16 %v1021, %v1020
  %v1083 = vpack.c.bf16 %v1023, %v1022
  %v1084 = vpack.c.bf16 %v1025, %v1024
  %v1085 = vpack.c.bf16 %v1027, %v1026
  %v1086 = vpack.c.bf16 %v1029, %v1028
  %v1087 = vpack.c.bf16 %v1031, %v1030
  %v1088 = vpack.c.bf16 %v1033, %v1032
  %v1089 = vpack.c.bf16 %v1035, %v1034
  %v1090 = vpack.c.bf16 %v1037, %v1036
  %v1091 = vpack.c.bf16 %v1039, %v1038
  %v1092 = vpack.c.bf16 %v1041, %v1040
  %v1093 = vpack.c.bf16 %v1043, %v1042
  %v1094 = vpack.c.bf16 %v1045, %v1044
  %v1095 = vpack.c.bf16 %v1047, %v1046
  %vm1096 = vsmask.f32 4352
  %v1098 = vshrl.u32 %v1048, 16
  %v1100 = vrot.slane %v1098, 3
  %v1101 = vshll.u32 %v1048, 16
  %v1103 = vrot.slane %v1101, 4
  %v1104 = vor.u32 %v1100, %v1103
  %v1106 = vshrl.u32 %v1049, 16
  %v1108 = vrot.slane %v1106, 3
  %v1109 = vshll.u32 %v1049, 16
  %v1111 = vrot.slane %v1109, 4
  %v1112 = vor.u32 %v1108, %v1111
  %v1113 = vsel %vm1096, %v1104, %v1112
  %v1115 = vshrl.u32 %v1050, 16
  %v1117 = vrot.slane %v1115, 3
  %v1118 = vshll.u32 %v1050, 16
  %v1120 = vrot.slane %v1118, 4
  %v1121 = vor.u32 %v1117, %v1120
  %v1122 = vsel %vm1096, %v1112, %v1121
  %v1124 = vshrl.u32 %v1051, 16
  %v1126 = vrot.slane %v1124, 3
  %v1127 = vshll.u32 %v1051, 16
  %v1129 = vrot.slane %v1127, 4
  %v1130 = vor.u32 %v1126, %v1129
  %v1131 = vsel %vm1096, %v1121, %v1130
  %v1133 = vshrl.u32 %v1052, 16
  %v1135 = vrot.slane %v1133, 3
  %v1136 = vshll.u32 %v1052, 16
  %v1138 = vrot.slane %v1136, 4
  %v1139 = vor.u32 %v1135, %v1138
  %v1140 = vsel %vm1096, %v1130, %v1139
  %v1142 = vshrl.u32 %v1053, 16
  %v1144 = vrot.slane %v1142, 3
  %v1145 = vshll.u32 %v1053, 16
  %v1147 = vrot.slane %v1145, 4
  %v1148 = vor.u32 %v1144, %v1147
  %v1149 = vsel %vm1096, %v1139, %v1148
  %v1151 = vshrl.u32 %v1054, 16
  %v1153 = vrot.slane %v1151, 3
  %v1154 = vshll.u32 %v1054, 16
  %v1156 = vrot.slane %v1154, 4
  %v1157 = vor.u32 %v1153, %v1156
  %v1158 = vsel %vm1096, %v1148, %v1157
  %v1160 = vshrl.u32 %v1055, 16
  %v1162 = vrot.slane %v1160, 3
  %v1163 = vshll.u32 %v1055, 16
  %v1165 = vrot.slane %v1163, 4
  %v1166 = vor.u32 %v1162, %v1165
  %v1167 = vsel %vm1096, %v1157, %v1166
  %v1169 = vshrl.u32 %v1056, 16
  %v1171 = vrot.slane %v1169, 3
  %v1172 = vshll.u32 %v1056, 16
  %v1174 = vrot.slane %v1172, 4
  %v1175 = vor.u32 %v1171, %v1174
  %v1176 = vsel %vm1096, %v1166, %v1175
  %v1178 = vshrl.u32 %v1057, 16
  %v1180 = vrot.slane %v1178, 3
  %v1181 = vshll.u32 %v1057, 16
  %v1183 = vrot.slane %v1181, 4
  %v1184 = vor.u32 %v1180, %v1183
  %v1185 = vsel %vm1096, %v1175, %v1184
  %v1187 = vshrl.u32 %v1058, 16
  %v1189 = vrot.slane %v1187, 3
  %v1190 = vshll.u32 %v1058, 16
  %v1192 = vrot.slane %v1190, 4
  %v1193 = vor.u32 %v1189, %v1192
  %v1194 = vsel %vm1096, %v1184, %v1193
  %v1196 = vshrl.u32 %v1059, 16
  %v1198 = vrot.slane %v1196, 3
  %v1199 = vshll.u32 %v1059, 16
  %v1201 = vrot.slane %v1199, 4
  %v1202 = vor.u32 %v1198, %v1201
  %v1203 = vsel %vm1096, %v1193, %v1202
  %v1205 = vshrl.u32 %v1060, 16
  %v1207 = vrot.slane %v1205, 3
  %v1208 = vshll.u32 %v1060, 16
  %v1210 = vrot.slane %v1208, 4
  %v1211 = vor.u32 %v1207, %v1210
  %v1212 = vsel %vm1096, %v1202, %v1211
  %v1214 = vshrl.u32 %v1061, 16
  %v1216 = vrot.slane %v1214, 3
  %v1217 = vshll.u32 %v1061, 16
  %v1219 = vrot.slane %v1217, 4
  %v1220 = vor.u32 %v1216, %v1219
  %v1221 = vsel %vm1096, %v1211, %v1220
  %v1223 = vshrl.u32 %v1062, 16
  %v1225 = vrot.slane %v1223, 3
  %v1226 = vshll.u32 %v1062, 16
  %v1228 = vrot.slane %v1226, 4
  %v1229 = vor.u32 %v1225, %v1228
  %v1230 = vsel %vm1096, %v1220, %v1229
  %v1232 = vshrl.u32 %v1063, 16
  %v1234 = vrot.slane %v1232, 3
  %v1235 = vshll.u32 %v1063, 16
  %v1237 = vrot.slane %v1235, 4
  %v1238 = vor.u32 %v1234, %v1237
  %v1239 = vsel %vm1096, %v1229, %v1238
  %v1241 = vshrl.u32 %v1064, 16
  %v1243 = vrot.slane %v1241, 3
  %v1244 = vshll.u32 %v1064, 16
  %v1246 = vrot.slane %v1244, 4
  %v1247 = vor.u32 %v1243, %v1246
  %v1248 = vsel %vm1096, %v1238, %v1247
  %v1250 = vshrl.u32 %v1065, 16
  %v1252 = vrot.slane %v1250, 3
  %v1253 = vshll.u32 %v1065, 16
  %v1255 = vrot.slane %v1253, 4
  %v1256 = vor.u32 %v1252, %v1255
  %v1257 = vsel %vm1096, %v1247, %v1256
  %v1259 = vshrl.u32 %v1066, 16
  %v1261 = vrot.slane %v1259, 3
  %v1262 = vshll.u32 %v1066, 16
  %v1264 = vrot.slane %v1262, 4
  %v1265 = vor.u32 %v1261, %v1264
  %v1266 = vsel %vm1096, %v1256, %v1265
  %v1268 = vshrl.u32 %v1067, 16
  %v1270 = vrot.slane %v1268, 3
  %v1271 = vshll.u32 %v1067, 16
  %v1273 = vrot.slane %v1271, 4
  %v1274 = vor.u32 %v1270, %v1273
  %v1275 = vsel %vm1096, %v1265, %v1274
  %v1277 = vshrl.u32 %v1068, 16
  %v1279 = vrot.slane %v1277, 3
  %v1280 = vshll.u32 %v1068, 16
  %v1282 = vrot.slane %v1280, 4
  %v1283 = vor.u32 %v1279, %v1282
  %v1284 = vsel %vm1096, %v1274, %v1283
  %v1286 = vshrl.u32 %v1069, 16
  %v1288 = vrot.slane %v1286, 3
  %v1289 = vshll.u32 %v1069, 16
  %v1291 = vrot.slane %v1289, 4
  %v1292 = vor.u32 %v1288, %v1291
  %v1293 = vsel %vm1096, %v1283, %v1292
  %v1295 = vshrl.u32 %v1070, 16
  %v1297 = vrot.slane %v1295, 3
  %v1298 = vshll.u32 %v1070, 16
  %v1300 = vrot.slane %v1298, 4
  %v1301 = vor.u32 %v1297, %v1300
  %v1302 = vsel %vm1096, %v1292, %v1301
  %v1304 = vshrl.u32 %v1071, 16
  %v1306 = vrot.slane %v1304, 3
  %v1307 = vshll.u32 %v1071, 16
  %v1309 = vrot.slane %v1307, 4
  %v1310 = vor.u32 %v1306, %v1309
  %v1311 = vsel %vm1096, %v1301, %v1310
  %v1313 = vshrl.u32 %v1072, 16
  %v1315 = vrot.slane %v1313, 3
  %v1316 = vshll.u32 %v1072, 16
  %v1318 = vrot.slane %v1316, 4
  %v1319 = vor.u32 %v1315, %v1318
  %v1321 = vshrl.u32 %v1073, 16
  %v1323 = vrot.slane %v1321, 3
  %v1324 = vshll.u32 %v1073, 16
  %v1326 = vrot.slane %v1324, 4
  %v1327 = vor.u32 %v1323, %v1326
  %v1328 = vsel %vm1096, %v1319, %v1327
  %v1330 = vshrl.u32 %v1074, 16
  %v1332 = vrot.slane %v1330, 3
  %v1333 = vshll.u32 %v1074, 16
  %v1335 = vrot.slane %v1333, 4
  %v1336 = vor.u32 %v1332, %v1335
  %v1337 = vsel %vm1096, %v1327, %v1336
  %v1339 = vshrl.u32 %v1075, 16
  %v1341 = vrot.slane %v1339, 3
  %v1342 = vshll.u32 %v1075, 16
  %v1344 = vrot.slane %v1342, 4
  %v1345 = vor.u32 %v1341, %v1344
  %v1346 = vsel %vm1096, %v1336, %v1345
  %v1348 = vshrl.u32 %v1076, 16
  %v1350 = vrot.slane %v1348, 3
  %v1351 = vshll.u32 %v1076, 16
  %v1353 = vrot.slane %v1351, 4
  %v1354 = vor.u32 %v1350, %v1353
  %v1355 = vsel %vm1096, %v1345, %v1354
  %v1357 = vshrl.u32 %v1077, 16
  %v1359 = vrot.slane %v1357, 3
  %v1360 = vshll.u32 %v1077, 16
  %v1362 = vrot.slane %v1360, 4
  %v1363 = vor.u32 %v1359, %v1362
  %v1364 = vsel %vm1096, %v1354, %v1363
  %v1366 = vshrl.u32 %v1078, 16
  %v1368 = vrot.slane %v1366, 3
  %v1369 = vshll.u32 %v1078, 16
  %v1371 = vrot.slane %v1369, 4
  %v1372 = vor.u32 %v1368, %v1371
  %v1373 = vsel %vm1096, %v1363, %v1372
  %v1375 = vshrl.u32 %v1079, 16
  %v1377 = vrot.slane %v1375, 3
  %v1378 = vshll.u32 %v1079, 16
  %v1380 = vrot.slane %v1378, 4
  %v1381 = vor.u32 %v1377, %v1380
  %v1382 = vsel %vm1096, %v1372, %v1381
  %v1384 = vshrl.u32 %v1080, 16
  %v1386 = vrot.slane %v1384, 3
  %v1387 = vshll.u32 %v1080, 16
  %v1389 = vrot.slane %v1387, 4
  %v1390 = vor.u32 %v1386, %v1389
  %v1391 = vsel %vm1096, %v1381, %v1390
  %v1393 = vshrl.u32 %v1081, 16
  %v1395 = vrot.slane %v1393, 3
  %v1396 = vshll.u32 %v1081, 16
  %v1398 = vrot.slane %v1396, 4
  %v1399 = vor.u32 %v1395, %v1398
  %v1400 = vsel %vm1096, %v1390, %v1399
  %v1402 = vshrl.u32 %v1082, 16
  %v1404 = vrot.slane %v1402, 3
  %v1405 = vshll.u32 %v1082, 16
  %v1407 = vrot.slane %v1405, 4
  %v1408 = vor.u32 %v1404, %v1407
  %v1409 = vsel %vm1096, %v1399, %v1408
  %v1411 = vshrl.u32 %v1083, 16
  %v1413 = vrot.slane %v1411, 3
  %v1414 = vshll.u32 %v1083, 16
  %v1416 = vrot.slane %v1414, 4
  %v1417 = vor.u32 %v1413, %v1416
  %v1418 = vsel %vm1096, %v1408, %v1417
  %v1420 = vshrl.u32 %v1084, 16
  %v1422 = vrot.slane %v1420, 3
  %v1423 = vshll.u32 %v1084, 16
  %v1425 = vrot.slane %v1423, 4
  %v1426 = vor.u32 %v1422, %v1425
  %v1427 = vsel %vm1096, %v1417, %v1426
  %v1429 = vshrl.u32 %v1085, 16
  %v1431 = vrot.slane %v1429, 3
  %v1432 = vshll.u32 %v1085, 16
  %v1434 = vrot.slane %v1432, 4
  %v1435 = vor.u32 %v1431, %v1434
  %v1436 = vsel %vm1096, %v1426, %v1435
  %v1438 = vshrl.u32 %v1086, 16
  %v1440 = vrot.slane %v1438, 3
  %v1441 = vshll.u32 %v1086, 16
  %v1443 = vrot.slane %v1441, 4
  %v1444 = vor.u32 %v1440, %v1443
  %v1445 = vsel %vm1096, %v1435, %v1444
  %v1447 = vshrl.u32 %v1087, 16
  %v1449 = vrot.slane %v1447, 3
  %v1450 = vshll.u32 %v1087, 16
  %v1452 = vrot.slane %v1450, 4
  %v1453 = vor.u32 %v1449, %v1452
  %v1454 = vsel %vm1096, %v1444, %v1453
  %v1456 = vshrl.u32 %v1088, 16
  %v1458 = vrot.slane %v1456, 3
  %v1459 = vshll.u32 %v1088, 16
  %v1461 = vrot.slane %v1459, 4
  %v1462 = vor.u32 %v1458, %v1461
  %v1463 = vsel %vm1096, %v1453, %v1462
  %v1465 = vshrl.u32 %v1089, 16
  %v1467 = vrot.slane %v1465, 3
  %v1468 = vshll.u32 %v1089, 16
  %v1470 = vrot.slane %v1468, 4
  %v1471 = vor.u32 %v1467, %v1470
  %v1472 = vsel %vm1096, %v1462, %v1471
  %v1474 = vshrl.u32 %v1090, 16
  %v1476 = vrot.slane %v1474, 3
  %v1477 = vshll.u32 %v1090, 16
  %v1479 = vrot.slane %v1477, 4
  %v1480 = vor.u32 %v1476, %v1479
  %v1481 = vsel %vm1096, %v1471, %v1480
  %v1483 = vshrl.u32 %v1091, 16
  %v1485 = vrot.slane %v1483, 3
  %v1486 = vshll.u32 %v1091, 16
  %v1488 = vrot.slane %v1486, 4
  %v1489 = vor.u32 %v1485, %v1488
  %v1490 = vsel %vm1096, %v1480, %v1489
  %v1492 = vshrl.u32 %v1092, 16
  %v1494 = vrot.slane %v1492, 3
  %v1495 = vshll.u32 %v1092, 16
  %v1497 = vrot.slane %v1495, 4
  %v1498 = vor.u32 %v1494, %v1497
  %v1499 = vsel %vm1096, %v1489, %v1498
  %v1501 = vshrl.u32 %v1093, 16
  %v1503 = vrot.slane %v1501, 3
  %v1504 = vshll.u32 %v1093, 16
  %v1506 = vrot.slane %v1504, 4
  %v1507 = vor.u32 %v1503, %v1506
  %v1508 = vsel %vm1096, %v1498, %v1507
  %v1510 = vshrl.u32 %v1094, 16
  %v1512 = vrot.slane %v1510, 3
  %v1513 = vshll.u32 %v1094, 16
  %v1515 = vrot.slane %v1513, 4
  %v1516 = vor.u32 %v1512, %v1515
  %v1517 = vsel %vm1096, %v1507, %v1516
  %v1519 = vshrl.u32 %v1095, 16
  %v1521 = vrot.slane %v1519, 3
  %v1522 = vshll.u32 %v1095, 16
  %v1524 = vrot.slane %v1522, 4
  %v1525 = vor.u32 %v1521, %v1524
  %v1526 = vsel %vm1096, %v1516, %v1525
  %vm1577 = vcmask 261124
  %vm1578 = vsmask.f32 7954
  %vm1579 = vmand %vm1577, %vm1578
  %v1580 = vld [vmem:[#allocation2 + $0x8] sm:$0xf0]
  %v1581 = vsel %vm1579, %v1104, %v1580
  %1582 = vst [vmem:[#allocation2 + $0x8] sm:$0xf0] %v1581
  %vm1583 = vcmask 261120
  %1584 = vst.msk [vmem:[#allocation2 + $0x10] sm:$0xff] %vm1583, %v1113
  %1585 = vst.msk [vmem:[#allocation2 + $0x18] sm:$0xff] %vm1583, %v1122
  %1586 = vst.msk [vmem:[#allocation2 + $0x20] sm:$0xff] %vm1583, %v1131
  %1587 = vst.msk [vmem:[#allocation2 + $0x28] sm:$0xff] %vm1583, %v1140
  %1588 = vst.msk [vmem:[#allocation2 + $0x30] sm:$0xff] %vm1583, %v1149
  %1589 = vst.msk [vmem:[#allocation2 + $0x38] sm:$0xff] %vm1583, %v1158
  %1590 = vst.msk [vmem:[#allocation2 + $0x40] sm:$0xff] %vm1583, %v1167
  %1591 = vst.msk [vmem:[#allocation2 + $0x48] sm:$0xff] %vm1583, %v1176
  %1592 = vst.msk [vmem:[#allocation2 + $0x50] sm:$0xff] %vm1583, %v1185
  %1593 = vst.msk [vmem:[#allocation2 + $0x58] sm:$0xff] %vm1583, %v1194
  %1594 = vst.msk [vmem:[#allocation2 + $0x60] sm:$0xff] %vm1583, %v1203
  %1595 = vst.msk [vmem:[#allocation2 + $0x68] sm:$0xff] %vm1583, %v1212
  %1596 = vst.msk [vmem:[#allocation2 + $0x70] sm:$0xff] %vm1583, %v1221
  %1597 = vst.msk [vmem:[#allocation2 + $0x78] sm:$0xff] %vm1583, %v1230
  %1598 = vst.msk [vmem:[#allocation2 + $0x80] sm:$0xff] %vm1583, %v1239
  %1599 = vst.msk [vmem:[#allocation2 + $0x88] sm:$0xff] %vm1583, %v1248
  %1600 = vst.msk [vmem:[#allocation2 + $0x90] sm:$0xff] %vm1583, %v1257
  %1601 = vst.msk [vmem:[#allocation2 + $0x98] sm:$0xff] %vm1583, %v1266
  %1602 = vst.msk [vmem:[#allocation2 + $0xa0] sm:$0xff] %vm1583, %v1275
  %1603 = vst.msk [vmem:[#allocation2 + $0xa8] sm:$0xff] %vm1583, %v1284
  %1604 = vst.msk [vmem:[#allocation2 + $0xb0] sm:$0xff] %vm1583, %v1293
  %1605 = vst.msk [vmem:[#allocation2 + $0xb8] sm:$0xff] %vm1583, %v1302
  %1606 = vst.msk [vmem:[#allocation2 + $0xc0] sm:$0xff] %vm1583, %v1311
  %vm1607 = vcmask 258048
  %vm1608 = vmand %vm1607, %vm1096
  %v1609 = vld [vmem:[#allocation2 + $0xc8] sm:$0x1f]
  %v1610 = vsel %vm1608, %v1310, %v1609
  %1611 = vst [vmem:[#allocation2 + $0xc8] sm:$0x1f] %v1610
  %v1612 = vld [vmem:[#allocation2 + $0xe0] sm:$0xf0]
  %v1613 = vsel %vm1579, %v1319, %v1612
  %1614 = vst [vmem:[#allocation2 + $0xe0] sm:$0xf0] %v1613
  %1615 = vst.msk [vmem:[#allocation2 + $0xe8] sm:$0xff] %vm1583, %v1328
  %1616 = vst.msk [vmem:[#allocation2 + $0xf0] sm:$0xff] %vm1583, %v1337
  %1617 = vst.msk [vmem:[#allocation2 + $0xf8] sm:$0xff] %vm1583, %v1346
  %1618 = vst.msk [vmem:[#allocation2 + $0x100] sm:$0xff] %vm1583, %v1355
  %1619 = vst.msk [vmem:[#allocation2 + $0x108] sm:$0xff] %vm1583, %v1364
  %1620 = vst.msk [vmem:[#allocation2 + $0x110] sm:$0xff] %vm1583, %v1373
  %1621 = vst.msk [vmem:[#allocation2 + $0x118] sm:$0xff] %vm1583, %v1382
  %1622 = vst.msk [vmem:[#allocation2 + $0x120] sm:$0xff] %vm1583, %v1391
  %1623 = vst.msk [vmem:[#allocation2 + $0x128] sm:$0xff] %vm1583, %v1400
  %1624 = vst.msk [vmem:[#allocation2 + $0x130] sm:$0xff] %vm1583, %v1409
  %1625 = vst.msk [vmem:[#allocation2 + $0x138] sm:$0xff] %vm1583, %v1418
  %1626 = vst.msk [vmem:[#allocation2 + $0x140] sm:$0xff] %vm1583, %v1427
  %1627 = vst.msk [vmem:[#allocation2 + $0x148] sm:$0xff] %vm1583, %v1436
  %1628 = vst.msk [vmem:[#allocation2 + $0x150] sm:$0xff] %vm1583, %v1445
  %1629 = vst.msk [vmem:[#allocation2 + $0x158] sm:$0xff] %vm1583, %v1454
  %1630 = vst.msk [vmem:[#allocation2 + $0x160] sm:$0xff] %vm1583, %v1463
  %1631 = vst.msk [vmem:[#allocation2 + $0x168] sm:$0xff] %vm1583, %v1472
  %1632 = vst.msk [vmem:[#allocation2 + $0x170] sm:$0xff] %vm1583, %v1481
  %1633 = vst.msk [vmem:[#allocation2 + $0x178] sm:$0xff] %vm1583, %v1490
  %1634 = vst.msk [vmem:[#allocation2 + $0x180] sm:$0xff] %vm1583, %v1499
  %1635 = vst.msk [vmem:[#allocation2 + $0x188] sm:$0xff] %vm1583, %v1508
  %1636 = vst.msk [vmem:[#allocation2 + $0x190] sm:$0xff] %vm1583, %v1517
  %1637 = vst.msk [vmem:[#allocation2 + $0x198] sm:$0xff] %vm1583, %v1526
  %v1638 = vld [vmem:[#allocation2 + $0x1a0] sm:$0x1f]
  %v1639 = vsel %vm1608, %v1525, %v1638
  %1640 = vst [vmem:[#allocation2 + $0x1a0] sm:$0x1f] %v1639
  %vm1689 = vcmask 1043456
  %v1690 = vrot.slane %v1048, 4
  %v1691 = vrot.slane %v1049, 4
  %v1692 = vsel %vm1689, %v1690, %v1691
  %v1693 = vrot.slane %v1050, 4
  %v1694 = vsel %vm1689, %v1691, %v1693
  %v1695 = vrot.slane %v1051, 4
  %v1696 = vsel %vm1689, %v1693, %v1695
  %v1697 = vrot.slane %v1052, 4
  %v1698 = vsel %vm1689, %v1695, %v1697
  %v1699 = vrot.slane %v1053, 4
  %v1700 = vsel %vm1689, %v1697, %v1699
  %v1701 = vrot.slane %v1054, 4
  %v1702 = vsel %vm1689, %v1699, %v1701
  %v1703 = vrot.slane %v1055, 4
  %v1704 = vsel %vm1689, %v1701, %v1703
  %v1705 = vrot.slane %v1056, 4
  %v1706 = vsel %vm1689, %v1703, %v1705
  %v1707 = vrot.slane %v1057, 4
  %v1708 = vsel %vm1689, %v1705, %v1707
  %v1709 = vrot.slane %v1058, 4
  %v1710 = vsel %vm1689, %v1707, %v1709
  %v1711 = vrot.slane %v1059, 4
  %v1712 = vsel %vm1689, %v1709, %v1711
  %v1713 = vrot.slane %v1060, 4
  %v1714 = vsel %vm1689, %v1711, %v1713
  %v1715 = vrot.slane %v1061, 4
  %v1716 = vsel %vm1689, %v1713, %v1715
  %v1717 = vrot.slane %v1062, 4
  %v1718 = vsel %vm1689, %v1715, %v1717
  %v1719 = vrot.slane %v1063, 4
  %v1720 = vsel %vm1689, %v1717, %v1719
  %v1721 = vrot.slane %v1064, 4
  %v1722 = vsel %vm1689, %v1719, %v1721
  %v1723 = vrot.slane %v1065, 4
  %v1724 = vsel %vm1689, %v1721, %v1723
  %v1725 = vrot.slane %v1066, 4
  %v1726 = vsel %vm1689, %v1723, %v1725
  %v1727 = vrot.slane %v1067, 4
  %v1728 = vsel %vm1689, %v1725, %v1727
  %v1729 = vrot.slane %v1068, 4
  %v1730 = vsel %vm1689, %v1727, %v1729
  %v1731 = vrot.slane %v1069, 4
  %v1732 = vsel %vm1689, %v1729, %v1731
  %v1733 = vrot.slane %v1070, 4
  %v1734 = vsel %vm1689, %v1731, %v1733
  %v1735 = vrot.slane %v1071, 4
  %v1736 = vsel %vm1689, %v1733, %v1735
  %v1737 = vrot.slane %v1072, 4
  %v1738 = vrot.slane %v1073, 4
  %v1739 = vsel %vm1689, %v1737, %v1738
  %v1740 = vrot.slane %v1074, 4
  %v1741 = vsel %vm1689, %v1738, %v1740
  %v1742 = vrot.slane %v1075, 4
  %v1743 = vsel %vm1689, %v1740, %v1742
  %v1744 = vrot.slane %v1076, 4
  %v1745 = vsel %vm1689, %v1742, %v1744
  %v1746 = vrot.slane %v1077, 4
  %v1747 = vsel %vm1689, %v1744, %v1746
  %v1748 = vrot.slane %v1078, 4
  %v1749 = vsel %vm1689, %v1746, %v1748
  %v1750 = vrot.slane %v1079, 4
  %v1751 = vsel %vm1689, %v1748, %v1750
  %v1752 = vrot.slane %v1080, 4
  %v1753 = vsel %vm1689, %v1750, %v1752
  %v1754 = vrot.slane %v1081, 4
  %v1755 = vsel %vm1689, %v1752, %v1754
  %v1756 = vrot.slane %v1082, 4
  %v1757 = vsel %vm1689, %v1754, %v1756
  %v1758 = vrot.slane %v1083, 4
  %v1759 = vsel %vm1689, %v1756, %v1758
  %v1760 = vrot.slane %v1084, 4
  %v1761 = vsel %vm1689, %v1758, %v1760
  %v1762 = vrot.slane %v1085, 4
  %v1763 = vsel %vm1689, %v1760, %v1762
  %v1764 = vrot.slane %v1086, 4
  %v1765 = vsel %vm1689, %v1762, %v1764
  %v1766 = vrot.slane %v1087, 4
  %v1767 = vsel %vm1689, %v1764, %v1766
  %v1768 = vrot.slane %v1088, 4
  %v1769 = vsel %vm1689, %v1766, %v1768
  %v1770 = vrot.slane %v1089, 4
  %v1771 = vsel %vm1689, %v1768, %v1770
  %v1772 = vrot.slane %v1090, 4
  %v1773 = vsel %vm1689, %v1770, %v1772
  %v1774 = vrot.slane %v1091, 4
  %v1775 = vsel %vm1689, %v1772, %v1774
  %v1776 = vrot.slane %v1092, 4
  %v1777 = vsel %vm1689, %v1774, %v1776
  %v1778 = vrot.slane %v1093, 4
  %v1779 = vsel %vm1689, %v1776, %v1778
  %v1780 = vrot.slane %v1094, 4
  %v1781 = vsel %vm1689, %v1778, %v1780
  %v1782 = vrot.slane %v1095, 4
  %v1783 = vsel %vm1689, %v1780, %v1782
  %1784 = vrot.lane.b32.xlu0 %v1690, 32
  %v1785 = vpop.permute.xlu0 %1784
  %1786 = vrot.lane.b32.xlu0 %v1692, 32
  %v1787 = vpop.permute.xlu0 %1786
  %1788 = vrot.lane.b32.xlu0 %v1694, 32
  %v1789 = vpop.permute.xlu0 %1788
  %1790 = vrot.lane.b32.xlu0 %v1696, 32
  %v1791 = vpop.permute.xlu0 %1790
  %1792 = vrot.lane.b32.xlu0 %v1698, 32
  %v1793 = vpop.permute.xlu0 %1792
  %1794 = vrot.lane.b32.xlu0 %v1700, 32
  %v1795 = vpop.permute.xlu0 %1794
  %1796 = vrot.lane.b32.xlu0 %v1702, 32
  %v1797 = vpop.permute.xlu0 %1796
  %1798 = vrot.lane.b32.xlu0 %v1704, 32
  %v1799 = vpop.permute.xlu0 %1798
  %1800 = vrot.lane.b32.xlu0 %v1706, 32
  %v1801 = vpop.permute.xlu0 %1800
  %1802 = vrot.lane.b32.xlu0 %v1708, 32
  %v1803 = vpop.permute.xlu0 %1802
  %1804 = vrot.lane.b32.xlu0 %v1710, 32
  %v1805 = vpop.permute.xlu0 %1804
  %1806 = vrot.lane.b32.xlu0 %v1712, 32
  %v1807 = vpop.permute.xlu0 %1806
  %1808 = vrot.lane.b32.xlu0 %v1714, 32
  %v1809 = vpop.permute.xlu0 %1808
  %1810 = vrot.lane.b32.xlu0 %v1716, 32
  %v1811 = vpop.permute.xlu0 %1810
  %1812 = vrot.lane.b32.xlu0 %v1718, 32
  %v1813 = vpop.permute.xlu0 %1812
  %1814 = vrot.lane.b32.xlu0 %v1720, 32
  %v1815 = vpop.permute.xlu0 %1814
  %1816 = vrot.lane.b32.xlu0 %v1722, 32
  %v1817 = vpop.permute.xlu0 %1816
  %1818 = vrot.lane.b32.xlu0 %v1724, 32
  %v1819 = vpop.permute.xlu0 %1818
  %1820 = vrot.lane.b32.xlu0 %v1726, 32
  %v1821 = vpop.permute.xlu0 %1820
  %1822 = vrot.lane.b32.xlu0 %v1728, 32
  %v1823 = vpop.permute.xlu0 %1822
  %1824 = vrot.lane.b32.xlu0 %v1730, 32
  %v1825 = vpop.permute.xlu0 %1824
  %1826 = vrot.lane.b32.xlu0 %v1732, 32
  %v1827 = vpop.permute.xlu0 %1826
  %1828 = vrot.lane.b32.xlu0 %v1734, 32
  %v1829 = vpop.permute.xlu0 %1828
  %1830 = vrot.lane.b32.xlu0 %v1736, 32
  %v1831 = vpop.permute.xlu0 %1830
  %1832 = vrot.lane.b32.xlu0 %v1735, 32
  %v1833 = vpop.permute.xlu0 %1832
  %1834 = vrot.lane.b32.xlu0 %v1737, 32
  %v1835 = vpop.permute.xlu0 %1834
  %1836 = vrot.lane.b32.xlu0 %v1739, 32
  %v1837 = vpop.permute.xlu0 %1836
  %1838 = vrot.lane.b32.xlu0 %v1741, 32
  %v1839 = vpop.permute.xlu0 %1838
  %1840 = vrot.lane.b32.xlu0 %v1743, 32
  %v1841 = vpop.permute.xlu0 %1840
  %1842 = vrot.lane.b32.xlu0 %v1745, 32
  %v1843 = vpop.permute.xlu0 %1842
  %1844 = vrot.lane.b32.xlu0 %v1747, 32
  %v1845 = vpop.permute.xlu0 %1844
  %1846 = vrot.lane.b32.xlu0 %v1749, 32
  %v1847 = vpop.permute.xlu0 %1846
  %1848 = vrot.lane.b32.xlu0 %v1751, 32
  %v1849 = vpop.permute.xlu0 %1848
  %1850 = vrot.lane.b32.xlu0 %v1753, 32
  %v1851 = vpop.permute.xlu0 %1850
  %1852 = vrot.lane.b32.xlu0 %v1755, 32
  %v1853 = vpop.permute.xlu0 %1852
  %1854 = vrot.lane.b32.xlu0 %v1757, 32
  %v1855 = vpop.permute.xlu0 %1854
  %1856 = vrot.lane.b32.xlu0 %v1759, 32
  %v1857 = vpop.permute.xlu0 %1856
  %1858 = vrot.lane.b32.xlu0 %v1761, 32
  %v1859 = vpop.permute.xlu0 %1858
  %1860 = vrot.lane.b32.xlu0 %v1763, 32
  %v1861 = vpop.permute.xlu0 %1860
  %1862 = vrot.lane.b32.xlu0 %v1765, 32
  %v1863 = vpop.permute.xlu0 %1862
  %1864 = vrot.lane.b32.xlu0 %v1767, 32
  %v1865 = vpop.permute.xlu0 %1864
  %1866 = vrot.lane.b32.xlu0 %v1769, 32
  %v1867 = vpop.permute.xlu0 %1866
  %1868 = vrot.lane.b32.xlu0 %v1771, 32
  %v1869 = vpop.permute.xlu0 %1868
  %1870 = vrot.lane.b32.xlu0 %v1773, 32
  %v1871 = vpop.permute.xlu0 %1870
  %1872 = vrot.lane.b32.xlu0 %v1775, 32
  %v1873 = vpop.permute.xlu0 %1872
  %1874 = vrot.lane.b32.xlu0 %v1777, 32
  %v1875 = vpop.permute.xlu0 %1874
  %1876 = vrot.lane.b32.xlu0 %v1779, 32
  %v1877 = vpop.permute.xlu0 %1876
  %1878 = vrot.lane.b32.xlu0 %v1781, 32
  %v1879 = vpop.permute.xlu0 %1878
  %1880 = vrot.lane.b32.xlu0 %v1783, 32
  %v1881 = vpop.permute.xlu0 %1880
  %1882 = vrot.lane.b32.xlu0 %v1782, 32
  %v1883 = vpop.permute.xlu0 %1882
  %vm1934 = vcmask 523524
  %1935 = vst.msk [vmem:[#allocation2 + $0x8] sm:$0xf0] %vm1934, %v1785
  %vm1936 = vcmask 523520
  %1937 = vst.msk [vmem:[#allocation2 + $0x10] sm:$0xff] %vm1936, %v1787
  %1938 = vst.msk [vmem:[#allocation2 + $0x18] sm:$0xff] %vm1936, %v1789
  %1939 = vst.msk [vmem:[#allocation2 + $0x20] sm:$0xff] %vm1936, %v1791
  %1940 = vst.msk [vmem:[#allocation2 + $0x28] sm:$0xff] %vm1936, %v1793
  %1941 = vst.msk [vmem:[#allocation2 + $0x30] sm:$0xff] %vm1936, %v1795
  %1942 = vst.msk [vmem:[#allocation2 + $0x38] sm:$0xff] %vm1936, %v1797
  %1943 = vst.msk [vmem:[#allocation2 + $0x40] sm:$0xff] %vm1936, %v1799
  %1944 = vst.msk [vmem:[#allocation2 + $0x48] sm:$0xff] %vm1936, %v1801
  %1945 = vst.msk [vmem:[#allocation2 + $0x50] sm:$0xff] %vm1936, %v1803
  %1946 = vst.msk [vmem:[#allocation2 + $0x58] sm:$0xff] %vm1936, %v1805
  %1947 = vst.msk [vmem:[#allocation2 + $0x60] sm:$0xff] %vm1936, %v1807
  %1948 = vst.msk [vmem:[#allocation2 + $0x68] sm:$0xff] %vm1936, %v1809
  %1949 = vst.msk [vmem:[#allocation2 + $0x70] sm:$0xff] %vm1936, %v1811
  %1950 = vst.msk [vmem:[#allocation2 + $0x78] sm:$0xff] %vm1936, %v1813
  %1951 = vst.msk [vmem:[#allocation2 + $0x80] sm:$0xff] %vm1936, %v1815
  %1952 = vst.msk [vmem:[#allocation2 + $0x88] sm:$0xff] %vm1936, %v1817
  %1953 = vst.msk [vmem:[#allocation2 + $0x90] sm:$0xff] %vm1936, %v1819
  %1954 = vst.msk [vmem:[#allocation2 + $0x98] sm:$0xff] %vm1936, %v1821
  %1955 = vst.msk [vmem:[#allocation2 + $0xa0] sm:$0xff] %vm1936, %v1823
  %1956 = vst.msk [vmem:[#allocation2 + $0xa8] sm:$0xff] %vm1936, %v1825
  %1957 = vst.msk [vmem:[#allocation2 + $0xb0] sm:$0xff] %vm1936, %v1827
  %1958 = vst.msk [vmem:[#allocation2 + $0xb8] sm:$0xff] %vm1936, %v1829
  %1959 = vst.msk [vmem:[#allocation2 + $0xc0] sm:$0xff] %vm1936, %v1831
  %vm1960 = vcmask 519424
  %1961 = vst.msk [vmem:[#allocation2 + $0xc8] sm:$0xf] %vm1960, %v1833
  %1962 = vst.msk [vmem:[#allocation2 + $0xe0] sm:$0xf0] %vm1934, %v1835
  %1963 = vst.msk [vmem:[#allocation2 + $0xe8] sm:$0xff] %vm1936, %v1837
  %1964 = vst.msk [vmem:[#allocation2 + $0xf0] sm:$0xff] %vm1936, %v1839
  %1965 = vst.msk [vmem:[#allocation2 + $0xf8] sm:$0xff] %vm1936, %v1841
  %1966 = vst.msk [vmem:[#allocation2 + $0x100] sm:$0xff] %vm1936, %v1843
  %1967 = vst.msk [vmem:[#allocation2 + $0x108] sm:$0xff] %vm1936, %v1845
  %1968 = vst.msk [vmem:[#allocation2 + $0x110] sm:$0xff] %vm1936, %v1847
  %1969 = vst.msk [vmem:[#allocation2 + $0x118] sm:$0xff] %vm1936, %v1849
  %1970 = vst.msk [vmem:[#allocation2 + $0x120] sm:$0xff] %vm1936, %v1851
  %1971 = vst.msk [vmem:[#allocation2 + $0x128] sm:$0xff] %vm1936, %v1853
  %1972 = vst.msk [vmem:[#allocation2 + $0x130] sm:$0xff] %vm1936, %v1855
  %1973 = vst.msk [vmem:[#allocation2 + $0x138] sm:$0xff] %vm1936, %v1857
  %1974 = vst.msk [vmem:[#allocation2 + $0x140] sm:$0xff] %vm1936, %v1859
  %1975 = vst.msk [vmem:[#allocation2 + $0x148] sm:$0xff] %vm1936, %v1861
  %1976 = vst.msk [vmem:[#allocation2 + $0x150] sm:$0xff] %vm1936, %v1863
  %1977 = vst.msk [vmem:[#allocation2 + $0x158] sm:$0xff] %vm1936, %v1865
  %1978 = vst.msk [vmem:[#allocation2 + $0x160] sm:$0xff] %vm1936, %v1867
  %1979 = vst.msk [vmem:[#allocation2 + $0x168] sm:$0xff] %vm1936, %v1869
  %1980 = vst.msk [vmem:[#allocation2 + $0x170] sm:$0xff] %vm1936, %v1871
  %1981 = vst.msk [vmem:[#allocation2 + $0x178] sm:$0xff] %vm1936, %v1873
  %1982 = vst.msk [vmem:[#allocation2 + $0x180] sm:$0xff] %vm1936, %v1875
  %1983 = vst.msk [vmem:[#allocation2 + $0x188] sm:$0xff] %vm1936, %v1877
  %1984 = vst.msk [vmem:[#allocation2 + $0x190] sm:$0xff] %vm1936, %v1879
  %1985 = vst.msk [vmem:[#allocation2 + $0x198] sm:$0xff] %vm1936, %v1881
  %1986 = vst.msk [vmem:[#allocation2 + $0x1a0] sm:$0xf] %vm1960, %v1883
  %vm1987 = vsmask.f32 3328
  %v1988 = vrot.slane %v1098, 4
  %v1989 = vrot.slane %v1101, 5
  %v1990 = vor.u32 %v1988, %v1989
  %v1991 = vrot.slane %v1106, 4
  %v1992 = vrot.slane %v1109, 5
  %v1993 = vor.u32 %v1991, %v1992
  %v1994 = vsel %vm1987, %v1990, %v1993
  %v1995 = vrot.slane %v1115, 4
  %v1996 = vrot.slane %v1118, 5
  %v1997 = vor.u32 %v1995, %v1996
  %v1998 = vsel %vm1987, %v1993, %v1997
  %v1999 = vrot.slane %v1124, 4
  %v2000 = vrot.slane %v1127, 5
  %v2001 = vor.u32 %v1999, %v2000
  %v2002 = vsel %vm1987, %v1997, %v2001
  %v2003 = vrot.slane %v1133, 4
  %v2004 = vrot.slane %v1136, 5
  %v2005 = vor.u32 %v2003, %v2004
  %v2006 = vsel %vm1987, %v2001, %v2005
  %v2007 = vrot.slane %v1142, 4
  %v2008 = vrot.slane %v1145, 5
  %v2009 = vor.u32 %v2007, %v2008
  %v2010 = vsel %vm1987, %v2005, %v2009
  %v2011 = vrot.slane %v1151, 4
  %v2012 = vrot.slane %v1154, 5
  %v2013 = vor.u32 %v2011, %v2012
  %v2014 = vsel %vm1987, %v2009, %v2013
  %v2015 = vrot.slane %v1160, 4
  %v2016 = vrot.slane %v1163, 5
  %v2017 = vor.u32 %v2015, %v2016
  %v2018 = vsel %vm1987, %v2013, %v2017
  %v2019 = vrot.slane %v1169, 4
  %v2020 = vrot.slane %v1172, 5
  %v2021 = vor.u32 %v2019, %v2020
  %v2022 = vsel %vm1987, %v2017, %v2021
  %v2023 = vrot.slane %v1178, 4
  %v2024 = vrot.slane %v1181, 5
  %v2025 = vor.u32 %v2023, %v2024
  %v2026 = vsel %vm1987, %v2021, %v2025
  %v2027 = vrot.slane %v1187, 4
  %v2028 = vrot.slane %v1190, 5
  %v2029 = vor.u32 %v2027, %v2028
  %v2030 = vsel %vm1987, %v2025, %v2029
  %v2031 = vrot.slane %v1196, 4
  %v2032 = vrot.slane %v1199, 5
  %v2033 = vor.u32 %v2031, %v2032
  %v2034 = vsel %vm1987, %v2029, %v2033
  %v2035 = vrot.slane %v1205, 4
  %v2036 = vrot.slane %v1208, 5
  %v2037 = vor.u32 %v2035, %v2036
  %v2038 = vsel %vm1987, %v2033, %v2037
  %v2039 = vrot.slane %v1214, 4
  %v2040 = vrot.slane %v1217, 5
  %v2041 = vor.u32 %v2039, %v2040
  %v2042 = vsel %vm1987, %v2037, %v2041
  %v2043 = vrot.slane %v1223, 4
  %v2044 = vrot.slane %v1226, 5
  %v2045 = vor.u32 %v2043, %v2044
  %v2046 = vsel %vm1987, %v2041, %v2045
  %v2047 = vrot.slane %v1232, 4
  %v2048 = vrot.slane %v1235, 5
  %v2049 = vor.u32 %v2047, %v2048
  %v2050 = vsel %vm1987, %v2045, %v2049
  %v2051 = vrot.slane %v1241, 4
  %v2052 = vrot.slane %v1244, 5
  %v2053 = vor.u32 %v2051, %v2052
  %v2054 = vsel %vm1987, %v2049, %v2053
  %v2055 = vrot.slane %v1250, 4
  %v2056 = vrot.slane %v1253, 5
  %v2057 = vor.u32 %v2055, %v2056
  %v2058 = vsel %vm1987, %v2053, %v2057
  %v2059 = vrot.slane %v1259, 4
  %v2060 = vrot.slane %v1262, 5
  %v2061 = vor.u32 %v2059, %v2060
  %v2062 = vsel %vm1987, %v2057, %v2061
  %v2063 = vrot.slane %v1268, 4
  %v2064 = vrot.slane %v1271, 5
  %v2065 = vor.u32 %v2063, %v2064
  %v2066 = vsel %vm1987, %v2061, %v2065
  %v2067 = vrot.slane %v1277, 4
  %v2068 = vrot.slane %v1280, 5
  %v2069 = vor.u32 %v2067, %v2068
  %v2070 = vsel %vm1987, %v2065, %v2069
  %v2071 = vrot.slane %v1286, 4
  %v2072 = vrot.slane %v1289, 5
  %v2073 = vor.u32 %v2071, %v2072
  %v2074 = vsel %vm1987, %v2069, %v2073
  %v2075 = vrot.slane %v1295, 4
  %v2076 = vrot.slane %v1298, 5
  %v2077 = vor.u32 %v2075, %v2076
  %v2078 = vsel %vm1987, %v2073, %v2077
  %v2079 = vrot.slane %v1304, 4
  %v2080 = vrot.slane %v1307, 5
  %v2081 = vor.u32 %v2079, %v2080
  %v2082 = vsel %vm1987, %v2077, %v2081
  %v2083 = vrot.slane %v1313, 4
  %v2084 = vrot.slane %v1316, 5
  %v2085 = vor.u32 %v2083, %v2084
  %v2086 = vrot.slane %v1321, 4
  %v2087 = vrot.slane %v1324, 5
  %v2088 = vor.u32 %v2086, %v2087
  %v2089 = vsel %vm1987, %v2085, %v2088
  %v2090 = vrot.slane %v1330, 4
  %v2091 = vrot.slane %v1333, 5
  %v2092 = vor.u32 %v2090, %v2091
  %v2093 = vsel %vm1987, %v2088, %v2092
  %v2094 = vrot.slane %v1339, 4
  %v2095 = vrot.slane %v1342, 5
  %v2096 = vor.u32 %v2094, %v2095
  %v2097 = vsel %vm1987, %v2092, %v2096
  %v2098 = vrot.slane %v1348, 4
  %v2099 = vrot.slane %v1351, 5
  %v2100 = vor.u32 %v2098, %v2099
  %v2101 = vsel %vm1987, %v2096, %v2100
  %v2102 = vrot.slane %v1357, 4
  %v2103 = vrot.slane %v1360, 5
  %v2104 = vor.u32 %v2102, %v2103
  %v2105 = vsel %vm1987, %v2100, %v2104
  %v2106 = vrot.slane %v1366, 4
  %v2107 = vrot.slane %v1369, 5
  %v2108 = vor.u32 %v2106, %v2107
  %v2109 = vsel %vm1987, %v2104, %v2108
  %v2110 = vrot.slane %v1375, 4
  %v2111 = vrot.slane %v1378, 5
  %v2112 = vor.u32 %v2110, %v2111
  %v2113 = vsel %vm1987, %v2108, %v2112
  %v2114 = vrot.slane %v1384, 4
  %v2115 = vrot.slane %v1387, 5
  %v2116 = vor.u32 %v2114, %v2115
  %v2117 = vsel %vm1987, %v2112, %v2116
  %v2118 = vrot.slane %v1393, 4
  %v2119 = vrot.slane %v1396, 5
  %v2120 = vor.u32 %v2118, %v2119
  %v2121 = vsel %vm1987, %v2116, %v2120
  %v2122 = vrot.slane %v1402, 4
  %v2123 = vrot.slane %v1405, 5
  %v2124 = vor.u32 %v2122, %v2123
  %v2125 = vsel %vm1987, %v2120, %v2124
  %v2126 = vrot.slane %v1411, 4
  %v2127 = vrot.slane %v1414, 5
  %v2128 = vor.u32 %v2126, %v2127
  %v2129 = vsel %vm1987, %v2124, %v2128
  %v2130 = vrot.slane %v1420, 4
  %v2131 = vrot.slane %v1423, 5
  %v2132 = vor.u32 %v2130, %v2131
  %v2133 = vsel %vm1987, %v2128, %v2132
  %v2134 = vrot.slane %v1429, 4
  %v2135 = vrot.slane %v1432, 5
  %v2136 = vor.u32 %v2134, %v2135
  %v2137 = vsel %vm1987, %v2132, %v2136
  %v2138 = vrot.slane %v1438, 4
  %v2139 = vrot.slane %v1441, 5
  %v2140 = vor.u32 %v2138, %v2139
  %v2141 = vsel %vm1987, %v2136, %v2140
  %v2142 = vrot.slane %v1447, 4
  %v2143 = vrot.slane %v1450, 5
  %v2144 = vor.u32 %v2142, %v2143
  %v2145 = vsel %vm1987, %v2140, %v2144
  %v2146 = vrot.slane %v1456, 4
  %v2147 = vrot.slane %v1459, 5
  %v2148 = vor.u32 %v2146, %v2147
  %v2149 = vsel %vm1987, %v2144, %v2148
  %v2150 = vrot.slane %v1465, 4
  %v2151 = vrot.slane %v1468, 5
  %v2152 = vor.u32 %v2150, %v2151
  %v2153 = vsel %vm1987, %v2148, %v2152
  %v2154 = vrot.slane %v1474, 4
  %v2155 = vrot.slane %v1477, 5
  %v2156 = vor.u32 %v2154, %v2155
  %v2157 = vsel %vm1987, %v2152, %v2156
  %v2158 = vrot.slane %v1483, 4
  %v2159 = vrot.slane %v1486, 5
  %v2160 = vor.u32 %v2158, %v2159
  %v2161 = vsel %vm1987, %v2156, %v2160
  %v2162 = vrot.slane %v1492, 4
  %v2163 = vrot.slane %v1495, 5
  %v2164 = vor.u32 %v2162, %v2163
  %v2165 = vsel %vm1987, %v2160, %v2164
  %v2166 = vrot.slane %v1501, 4
  %v2167 = vrot.slane %v1504, 5
  %v2168 = vor.u32 %v2166, %v2167
  %v2169 = vsel %vm1987, %v2164, %v2168
  %v2170 = vrot.slane %v1510, 4
  %v2171 = vrot.slane %v1513, 5
  %v2172 = vor.u32 %v2170, %v2171
  %v2173 = vsel %vm1987, %v2168, %v2172
  %v2174 = vrot.slane %v1519, 4
  %v2175 = vrot.slane %v1522, 5
  %v2176 = vor.u32 %v2174, %v2175
  %v2177 = vsel %vm1987, %v2172, %v2176
  %2178 = vrot.lane.b32.xlu0 %v1990, 64
  %v2179 = vpop.permute.xlu0 %2178
  %2180 = vrot.lane.b32.xlu0 %v1994, 64
  %v2181 = vpop.permute.xlu0 %2180
  %2182 = vrot.lane.b32.xlu0 %v1998, 64
  %v2183 = vpop.permute.xlu0 %2182
  %2184 = vrot.lane.b32.xlu0 %v2002, 64
  %v2185 = vpop.permute.xlu0 %2184
  %2186 = vrot.lane.b32.xlu0 %v2006, 64
  %v2187 = vpop.permute.xlu0 %2186
  %2188 = vrot.lane.b32.xlu0 %v2010, 64
  %v2189 = vpop.permute.xlu0 %2188
  %2190 = vrot.lane.b32.xlu0 %v2014, 64
  %v2191 = vpop.permute.xlu0 %2190
  %2192 = vrot.lane.b32.xlu0 %v2018, 64
  %v2193 = vpop.permute.xlu0 %2192
  %2194 = vrot.lane.b32.xlu0 %v2022, 64
  %v2195 = vpop.permute.xlu0 %2194
  %2196 = vrot.lane.b32.xlu0 %v2026, 64
  %v2197 = vpop.permute.xlu0 %2196
  %2198 = vrot.lane.b32.xlu0 %v2030, 64
  %v2199 = vpop.permute.xlu0 %2198
  %2200 = vrot.lane.b32.xlu0 %v2034, 64
  %v2201 = vpop.permute.xlu0 %2200
  %2202 = vrot.lane.b32.xlu0 %v2038, 64
  %v2203 = vpop.permute.xlu0 %2202
  %2204 = vrot.lane.b32.xlu0 %v2042, 64
  %v2205 = vpop.permute.xlu0 %2204
  %2206 = vrot.lane.b32.xlu0 %v2046, 64
  %v2207 = vpop.permute.xlu0 %2206
  %2208 = vrot.lane.b32.xlu0 %v2050, 64
  %v2209 = vpop.permute.xlu0 %2208
  %2210 = vrot.lane.b32.xlu0 %v2054, 64
  %v2211 = vpop.permute.xlu0 %2210
  %2212 = vrot.lane.b32.xlu0 %v2058, 64
  %v2213 = vpop.permute.xlu0 %2212
  %2214 = vrot.lane.b32.xlu0 %v2062, 64
  %v2215 = vpop.permute.xlu0 %2214
  %2216 = vrot.lane.b32.xlu0 %v2066, 64
  %v2217 = vpop.permute.xlu0 %2216
  %2218 = vrot.lane.b32.xlu0 %v2070, 64
  %v2219 = vpop.permute.xlu0 %2218
  %2220 = vrot.lane.b32.xlu0 %v2074, 64
  %v2221 = vpop.permute.xlu0 %2220
  %2222 = vrot.lane.b32.xlu0 %v2078, 64
  %v2223 = vpop.permute.xlu0 %2222
  %2224 = vrot.lane.b32.xlu0 %v2082, 64
  %v2225 = vpop.permute.xlu0 %2224
  %2226 = vrot.lane.b32.xlu0 %v2081, 64
  %v2227 = vpop.permute.xlu0 %2226
  %2228 = vrot.lane.b32.xlu0 %v2085, 64
  %v2229 = vpop.permute.xlu0 %2228
  %2230 = vrot.lane.b32.xlu0 %v2089, 64
  %v2231 = vpop.permute.xlu0 %2230
  %2232 = vrot.lane.b32.xlu0 %v2093, 64
  %v2233 = vpop.permute.xlu0 %2232
  %2234 = vrot.lane.b32.xlu0 %v2097, 64
  %v2235 = vpop.permute.xlu0 %2234
  %2236 = vrot.lane.b32.xlu0 %v2101, 64
  %v2237 = vpop.permute.xlu0 %2236
  %2238 = vrot.lane.b32.xlu0 %v2105, 64
  %v2239 = vpop.permute.xlu0 %2238
  %2240 = vrot.lane.b32.xlu0 %v2109, 64
  %v2241 = vpop.permute.xlu0 %2240
  %2242 = vrot.lane.b32.xlu0 %v2113, 64
  %v2243 = vpop.permute.xlu0 %2242
  %2244 = vrot.lane.b32.xlu0 %v2117, 64
  %v2245 = vpop.permute.xlu0 %2244
  %2246 = vrot.lane.b32.xlu0 %v2121, 64
  %v2247 = vpop.permute.xlu0 %2246
  %2248 = vrot.lane.b32.xlu0 %v2125, 64
  %v2249 = vpop.permute.xlu0 %2248
  %2250 = vrot.lane.b32.xlu0 %v2129, 64
  %v2251 = vpop.permute.xlu0 %2250
  %2252 = vrot.lane.b32.xlu0 %v2133, 64
  %v2253 = vpop.permute.xlu0 %2252
  %2254 = vrot.lane.b32.xlu0 %v2137, 64
  %v2255 = vpop.permute.xlu0 %2254
  %2256 = vrot.lane.b32.xlu0 %v2141, 64
  %v2257 = vpop.permute.xlu0 %2256
  %2258 = vrot.lane.b32.xlu0 %v2145, 64
  %v2259 = vpop.permute.xlu0 %2258
  %2260 = vrot.lane.b32.xlu0 %v2149, 64
  %v2261 = vpop.permute.xlu0 %2260
  %2262 = vrot.lane.b32.xlu0 %v2153, 64
  %v2263 = vpop.permute.xlu0 %2262
  %2264 = vrot.lane.b32.xlu0 %v2157, 64
  %v2265 = vpop.permute.xlu0 %2264
  %2266 = vrot.lane.b32.xlu0 %v2161, 64
  %v2267 = vpop.permute.xlu0 %2266
  %2268 = vrot.lane.b32.xlu0 %v2165, 64
  %v2269 = vpop.permute.xlu0 %2268
  %2270 = vrot.lane.b32.xlu0 %v2169, 64
  %v2271 = vpop.permute.xlu0 %2270
  %2272 = vrot.lane.b32.xlu0 %v2173, 64
  %v2273 = vpop.permute.xlu0 %2272
  %2274 = vrot.lane.b32.xlu0 %v2177, 64
  %v2275 = vpop.permute.xlu0 %2274
  %2276 = vrot.lane.b32.xlu0 %v2176, 64
  %v2277 = vpop.permute.xlu0 %2276
  %vm2328 = vcmask 785923
  %vm2329 = vsmask.f32 7950
  %vm2330 = vmand %vm2328, %vm2329
  %v2331 = vld [vmem:[#allocation2 + $0x8] sm:$0xf8]
  %v2332 = vsel %vm2330, %v2179, %v2331
  %2333 = vst [vmem:[#allocation2 + $0x8] sm:$0xf8] %v2332
  %vm2334 = vcmask 785920
  %2335 = vst.msk [vmem:[#allocation2 + $0x10] sm:$0xff] %vm2334, %v2181
  %2336 = vst.msk [vmem:[#allocation2 + $0x18] sm:$0xff] %vm2334, %v2183
  %2337 = vst.msk [vmem:[#allocation2 + $0x20] sm:$0xff] %vm2334, %v2185
  %2338 = vst.msk [vmem:[#allocation2 + $0x28] sm:$0xff] %vm2334, %v2187
  %2339 = vst.msk [vmem:[#allocation2 + $0x30] sm:$0xff] %vm2334, %v2189
  %2340 = vst.msk [vmem:[#allocation2 + $0x38] sm:$0xff] %vm2334, %v2191
  %2341 = vst.msk [vmem:[#allocation2 + $0x40] sm:$0xff] %vm2334, %v2193
  %2342 = vst.msk [vmem:[#allocation2 + $0x48] sm:$0xff] %vm2334, %v2195
  %2343 = vst.msk [vmem:[#allocation2 + $0x50] sm:$0xff] %vm2334, %v2197
  %2344 = vst.msk [vmem:[#allocation2 + $0x58] sm:$0xff] %vm2334, %v2199
  %2345 = vst.msk [vmem:[#allocation2 + $0x60] sm:$0xff] %vm2334, %v2201
  %2346 = vst.msk [vmem:[#allocation2 + $0x68] sm:$0xff] %vm2334, %v2203
  %2347 = vst.msk [vmem:[#allocation2 + $0x70] sm:$0xff] %vm2334, %v2205
  %2348 = vst.msk [vmem:[#allocation2 + $0x78] sm:$0xff] %vm2334, %v2207
  %2349 = vst.msk [vmem:[#allocation2 + $0x80] sm:$0xff] %vm2334, %v2209
  %2350 = vst.msk [vmem:[#allocation2 + $0x88] sm:$0xff] %vm2334, %v2211
  %2351 = vst.msk [vmem:[#allocation2 + $0x90] sm:$0xff] %vm2334, %v2213
  %2352 = vst.msk [vmem:[#allocation2 + $0x98] sm:$0xff] %vm2334, %v2215
  %2353 = vst.msk [vmem:[#allocation2 + $0xa0] sm:$0xff] %vm2334, %v2217
  %2354 = vst.msk [vmem:[#allocation2 + $0xa8] sm:$0xff] %vm2334, %v2219
  %2355 = vst.msk [vmem:[#allocation2 + $0xb0] sm:$0xff] %vm2334, %v2221
  %2356 = vst.msk [vmem:[#allocation2 + $0xb8] sm:$0xff] %vm2334, %v2223
  %2357 = vst.msk [vmem:[#allocation2 + $0xc0] sm:$0xff] %vm2334, %v2225
  %vm2358 = vcmask 781824
  %vm2359 = vmand %vm2358, %vm1987
  %v2360 = vld [vmem:[#allocation2 + $0xc8] sm:$0xf]
  %v2361 = vsel %vm2359, %v2227, %v2360
  %2362 = vst [vmem:[#allocation2 + $0xc8] sm:$0xf] %v2361
  %v2363 = vld [vmem:[#allocation2 + $0xe0] sm:$0xf8]
  %v2364 = vsel %vm2330, %v2229, %v2363
  %2365 = vst [vmem:[#allocation2 + $0xe0] sm:$0xf8] %v2364
  %2366 = vst.msk [vmem:[#allocation2 + $0xe8] sm:$0xff] %vm2334, %v2231
  %2367 = vst.msk [vmem:[#allocation2 + $0xf0] sm:$0xff] %vm2334, %v2233
  %2368 = vst.msk [vmem:[#allocation2 + $0xf8] sm:$0xff] %vm2334, %v2235
  %2369 = vst.msk [vmem:[#allocation2 + $0x100] sm:$0xff] %vm2334, %v2237
  %2370 = vst.msk [vmem:[#allocation2 + $0x108] sm:$0xff] %vm2334, %v2239
  %2371 = vst.msk [vmem:[#allocation2 + $0x110] sm:$0xff] %vm2334, %v2241
  %2372 = vst.msk [vmem:[#allocation2 + $0x118] sm:$0xff] %vm2334, %v2243
  %2373 = vst.msk [vmem:[#allocation2 + $0x120] sm:$0xff] %vm2334, %v2245
  %2374 = vst.msk [vmem:[#allocation2 + $0x128] sm:$0xff] %vm2334, %v2247
  %2375 = vst.msk [vmem:[#allocation2 + $0x130] sm:$0xff] %vm2334, %v2249
  %2376 = vst.msk [vmem:[#allocation2 + $0x138] sm:$0xff] %vm2334, %v2251
  %2377 = vst.msk [vmem:[#allocation2 + $0x140] sm:$0xff] %vm2334, %v2253
  %2378 = vst.msk [vmem:[#allocation2 + $0x148] sm:$0xff] %vm2334, %v2255
  %2379 = vst.msk [vmem:[#allocation2 + $0x150] sm:$0xff] %vm2334, %v2257
  %2380 = vst.msk [vmem:[#allocation2 + $0x158] sm:$0xff] %vm2334, %v2259
  %2381 = vst.msk [vmem:[#allocation2 + $0x160] sm:$0xff] %vm2334, %v2261
  %2382 = vst.msk [vmem:[#allocation2 + $0x168] sm:$0xff] %vm2334, %v2263
  %2383 = vst.msk [vmem:[#allocation2 + $0x170] sm:$0xff] %vm2334, %v2265
  %2384 = vst.msk [vmem:[#allocation2 + $0x178] sm:$0xff] %vm2334, %v2267
  %2385 = vst.msk [vmem:[#allocation2 + $0x180] sm:$0xff] %vm2334, %v2269
  %2386 = vst.msk [vmem:[#allocation2 + $0x188] sm:$0xff] %vm2334, %v2271
  %2387 = vst.msk [vmem:[#allocation2 + $0x190] sm:$0xff] %vm2334, %v2273
  %2388 = vst.msk [vmem:[#allocation2 + $0x198] sm:$0xff] %vm2334, %v2275
  %v2389 = vld [vmem:[#allocation2 + $0x1a0] sm:$0xf]
  %v2390 = vsel %vm2359, %v2277, %v2389
  %2391 = vst [vmem:[#allocation2 + $0x1a0] sm:$0xf] %v2390
  %v2392 = vld [vmem:[#allocation2] sm:$0xff]
  %v2393 = vld [vmem:[#allocation2 + $0x8] sm:$0xff]
  %v2394 = vld [vmem:[#allocation2 + $0x10] sm:$0xff]
  %v2395 = vld [vmem:[#allocation2 + $0x18] sm:$0xff]
  %v2396 = vld [vmem:[#allocation2 + $0x20] sm:$0xff]
  %v2397 = vld [vmem:[#allocation2 + $0x28] sm:$0xff]
  %v2398 = vld [vmem:[#allocation2 + $0x30] sm:$0xff]
  %v2399 = vld [vmem:[#allocation2 + $0x38] sm:$0xff]
  %v2400 = vld [vmem:[#allocation2 + $0x40] sm:$0xff]
  %v2401 = vld [vmem:[#allocation2 + $0x48] sm:$0xff]
  %v2402 = vld [vmem:[#allocation2 + $0x50] sm:$0xff]
  %v2403 = vld [vmem:[#allocation2 + $0x58] sm:$0xff]
  %v2404 = vld [vmem:[#allocation2 + $0x60] sm:$0xff]
  %v2405 = vld [vmem:[#allocation2 + $0x68] sm:$0xff]
  %v2406 = vld [vmem:[#allocation2 + $0x70] sm:$0xff]
  %v2407 = vld [vmem:[#allocation2 + $0x78] sm:$0xff]
  %v2408 = vld [vmem:[#allocation2 + $0x80] sm:$0xff]
  %v2409 = vld [vmem:[#allocation2 + $0x88] sm:$0xff]
  %v2410 = vld [vmem:[#allocation2 + $0x90] sm:$0xff]
  %v2411 = vld [vmem:[#allocation2 + $0x98] sm:$0xff]
  %v2412 = vld [vmem:[#allocation2 + $0xa0] sm:$0xff]
  %v2413 = vld [vmem:[#allocation2 + $0xa8] sm:$0xff]
  %v2414 = vld [vmem:[#allocation2 + $0xb0] sm:$0xff]
  %v2415 = vld [vmem:[#allocation2 + $0xb8] sm:$0xff]
  %v2416 = vld [vmem:[#allocation2 + $0xd8] sm:$0xff]
  %v2417 = vld [vmem:[#allocation2 + $0xe0] sm:$0xff]
  %v2418 = vld [vmem:[#allocation2 + $0xe8] sm:$0xff]
  %v2419 = vld [vmem:[#allocation2 + $0xf0] sm:$0xff]
  %v2420 = vld [vmem:[#allocation2 + $0xf8] sm:$0xff]
  %v2421 = vld [vmem:[#allocation2 + $0x100] sm:$0xff]
  %v2422 = vld [vmem:[#allocation2 + $0x108] sm:$0xff]
  %v2423 = vld [vmem:[#allocation2 + $0x110] sm:$0xff]
  %v2424 = vld [vmem:[#allocation2 + $0x118] sm:$0xff]
  %v2425 = vld [vmem:[#allocation2 + $0x120] sm:$0xff]
  %v2426 = vld [vmem:[#allocation2 + $0x128] sm:$0xff]
  %v2427 = vld [vmem:[#allocation2 + $0x130] sm:$0xff]
  %v2428 = vld [vmem:[#allocation2 + $0x138] sm:$0xff]
  %v2429 = vld [vmem:[#allocation2 + $0x140] sm:$0xff]
  %v2430 = vld [vmem:[#allocation2 + $0x148] sm:$0xff]
  %v2431 = vld [vmem:[#allocation2 + $0x150] sm:$0xff]
  %v2432 = vld [vmem:[#allocation2 + $0x158] sm:$0xff]
  %v2433 = vld [vmem:[#allocation2 + $0x160] sm:$0xff]
  %v2434 = vld [vmem:[#allocation2 + $0x168] sm:$0xff]
  %v2435 = vld [vmem:[#allocation2 + $0x170] sm:$0xff]
  %v2436 = vld [vmem:[#allocation2 + $0x178] sm:$0xff]
  %v2437 = vld [vmem:[#allocation2 + $0x180] sm:$0xff]
  %v2438 = vld [vmem:[#allocation2 + $0x188] sm:$0xff]
  %v2439 = vld [vmem:[#allocation2 + $0x190] sm:$0xff]
  %v2440 = vld [vmem:[%s2] sm:$0xf]
  %v2441 = vld [vmem:[%s2 + $0x4] sm:$0xf]
  %v2442 = vld [vmem:[%s2 + $0x8] sm:$0xf]
  %v2443 = vld [vmem:[%s2 + $0xc] sm:$0xf]
  %v2444 = vld [vmem:[%s2 + $0x10] sm:$0xf]
  %v2445 = vld [vmem:[%s2 + $0x14] sm:$0xf]
  %v2446 = vld [vmem:[%s2 + $0x18] sm:$0xf]
  %v2447 = vld [vmem:[%s2 + $0x1c] sm:$0xf]
  %v2448 = vld [vmem:[%s2 + $0x20] sm:$0xf]
  %v2449 = vld [vmem:[%s2 + $0x24] sm:$0xf]
  %v2450 = vld [vmem:[%s2 + $0x28] sm:$0xf]
  %v2451 = vld [vmem:[%s2 + $0x2c] sm:$0xf]
  %v2452 = vld [vmem:[#allocation2 + $0x8] sm:$0xf0]
  %v2453 = vld [vmem:[#allocation2 + $0xc0] sm:$0xff]
  %v2454 = vld [vmem:[#allocation2 + $0xc8] sm:$0xf]
  %v2455 = vld [vmem:[#allocation2 + $0xe0] sm:$0xf0]
  %v2456 = vld [vmem:[#allocation2 + $0x198] sm:$0xff]
  %v2457 = vld [vmem:[#allocation2 + $0x1a0] sm:$0xf]
  %v2508 = vrot.slane %v2452, 4
  %v2509 = vrot.slane %v2394, 4
  %v2510 = vsel %vm1689, %v2508, %v2509
  %v2511 = vrot.slane %v2395, 4
  %v2512 = vsel %vm1689, %v2509, %v2511
  %v2513 = vrot.slane %v2396, 4
  %v2514 = vsel %vm1689, %v2511, %v2513
  %v2515 = vrot.slane %v2397, 4
  %v2516 = vsel %vm1689, %v2513, %v2515
  %v2517 = vrot.slane %v2398, 4
  %v2518 = vsel %vm1689, %v2515, %v2517
  %v2519 = vrot.slane %v2399, 4
  %v2520 = vsel %vm1689, %v2517, %v2519
  %v2521 = vrot.slane %v2400, 4
  %v2522 = vsel %vm1689, %v2519, %v2521
  %v2523 = vrot.slane %v2401, 4
  %v2524 = vsel %vm1689, %v2521, %v2523
  %v2525 = vrot.slane %v2402, 4
  %v2526 = vsel %vm1689, %v2523, %v2525
  %v2527 = vrot.slane %v2403, 4
  %v2528 = vsel %vm1689, %v2525, %v2527
  %v2529 = vrot.slane %v2404, 4
  %v2530 = vsel %vm1689, %v2527, %v2529
  %v2531 = vrot.slane %v2405, 4
  %v2532 = vsel %vm1689, %v2529, %v2531
  %v2533 = vrot.slane %v2406, 4
  %v2534 = vsel %vm1689, %v2531, %v2533
  %v2535 = vrot.slane %v2407, 4
  %v2536 = vsel %vm1689, %v2533, %v2535
  %v2537 = vrot.slane %v2408, 4
  %v2538 = vsel %vm1689, %v2535, %v2537
  %v2539 = vrot.slane %v2409, 4
  %v2540 = vsel %vm1689, %v2537, %v2539
  %v2541 = vrot.slane %v2410, 4
  %v2542 = vsel %vm1689, %v2539, %v2541
  %v2543 = vrot.slane %v2411, 4
  %v2544 = vsel %vm1689, %v2541, %v2543
  %v2545 = vrot.slane %v2412, 4
  %v2546 = vsel %vm1689, %v2543, %v2545
  %v2547 = vrot.slane %v2413, 4
  %v2548 = vsel %vm1689, %v2545, %v2547
  %v2549 = vrot.slane %v2414, 4
  %v2550 = vsel %vm1689, %v2547, %v2549
  %v2551 = vrot.slane %v2415, 4
  %v2552 = vsel %vm1689, %v2549, %v2551
  %v2553 = vrot.slane %v2453, 4
  %v2554 = vsel %vm1689, %v2551, %v2553
  %v2555 = vrot.slane %v2454, 4
  %v2556 = vsel %vm1689, %v2553, %v2555
  %v2557 = vrot.slane %v2455, 4
  %v2558 = vrot.slane %v2418, 4
  %v2559 = vsel %vm1689, %v2557, %v2558
  %v2560 = vrot.slane %v2419, 4
  %v2561 = vsel %vm1689, %v2558, %v2560
  %v2562 = vrot.slane %v2420, 4
  %v2563 = vsel %vm1689, %v2560, %v2562
  %v2564 = vrot.slane %v2421, 4
  %v2565 = vsel %vm1689, %v2562, %v2564
  %v2566 = vrot.slane %v2422, 4
  %v2567 = vsel %vm1689, %v2564, %v2566
  %v2568 = vrot.slane %v2423, 4
  %v2569 = vsel %vm1689, %v2566, %v2568
  %v2570 = vrot.slane %v2424, 4
  %v2571 = vsel %vm1689, %v2568, %v2570
  %v2572 = vrot.slane %v2425, 4
  %v2573 = vsel %vm1689, %v2570, %v2572
  %v2574 = vrot.slane %v2426, 4
  %v2575 = vsel %vm1689, %v2572, %v2574
  %v2576 = vrot.slane %v2427, 4
  %v2577 = vsel %vm1689, %v2574, %v2576
  %v2578 = vrot.slane %v2428, 4
  %v2579 = vsel %vm1689, %v2576, %v2578
  %v2580 = vrot.slane %v2429, 4
  %v2581 = vsel %vm1689, %v2578, %v2580
  %v2582 = vrot.slane %v2430, 4
  %v2583 = vsel %vm1689, %v2580, %v2582
  %v2584 = vrot.slane %v2431, 4
  %v2585 = vsel %vm1689, %v2582, %v2584
  %v2586 = vrot.slane %v2432, 4
  %v2587 = vsel %vm1689, %v2584, %v2586
  %v2588 = vrot.slane %v2433, 4
  %v2589 = vsel %vm1689, %v2586, %v2588
  %v2590 = vrot.slane %v2434, 4
  %v2591 = vsel %vm1689, %v2588, %v2590
  %v2592 = vrot.slane %v2435, 4
  %v2593 = vsel %vm1689, %v2590, %v2592
  %v2594 = vrot.slane %v2436, 4
  %v2595 = vsel %vm1689, %v2592, %v2594
  %v2596 = vrot.slane %v2437, 4
  %v2597 = vsel %vm1689, %v2594, %v2596
  %v2598 = vrot.slane %v2438, 4
  %v2599 = vsel %vm1689, %v2596, %v2598
  %v2600 = vrot.slane %v2439, 4
  %v2601 = vsel %vm1689, %v2598, %v2600
  %v2602 = vrot.slane %v2456, 4
  %v2603 = vsel %vm1689, %v2600, %v2602
  %v2604 = vrot.slane %v2457, 4
  %v2605 = vsel %vm1689, %v2602, %v2604
  %s2606 = scalar_lea.vmem %s2, 48
  %v2607 = vld [vmem:[%s2606] sm:$0xf]
  %v2608 = vld [vmem:[%s2606 + $0x4] sm:$0xf]
  %v2609 = vld [vmem:[%s2606 + $0x8] sm:$0xf]
  %v2610 = vld [vmem:[%s2606 + $0xc] sm:$0xf]
  %v2611 = vld [vmem:[%s2606 + $0x10] sm:$0xf]
  %v2612 = vld [vmem:[%s2606 + $0x14] sm:$0xf]
  %v2613 = vld [vmem:[%s2606 + $0x18] sm:$0xf]
  %v2614 = vld [vmem:[%s2606 + $0x1c] sm:$0xf]
  %v2615 = vld [vmem:[%s2606 + $0x20] sm:$0xf]
  %v2616 = vld [vmem:[%s2606 + $0x24] sm:$0xf]
  %v2617 = vld [vmem:[%s2606 + $0x28] sm:$0xf]
  %v2618 = vld [vmem:[%s2606 + $0x2c] sm:$0xf]
  %v2631 = vunpack.c.l.b16 %v2607
  %v2632 = vunpack.c.l.b16 %v2608
  %v2633 = vunpack.c.l.b16 %v2609
  %v2634 = vunpack.c.l.b16 %v2610
  %v2635 = vunpack.c.l.b16 %v2611
  %v2636 = vunpack.c.l.b16 %v2612
  %v2637 = vunpack.c.l.b16 %v2613
  %v2638 = vunpack.c.l.b16 %v2614
  %v2639 = vunpack.c.l.b16 %v2615
  %v2640 = vunpack.c.l.b16 %v2616
  %v2641 = vunpack.c.l.b16 %v2617
  %v2642 = vunpack.c.l.b16 %v2618
  %v2643 = vpack.c.b16 %v2632, %v2631
  %v2644 = vpack.c.b16 %v2634, %v2633
  %v2645 = vpack.c.b16 %v2636, %v2635
  %v2646 = vpack.c.b16 %v2638, %v2637
  %v2647 = vpack.c.b16 %v2640, %v2639
  %v2648 = vpack.c.b16 %v2642, %v2641
  %v2656 = vsel %vm18, %v2510, 0
  %v2659 = vsel %vm18, %v2512, 0
  %v2662 = vsel %vm18, %v2514, 0
  %v2665 = vsel %vm18, %v2516, 0
  %v2668 = vsel %vm18, %v2518, 0
  %v2671 = vsel %vm18, %v2520, 0
  %v2674 = vsel %vm18, %v2522, 0
  %v2677 = vsel %vm18, %v2524, 0
  %v2680 = vsel %vm18, %v2526, 0
  %v2683 = vsel %vm18, %v2528, 0
  %v2686 = vsel %vm18, %v2530, 0
  %v2689 = vsel %vm18, %v2532, 0
  %v2692 = vsel %vm18, %v2534, 0
  %v2695 = vsel %vm18, %v2536, 0
  %v2698 = vsel %vm18, %v2538, 0
  %v2701 = vsel %vm18, %v2540, 0
  %v2704 = vsel %vm18, %v2542, 0
  %v2707 = vsel %vm18, %v2544, 0
  %v2710 = vsel %vm18, %v2546, 0
  %v2713 = vsel %vm18, %v2548, 0
  %v2716 = vsel %vm18, %v2550, 0
  %v2719 = vsel %vm18, %v2552, 0
  %v2722 = vsel %vm18, %v2554, 0
  %v2725 = vsel %vm18, %v2556, 0
  %v2728 = vsel %vm18, %v2559, 0
  %v2731 = vsel %vm18, %v2561, 0
  %v2734 = vsel %vm18, %v2563, 0
  %v2737 = vsel %vm18, %v2565, 0
  %v2740 = vsel %vm18, %v2567, 0
  %v2743 = vsel %vm18, %v2569, 0
  %v2746 = vsel %vm18, %v2571, 0
  %v2749 = vsel %vm18, %v2573, 0
  %v2752 = vsel %vm18, %v2575, 0
  %v2755 = vsel %vm18, %v2577, 0
  %v2758 = vsel %vm18, %v2579, 0
  %v2761 = vsel %vm18, %v2581, 0
  %v2764 = vsel %vm18, %v2583, 0
  %v2767 = vsel %vm18, %v2585, 0
  %v2770 = vsel %vm18, %v2587, 0
  %v2773 = vsel %vm18, %v2589, 0
  %v2776 = vsel %vm18, %v2591, 0
  %v2779 = vsel %vm18, %v2593, 0
  %v2782 = vsel %vm18, %v2595, 0
  %v2785 = vsel %vm18, %v2597, 0
  %v2788 = vsel %vm18, %v2599, 0
  %v2791 = vsel %vm18, %v2601, 0
  %v2794 = vsel %vm18, %v2603, 0
  %v2797 = vsel %vm18, %v2605, 0
  %2799 = vmatprep.subr.bf16.mxu0 0
  %2800 = vmatpush1.bf16.msra.mxu0 %v2643
  %2801 = vmatprep.subr.bf16.mxu0 0
  %2802 = vmatpush1.bf16.msra.mxu0 %v2644
  %2803 = vmatprep.subr.bf16.mxu0 0
  %2804 = vmatpush1.bf16.msra.mxu0 %v2645
  %2805 = vmatprep.subr.bf16.mxu0 0
  %2806 = vmatpush1.bf16.msra.mxu0 %v2646
  %2807 = vmatprep.subr.bf16.mxu0 0
  %2808 = vmatpush1.bf16.msra.mxu0 %v2647
  %2809 = vmatprep.subr.bf16.mxu0 0
  %2810 = vmatpush1.bf16.msra.mxu0 %v2648
  %2811 = vmatprep.subr.bf16.mxu0 0
  %2812 = vmatpush1.bf16.msra.mxu0 0
  %2813 = vmatprep.subr.bf16.mxu0 0
  %2814 = vmatpush1.bf16.msra.mxu0 0
  %2815 = vmatprep.subr.bf16.mxu0 0
  %2816 = vmatpush1.bf16.msra.mxu0 0
  %2817 = vmatprep.subr.bf16.mxu0 0
  %2818 = vmatpush1.bf16.msra.mxu0 0
  %2819 = vmatprep.subr.bf16.mxu0 0
  %2820 = vmatpush1.bf16.msra.mxu0 0
  %2821 = vmatprep.subr.bf16.mxu0 0
  %2822 = vmatpush1.bf16.msra.mxu0 0
  %2823 = vmatprep.subr.bf16.mxu0 0
  %2824 = vmatpush1.bf16.msra.mxu0 0
  %2825 = vmatprep.subr.bf16.mxu0 0
  %2826 = vmatpush1.bf16.msra.mxu0 0
  %2827 = vmatprep.subr.bf16.mxu0 0
  %2828 = vmatpush1.bf16.msra.mxu0 0
  %2829 = vmatprep.subr.bf16.mxu0 0
  %2830 = vmatpush1.bf16.msra.mxu0 0
  %2831 = vmatprep.mubr.bf16.mxu0 0
  %2832 = vmatmul.mubr.bf16.gmra.mrb[0].mxu0 %v2656
  %v2833 = vpop.f32.mrb[0].mxu0
  %v2834 = vadd.f32 0.0, %v2833
  %v2835 = vpop.f32.mrb[0].mxu0
  %v2836 = vpop.f32.mrb[0].mxu0
  %v2837 = vadd.f32 0.0, %v2836
  %v2838 = vpop.f32.mrb[0].mxu0
  %2839 = vmatprep.mubr.bf16.mxu0 0
  %2840 = vmatmul.mubr.bf16.gmra.mrb[0].mxu0 %v2659
  %v2841 = vpop.f32.mrb[0].mxu0
  %v2842 = vadd.f32 0.0, %v2841
  %v2843 = vpop.f32.mrb[0].mxu0
  %v2844 = vpop.f32.mrb[0].mxu0
  %v2845 = vadd.f32 0.0, %v2844
  %v2846 = vpop.f32.mrb[0].mxu0
  %2847 = vmatprep.mubr.bf16.mxu0 0
  %2848 = vmatmul.mubr.bf16.gmra.mrb[0].mxu0 %v2662
  %v2849 = vpop.f32.mrb[0].mxu0
  %v2850 = vadd.f32 0.0, %v2849
  %v2851 = vpop.f32.mrb[0].mxu0
  %v2852 = vpop.f32.mrb[0].mxu0
  %v2853 = vadd.f32 0.0, %v2852
  %v2854 = vpop.f32.mrb[0].mxu0
  %2855 = vmatprep.mubr.bf16.mxu0 0
  %2856 = vmatmul.mubr.bf16.gmra.mrb[0].mxu0 %v2665
  %v2857 = vpop.f32.mrb[0].mxu0
  %v2858 = vadd.f32 0.0, %v2857
  %v2859 = vpop.f32.mrb[0].mxu0
  %v2860 = vpop.f32.mrb[0].mxu0
  %v2861 = vadd.f32 0.0, %v2860
  %v2862 = vpop.f32.mrb[0].mxu0
  %2863 = vmatprep.mubr.bf16.mxu0 0
  %2864 = vmatmul.mubr.bf16.gmra.mrb[0].mxu0 %v2668
  %v2865 = vpop.f32.mrb[0].mxu0
  %v2866 = vadd.f32 0.0, %v2865
  %v2867 = vpop.f32.mrb[0].mxu0
  %v2868 = vpop.f32.mrb[0].mxu0
  %v2869 = vadd.f32 0.0, %v2868
  %v2870 = vpop.f32.mrb[0].mxu0
  %2871 = vmatprep.mubr.bf16.mxu0 0
  %2872 = vmatmul.mubr.bf16.gmra.mrb[0].mxu0 %v2671
  %v2873 = vpop.f32.mrb[0].mxu0
  %v2874 = vadd.f32 0.0, %v2873
  %v2875 = vpop.f32.mrb[0].mxu0
  %v2876 = vpop.f32.mrb[0].mxu0
  %v2877 = vadd.f32 0.0, %v2876
  %v2878 = vpop.f32.mrb[0].mxu0
  %2879 = vmatprep.mubr.bf16.mxu0 0
  %2880 = vmatmul.mubr.bf16.gmra.mrb[0].mxu0 %v2674
  %v2881 = vpop.f32.mrb[0].mxu0
  %v2882 = vadd.f32 0.0, %v2881
  %v2883 = vpop.f32.mrb[0].mxu0
  %v2884 = vpop.f32.mrb[0].mxu0
  %v2885 = vadd.f32 0.0, %v2884
  %v2886 = vpop.f32.mrb[0].mxu0
  %2887 = vmatprep.mubr.bf16.mxu0 0
  %2888 = vmatmul.mubr.bf16.gmra.mrb[0].mxu0 %v2677
  %v2889 = vpop.f32.mrb[0].mxu0
  %v2890 = vadd.f32 0.0, %v2889
  %v2891 = vpop.f32.mrb[0].mxu0
  %v2892 = vpop.f32.mrb[0].mxu0
  %v2893 = vadd.f32 0.0, %v2892
  %v2894 = vpop.f32.mrb[0].mxu0
  %2895 = vmatprep.mubr.bf16.mxu0 0
  %2896 = vmatmul.mubr.bf16.gmra.mrb[0].mxu0 %v2680
  %v2897 = vpop.f32.mrb[0].mxu0
  %v2898 = vadd.f32 0.0, %v2897
  %v2899 = vpop.f32.mrb[0].mxu0
  %v2900 = vpop.f32.mrb[0].mxu0
  %v2901 = vadd.f32 0.0, %v2900
  %v2902 = vpop.f32.mrb[0].mxu0
  %2903 = vmatprep.mubr.bf16.mxu0 0
  %2904 = vmatmul.mubr.bf16.gmra.mrb[0].mxu0 %v2683
  %v2905 = vpop.f32.mrb[0].mxu0
  %v2906 = vadd.f32 0.0, %v2905
  %v2907 = vpop.f32.mrb[0].mxu0
  %v2908 = vpop.f32.mrb[0].mxu0
  %v2909 = vadd.f32 0.0, %v2908
  %v2910 = vpop.f32.mrb[0].mxu0
  %2911 = vmatprep.mubr.bf16.mxu0 0
  %2912 = vmatmul.mubr.bf16.gmra.mrb[0].mxu0 %v2686
  %v2913 = vpop.f32.mrb[0].mxu0
  %v2914 = vadd.f32 0.0, %v2913
  %v2915 = vpop.f32.mrb[0].mxu0
  %v2916 = vpop.f32.mrb[0].mxu0
  %v2917 = vadd.f32 0.0, %v2916
  %v2918 = vpop.f32.mrb[0].mxu0
  %2919 = vmatprep.mubr.bf16.mxu0 0
  %2920 = vmatmul.mubr.bf16.gmra.mrb[0].mxu0 %v2689
  %v2921 = vpop.f32.mrb[0].mxu0
  %v2922 = vadd.f32 0.0, %v2921
  %v2923 = vpop.f32.mrb[0].mxu0
  %v2924 = vpop.f32.mrb[0].mxu0
  %v2925 = vadd.f32 0.0, %v2924
  %v2926 = vpop.f32.mrb[0].mxu0
  %2927 = vmatprep.mubr.bf16.mxu0 0
  %2928 = vmatmul.mubr.bf16.gmra.mrb[0].mxu0 %v2692
  %v2929 = vpop.f32.mrb[0].mxu0
  %v2930 = vadd.f32 0.0, %v2929
  %v2931 = vpop.f32.mrb[0].mxu0
  %v2932 = vpop.f32.mrb[0].mxu0
  %v2933 = vadd.f32 0.0, %v2932
  %v2934 = vpop.f32.mrb[0].mxu0
  %2935 = vmatprep.mubr.bf16.mxu0 0
  %2936 = vmatmul.mubr.bf16.gmra.mrb[0].mxu0 %v2695
  %v2937 = vpop.f32.mrb[0].mxu0
  %v2938 = vadd.f32 0.0, %v2937
  %v2939 = vpop.f32.mrb[0].mxu0
  %v2940 = vpop.f32.mrb[0].mxu0
  %v2941 = vadd.f32 0.0, %v2940
  %v2942 = vpop.f32.mrb[0].mxu0
  %2943 = vmatprep.mubr.bf16.mxu0 0
  %2944 = vmatmul.mubr.bf16.gmra.mrb[0].mxu0 %v2698
  %v2945 = vpop.f32.mrb[0].mxu0
  %v2946 = vadd.f32 0.0, %v2945
  %v2947 = vpop.f32.mrb[0].mxu0
  %v2948 = vpop.f32.mrb[0].mxu0
  %v2949 = vadd.f32 0.0, %v2948
  %v2950 = vpop.f32.mrb[0].mxu0
  %2951 = vmatprep.mubr.bf16.mxu0 0
  %2952 = vmatmul.mubr.bf16.gmra.mrb[0].mxu0 %v2701
  %v2953 = vpop.f32.mrb[0].mxu0
  %v2954 = vadd.f32 0.0, %v2953
  %v2955 = vpop.f32.mrb[0].mxu0
  %v2956 = vpop.f32.mrb[0].mxu0
  %v2957 = vadd.f32 0.0, %v2956
  %v2958 = vpop.f32.mrb[0].mxu0
  %2959 = vmatprep.mubr.bf16.mxu0 0
  %2960 = vmatmul.mubr.bf16.gmra.mrb[0].mxu0 %v2704
  %v2961 = vpop.f32.mrb[0].mxu0
  %v2962 = vadd.f32 0.0, %v2961
  %v2963 = vpop.f32.mrb[0].mxu0
  %v2964 = vpop.f32.mrb[0].mxu0
  %v2965 = vadd.f32 0.0, %v2964
  %v2966 = vpop.f32.mrb[0].mxu0
  %2967 = vmatprep.mubr.bf16.mxu0 0
  %2968 = vmatmul.mubr.bf16.gmra.mrb[0].mxu0 %v2707
  %v2969 = vpop.f32.mrb[0].mxu0
  %v2970 = vadd.f32 0.0, %v2969
  %v2971 = vpop.f32.mrb[0].mxu0
  %v2972 = vpop.f32.mrb[0].mxu0
  %v2973 = vadd.f32 0.0, %v2972
  %v2974 = vpop.f32.mrb[0].mxu0
  %2975 = vmatprep.mubr.bf16.mxu0 0
  %2976 = vmatmul.mubr.bf16.gmra.mrb[0].mxu0 %v2710
  %v2977 = vpop.f32.mrb[0].mxu0
  %v2978 = vadd.f32 0.0, %v2977
  %v2979 = vpop.f32.mrb[0].mxu0
  %v2980 = vpop.f32.mrb[0].mxu0
  %v2981 = vadd.f32 0.0, %v2980
  %v2982 = vpop.f32.mrb[0].mxu0
  %2983 = vmatprep.mubr.bf16.mxu0 0
  %2984 = vmatmul.mubr.bf16.gmra.mrb[0].mxu0 %v2713
  %v2985 = vpop.f32.mrb[0].mxu0
  %v2986 = vadd.f32 0.0, %v2985
  %v2987 = vpop.f32.mrb[0].mxu0
  %v2988 = vpop.f32.mrb[0].mxu0
  %v2989 = vadd.f32 0.0, %v2988
  %v2990 = vpop.f32.mrb[0].mxu0
  %2991 = vmatprep.mubr.bf16.mxu0 0
  %2992 = vmatmul.mubr.bf16.gmra.mrb[0].mxu0 %v2716
  %v2993 = vpop.f32.mrb[0].mxu0
  %v2994 = vadd.f32 0.0, %v2993
  %v2995 = vpop.f32.mrb[0].mxu0
  %v2996 = vpop.f32.mrb[0].mxu0
  %v2997 = vadd.f32 0.0, %v2996
  %v2998 = vpop.f32.mrb[0].mxu0
  %2999 = vmatprep.mubr.bf16.mxu0 0
  %3000 = vmatmul.mubr.bf16.gmra.mrb[0].mxu0 %v2719
  %v3001 = vpop.f32.mrb[0].mxu0
  %v3002 = vadd.f32 0.0, %v3001
  %v3003 = vpop.f32.mrb[0].mxu0
  %v3004 = vpop.f32.mrb[0].mxu0
  %v3005 = vadd.f32 0.0, %v3004
  %v3006 = vpop.f32.mrb[0].mxu0
  %3007 = vmatprep.mubr.bf16.mxu0 0
  %3008 = vmatmul.mubr.bf16.gmra.mrb[0].mxu0 %v2722
  %v3009 = vpop.f32.mrb[0].mxu0
  %v3010 = vadd.f32 0.0, %v3009
  %v3011 = vpop.f32.mrb[0].mxu0
  %v3012 = vpop.f32.mrb[0].mxu0
  %v3013 = vadd.f32 0.0, %v3012
  %v3014 = vpop.f32.mrb[0].mxu0
  %3015 = vmatprep.mubr.bf16.mxu0 0
  %3016 = vmatmul.mubr.bf16.gmra.mrb[0].mxu0 %v2725
  %v3017 = vpop.f32.mrb[0].mxu0
  %v3018 = vadd.f32 0.0, %v3017
  %v3019 = vpop.f32.mrb[0].mxu0
  %v3020 = vpop.f32.mrb[0].mxu0
  %v3021 = vadd.f32 0.0, %v3020
  %v3022 = vpop.f32.mrb[0].mxu0
  %3023 = vmatprep.mubr.bf16.mxu0 0
  %3024 = vmatmul.mubr.bf16.gmra.mrb[0].mxu0 %v2728
  %v3025 = vpop.f32.mrb[0].mxu0
  %v3026 = vadd.f32 0.0, %v3025
  %v3027 = vpop.f32.mrb[0].mxu0
  %v3028 = vpop.f32.mrb[0].mxu0
  %v3029 = vadd.f32 0.0, %v3028
  %v3030 = vpop.f32.mrb[0].mxu0
  %3031 = vmatprep.mubr.bf16.mxu0 0
  %3032 = vmatmul.mubr.bf16.gmra.mrb[0].mxu0 %v2731
  %v3033 = vpop.f32.mrb[0].mxu0
  %v3034 = vadd.f32 0.0, %v3033
  %v3035 = vpop.f32.mrb[0].mxu0
  %v3036 = vpop.f32.mrb[0].mxu0
  %v3037 = vadd.f32 0.0, %v3036
  %v3038 = vpop.f32.mrb[0].mxu0
  %3039 = vmatprep.mubr.bf16.mxu0 0
  %3040 = vmatmul.mubr.bf16.gmra.mrb[0].mxu0 %v2734
  %v3041 = vpop.f32.mrb[0].mxu0
  %v3042 = vadd.f32 0.0, %v3041
  %v3043 = vpop.f32.mrb[0].mxu0
  %v3044 = vpop.f32.mrb[0].mxu0
  %v3045 = vadd.f32 0.0, %v3044
  %v3046 = vpop.f32.mrb[0].mxu0
  %3047 = vmatprep.mubr.bf16.mxu0 0
  %3048 = vmatmul.mubr.bf16.gmra.mrb[0].mxu0 %v2737
  %v3049 = vpop.f32.mrb[0].mxu0
  %v3050 = vadd.f32 0.0, %v3049
  %v3051 = vpop.f32.mrb[0].mxu0
  %v3052 = vpop.f32.mrb[0].mxu0
  %v3053 = vadd.f32 0.0, %v3052
  %v3054 = vpop.f32.mrb[0].mxu0
  %3055 = vmatprep.mubr.bf16.mxu0 0
  %3056 = vmatmul.mubr.bf16.gmra.mrb[0].mxu0 %v2740
  %v3057 = vpop.f32.mrb[0].mxu0
  %v3058 = vadd.f32 0.0, %v3057
  %v3059 = vpop.f32.mrb[0].mxu0
  %v3060 = vpop.f32.mrb[0].mxu0
  %v3061 = vadd.f32 0.0, %v3060
  %v3062 = vpop.f32.mrb[0].mxu0
  %3063 = vmatprep.mubr.bf16.mxu0 0
  %3064 = vmatmul.mubr.bf16.gmra.mrb[0].mxu0 %v2743
  %v3065 = vpop.f32.mrb[0].mxu0
  %v3066 = vadd.f32 0.0, %v3065
  %v3067 = vpop.f32.mrb[0].mxu0
  %v3068 = vpop.f32.mrb[0].mxu0
  %v3069 = vadd.f32 0.0, %v3068
  %v3070 = vpop.f32.mrb[0].mxu0
  %3071 = vmatprep.mubr.bf16.mxu0 0
  %3072 = vmatmul.mubr.bf16.gmra.mrb[0].mxu0 %v2746
  %v3073 = vpop.f32.mrb[0].mxu0
  %v3074 = vadd.f32 0.0, %v3073
  %v3075 = vpop.f32.mrb[0].mxu0
  %v3076 = vpop.f32.mrb[0].mxu0
  %v3077 = vadd.f32 0.0, %v3076
  %v3078 = vpop.f32.mrb[0].mxu0
  %3079 = vmatprep.mubr.bf16.mxu0 0
  %3080 = vmatmul.mubr.bf16.gmra.mrb[0].mxu0 %v2749
  %v3081 = vpop.f32.mrb[0].mxu0
  %v3082 = vadd.f32 0.0, %v3081
  %v3083 = vpop.f32.mrb[0].mxu0
  %v3084 = vpop.f32.mrb[0].mxu0
  %v3085 = vadd.f32 0.0, %v3084
  %v3086 = vpop.f32.mrb[0].mxu0
  %3087 = vmatprep.mubr.bf16.mxu0 0
  %3088 = vmatmul.mubr.bf16.gmra.mrb[0].mxu0 %v2752
  %v3089 = vpop.f32.mrb[0].mxu0
  %v3090 = vadd.f32 0.0, %v3089
  %v3091 = vpop.f32.mrb[0].mxu0
  %v3092 = vpop.f32.mrb[0].mxu0
  %v3093 = vadd.f32 0.0, %v3092
  %v3094 = vpop.f32.mrb[0].mxu0
  %3095 = vmatprep.mubr.bf16.mxu0 0
  %3096 = vmatmul.mubr.bf16.gmra.mrb[0].mxu0 %v2755
  %v3097 = vpop.f32.mrb[0].mxu0
  %v3098 = vadd.f32 0.0, %v3097
  %v3099 = vpop.f32.mrb[0].mxu0
  %v3100 = vpop.f32.mrb[0].mxu0
  %v3101 = vadd.f32 0.0, %v3100
  %v3102 = vpop.f32.mrb[0].mxu0
  %3103 = vmatprep.mubr.bf16.mxu0 0
  %3104 = vmatmul.mubr.bf16.gmra.mrb[0].mxu0 %v2758
  %v3105 = vpop.f32.mrb[0].mxu0
  %v3106 = vadd.f32 0.0, %v3105
  %v3107 = vpop.f32.mrb[0].mxu0
  %v3108 = vpop.f32.mrb[0].mxu0
  %v3109 = vadd.f32 0.0, %v3108
  %v3110 = vpop.f32.mrb[0].mxu0
  %3111 = vmatprep.mubr.bf16.mxu0 0
  %3112 = vmatmul.mubr.bf16.gmra.mrb[0].mxu0 %v2761
  %v3113 = vpop.f32.mrb[0].mxu0
  %v3114 = vadd.f32 0.0, %v3113
  %v3115 = vpop.f32.mrb[0].mxu0
  %v3116 = vpop.f32.mrb[0].mxu0
  %v3117 = vadd.f32 0.0, %v3116
  %v3118 = vpop.f32.mrb[0].mxu0
  %3119 = vmatprep.mubr.bf16.mxu0 0
  %3120 = vmatmul.mubr.bf16.gmra.mrb[0].mxu0 %v2764
  %v3121 = vpop.f32.mrb[0].mxu0
  %v3122 = vadd.f32 0.0, %v3121
  %v3123 = vpop.f32.mrb[0].mxu0
  %v3124 = vpop.f32.mrb[0].mxu0
  %v3125 = vadd.f32 0.0, %v3124
  %v3126 = vpop.f32.mrb[0].mxu0
  %3127 = vmatprep.mubr.bf16.mxu0 0
  %3128 = vmatmul.mubr.bf16.gmra.mrb[0].mxu0 %v2767
  %v3129 = vpop.f32.mrb[0].mxu0
  %v3130 = vadd.f32 0.0, %v3129
  %v3131 = vpop.f32.mrb[0].mxu0
  %v3132 = vpop.f32.mrb[0].mxu0
  %v3133 = vadd.f32 0.0, %v3132
  %v3134 = vpop.f32.mrb[0].mxu0
  %3135 = vmatprep.mubr.bf16.mxu0 0
  %3136 = vmatmul.mubr.bf16.gmra.mrb[0].mxu0 %v2770
  %v3137 = vpop.f32.mrb[0].mxu0
  %v3138 = vadd.f32 0.0, %v3137
  %v3139 = vpop.f32.mrb[0].mxu0
  %v3140 = vpop.f32.mrb[0].mxu0
  %v3141 = vadd.f32 0.0, %v3140
  %v3142 = vpop.f32.mrb[0].mxu0
  %3143 = vmatprep.mubr.bf16.mxu0 0
  %3144 = vmatmul.mubr.bf16.gmra.mrb[0].mxu0 %v2773
  %v3145 = vpop.f32.mrb[0].mxu0
  %v3146 = vadd.f32 0.0, %v3145
  %v3147 = vpop.f32.mrb[0].mxu0
  %v3148 = vpop.f32.mrb[0].mxu0
  %v3149 = vadd.f32 0.0, %v3148
  %v3150 = vpop.f32.mrb[0].mxu0
  %3151 = vmatprep.mubr.bf16.mxu0 0
  %3152 = vmatmul.mubr.bf16.gmra.mrb[0].mxu0 %v2776
  %v3153 = vpop.f32.mrb[0].mxu0
  %v3154 = vadd.f32 0.0, %v3153
  %v3155 = vpop.f32.mrb[0].mxu0
  %v3156 = vpop.f32.mrb[0].mxu0
  %v3157 = vadd.f32 0.0, %v3156
  %v3158 = vpop.f32.mrb[0].mxu0
  %3159 = vmatprep.mubr.bf16.mxu0 0
  %3160 = vmatmul.mubr.bf16.gmra.mrb[0].mxu0 %v2779
  %v3161 = vpop.f32.mrb[0].mxu0
  %v3162 = vadd.f32 0.0, %v3161
  %v3163 = vpop.f32.mrb[0].mxu0
  %v3164 = vpop.f32.mrb[0].mxu0
  %v3165 = vadd.f32 0.0, %v3164
  %v3166 = vpop.f32.mrb[0].mxu0
  %3167 = vmatprep.mubr.bf16.mxu0 0
  %3168 = vmatmul.mubr.bf16.gmra.mrb[0].mxu0 %v2782
  %v3169 = vpop.f32.mrb[0].mxu0
  %v3170 = vadd.f32 0.0, %v3169
  %v3171 = vpop.f32.mrb[0].mxu0
  %v3172 = vpop.f32.mrb[0].mxu0
  %v3173 = vadd.f32 0.0, %v3172
  %v3174 = vpop.f32.mrb[0].mxu0
  %3175 = vmatprep.mubr.bf16.mxu0 0
  %3176 = vmatmul.mubr.bf16.gmra.mrb[0].mxu0 %v2785
  %v3177 = vpop.f32.mrb[0].mxu0
  %v3178 = vadd.f32 0.0, %v3177
  %v3179 = vpop.f32.mrb[0].mxu0
  %v3180 = vpop.f32.mrb[0].mxu0
  %v3181 = vadd.f32 0.0, %v3180
  %v3182 = vpop.f32.mrb[0].mxu0
  %3183 = vmatprep.mubr.bf16.mxu0 0
  %3184 = vmatmul.mubr.bf16.gmra.mrb[0].mxu0 %v2788
  %v3185 = vpop.f32.mrb[0].mxu0
  %v3186 = vadd.f32 0.0, %v3185
  %v3187 = vpop.f32.mrb[0].mxu0
  %v3188 = vpop.f32.mrb[0].mxu0
  %v3189 = vadd.f32 0.0, %v3188
  %v3190 = vpop.f32.mrb[0].mxu0
  %3191 = vmatprep.mubr.bf16.mxu0 0
  %3192 = vmatmul.mubr.bf16.gmra.mrb[0].mxu0 %v2791
  %v3193 = vpop.f32.mrb[0].mxu0
  %v3194 = vadd.f32 0.0, %v3193
  %v3195 = vpop.f32.mrb[0].mxu0
  %v3196 = vpop.f32.mrb[0].mxu0
  %v3197 = vadd.f32 0.0, %v3196
  %v3198 = vpop.f32.mrb[0].mxu0
  %3199 = vmatprep.mubr.bf16.mxu0 0
  %3200 = vmatmul.mubr.bf16.gmra.mrb[0].mxu0 %v2794
  %v3201 = vpop.f32.mrb[0].mxu0
  %v3202 = vadd.f32 0.0, %v3201
  %v3203 = vpop.f32.mrb[0].mxu0
  %v3204 = vpop.f32.mrb[0].mxu0
  %v3205 = vadd.f32 0.0, %v3204
  %v3206 = vpop.f32.mrb[0].mxu0
  %3207 = vmatprep.mubr.bf16.mxu0 0
  %3208 = vmatmul.mubr.bf16.gmra.mrb[0].mxu0 %v2797
  %v3209 = vpop.f32.mrb[0].mxu0
  %v3210 = vadd.f32 0.0, %v3209
  %v3211 = vpop.f32.mrb[0].mxu0
  %v3212 = vpop.f32.mrb[0].mxu0
  %v3213 = vadd.f32 0.0, %v3212
  %v3214 = vpop.f32.mrb[0].mxu0
  %3215 = vdwg.mxu0
  %v3228 = vunpack.c.l.b16 %v2440
  %v3229 = vunpack.c.l.b16 %v2441
  %v3230 = vunpack.c.l.b16 %v2442
  %v3231 = vunpack.c.l.b16 %v2443
  %v3232 = vunpack.c.l.b16 %v2444
  %v3233 = vunpack.c.l.b16 %v2445
  %v3234 = vunpack.c.l.b16 %v2446
  %v3235 = vunpack.c.l.b16 %v2447
  %v3236 = vunpack.c.l.b16 %v2448
  %v3237 = vunpack.c.l.b16 %v2449
  %v3238 = vunpack.c.l.b16 %v2450
  %v3239 = vunpack.c.l.b16 %v2451
  %v3240 = vpack.c.b16 %v3229, %v3228
  %v3241 = vpack.c.b16 %v3231, %v3230
  %v3242 = vpack.c.b16 %v3233, %v3232
  %v3243 = vpack.c.b16 %v3235, %v3234
  %v3244 = vpack.c.b16 %v3237, %v3236
  %v3245 = vpack.c.b16 %v3239, %v3238
  %v3253 = vsel %vm18, %v2392, 0
  %v3256 = vsel %vm18, %v2393, 0
  %v3259 = vsel %vm18, %v2394, 0
  %v3262 = vsel %vm18, %v2395, 0
  %v3265 = vsel %vm18, %v2396, 0
  %v3268 = vsel %vm18, %v2397, 0
  %v3271 = vsel %vm18, %v2398, 0
  %v3274 = vsel %vm18, %v2399, 0
  %v3277 = vsel %vm18, %v2400, 0
  %v3280 = vsel %vm18, %v2401, 0
  %v3283 = vsel %vm18, %v2402, 0
  %v3286 = vsel %vm18, %v2403, 0
  %v3289 = vsel %vm18, %v2404, 0
  %v3292 = vsel %vm18, %v2405, 0
  %v3295 = vsel %vm18, %v2406, 0
  %v3298 = vsel %vm18, %v2407, 0
  %v3301 = vsel %vm18, %v2408, 0
  %v3304 = vsel %vm18, %v2409, 0
  %v3307 = vsel %vm18, %v2410, 0
  %v3310 = vsel %vm18, %v2411, 0
  %v3313 = vsel %vm18, %v2412, 0
  %v3316 = vsel %vm18, %v2413, 0
  %v3319 = vsel %vm18, %v2414, 0
  %v3322 = vsel %vm18, %v2415, 0
  %v3325 = vsel %vm18, %v2416, 0
  %v3328 = vsel %vm18, %v2417, 0
  %v3331 = vsel %vm18, %v2418, 0
  %v3334 = vsel %vm18, %v2419, 0
  %v3337 = vsel %vm18, %v2420, 0
  %v3340 = vsel %vm18, %v2421, 0
  %v3343 = vsel %vm18, %v2422, 0
  %v3346 = vsel %vm18, %v2423, 0
  %v3349 = vsel %vm18, %v2424, 0
  %v3352 = vsel %vm18, %v2425, 0
  %v3355 = vsel %vm18, %v2426, 0
  %v3358 = vsel %vm18, %v2427, 0
  %v3361 = vsel %vm18, %v2428, 0
  %v3364 = vsel %vm18, %v2429, 0
  %v3367 = vsel %vm18, %v2430, 0
  %v3370 = vsel %vm18, %v2431, 0
  %v3373 = vsel %vm18, %v2432, 0
  %v3376 = vsel %vm18, %v2433, 0
  %v3379 = vsel %vm18, %v2434, 0
  %v3382 = vsel %vm18, %v2435, 0
  %v3385 = vsel %vm18, %v2436, 0
  %v3388 = vsel %vm18, %v2437, 0
  %v3391 = vsel %vm18, %v2438, 0
  %v3394 = vsel %vm18, %v2439, 0
  %3396 = vmatprep.subr.bf16.mxu0 0
  %3397 = vmatpush1.bf16.msra.mxu0 %v3240
  %3398 = vmatprep.subr.bf16.mxu0 0
  %3399 = vmatpush1.bf16.msra.mxu0 %v3241
  %3400 = vmatprep.subr.bf16.mxu0 0
  %3401 = vmatpush1.bf16.msra.mxu0 %v3242
  %3402 = vmatprep.subr.bf16.mxu0 0
  %3403 = vmatpush1.bf16.msra.mxu0 %v3243
  %3404 = vmatprep.subr.bf16.mxu0 0
  %3405 = vmatpush1.bf16.msra.mxu0 %v3244
  %3406 = vmatprep.subr.bf16.mxu0 0
  %3407 = vmatpush1.bf16.msra.mxu0 %v3245
  %3408 = vmatprep.subr.bf16.mxu0 0
  %3409 = vmatpush1.bf16.msra.mxu0 0
  %3410 = vmatprep.subr.bf16.mxu0 0
  %3411 = vmatpush1.bf16.msra.mxu0 0
  %3412 = vmatprep.subr.bf16.mxu0 0
  %3413 = vmatpush1.bf16.msra.mxu0 0
  %3414 = vmatprep.subr.bf16.mxu0 0
  %3415 = vmatpush1.bf16.msra.mxu0 0
  %3416 = vmatprep.subr.bf16.mxu0 0
  %3417 = vmatpush1.bf16.msra.mxu0 0
  %3418 = vmatprep.subr.bf16.mxu0 0
  %3419 = vmatpush1.bf16.msra.mxu0 0
  %3420 = vmatprep.subr.bf16.mxu0 0
  %3421 = vmatpush1.bf16.msra.mxu0 0
  %3422 = vmatprep.subr.bf16.mxu0 0
  %3423 = vmatpush1.bf16.msra.mxu0 0
  %3424 = vmatprep.subr.bf16.mxu0 0
  %3425 = vmatpush1.bf16.msra.mxu0 0
  %3426 = vmatprep.subr.bf16.mxu0 0
  %3427 = vmatpush1.bf16.msra.mxu0 0
  %3428 = vmatprep.mubr.bf16.mxu0 0
  %3429 = vmatmul.mubr.bf16.gmra.mrb[0].mxu0 %v3253
  %v3430 = vpop.f32.mrb[0].mxu0
  %v3431 = vadd.f32 %v2834, %v3430
  %v3432 = vpop.f32.mrb[0].mxu0
  %v3433 = vpop.f32.mrb[0].mxu0
  %v3434 = vadd.f32 %v2837, %v3433
  %v3435 = vpop.f32.mrb[0].mxu0
  %3436 = vmatprep.mubr.bf16.mxu0 0
  %3437 = vmatmul.mubr.bf16.gmra.mrb[0].mxu0 %v3256
  %v3438 = vpop.f32.mrb[0].mxu0
  %v3439 = vadd.f32 %v2842, %v3438
  %v3440 = vpop.f32.mrb[0].mxu0
  %v3441 = vpop.f32.mrb[0].mxu0
  %v3442 = vadd.f32 %v2845, %v3441
  %v3443 = vpop.f32.mrb[0].mxu0
  %3444 = vmatprep.mubr.bf16.mxu0 0
  %3445 = vmatmul.mubr.bf16.gmra.mrb[0].mxu0 %v3259
  %v3446 = vpop.f32.mrb[0].mxu0
  %v3447 = vadd.f32 %v2850, %v3446
  %v3448 = vpop.f32.mrb[0].mxu0
  %v3449 = vpop.f32.mrb[0].mxu0
  %v3450 = vadd.f32 %v2853, %v3449
  %v3451 = vpop.f32.mrb[0].mxu0
  %3452 = vmatprep.mubr.bf16.mxu0 0
  %3453 = vmatmul.mubr.bf16.gmra.mrb[0].mxu0 %v3262
  %v3454 = vpop.f32.mrb[0].mxu0
  %v3455 = vadd.f32 %v2858, %v3454
  %v3456 = vpop.f32.mrb[0].mxu0
  %v3457 = vpop.f32.mrb[0].mxu0
  %v3458 = vadd.f32 %v2861, %v3457
  %v3459 = vpop.f32.mrb[0].mxu0
  %3460 = vmatprep.mubr.bf16.mxu0 0
  %3461 = vmatmul.mubr.bf16.gmra.mrb[0].mxu0 %v3265
  %v3462 = vpop.f32.mrb[0].mxu0
  %v3463 = vadd.f32 %v2866, %v3462
  %v3464 = vpop.f32.mrb[0].mxu0
  %v3465 = vpop.f32.mrb[0].mxu0
  %v3466 = vadd.f32 %v2869, %v3465
  %v3467 = vpop.f32.mrb[0].mxu0
  %3468 = vmatprep.mubr.bf16.mxu0 0
  %3469 = vmatmul.mubr.bf16.gmra.mrb[0].mxu0 %v3268
  %v3470 = vpop.f32.mrb[0].mxu0
  %v3471 = vadd.f32 %v2874, %v3470
  %v3472 = vpop.f32.mrb[0].mxu0
  %v3473 = vpop.f32.mrb[0].mxu0
  %v3474 = vadd.f32 %v2877, %v3473
  %v3475 = vpop.f32.mrb[0].mxu0
  %3476 = vmatprep.mubr.bf16.mxu0 0
  %3477 = vmatmul.mubr.bf16.gmra.mrb[0].mxu0 %v3271
  %v3478 = vpop.f32.mrb[0].mxu0
  %v3479 = vadd.f32 %v2882, %v3478
  %v3480 = vpop.f32.mrb[0].mxu0
  %v3481 = vpop.f32.mrb[0].mxu0
  %v3482 = vadd.f32 %v2885, %v3481
  %v3483 = vpop.f32.mrb[0].mxu0
  %3484 = vmatprep.mubr.bf16.mxu0 0
  %3485 = vmatmul.mubr.bf16.gmra.mrb[0].mxu0 %v3274
  %v3486 = vpop.f32.mrb[0].mxu0
  %v3487 = vadd.f32 %v2890, %v3486
  %v3488 = vpop.f32.mrb[0].mxu0
  %v3489 = vpop.f32.mrb[0].mxu0
  %v3490 = vadd.f32 %v2893, %v3489
  %v3491 = vpop.f32.mrb[0].mxu0
  %3492 = vmatprep.mubr.bf16.mxu0 0
  %3493 = vmatmul.mubr.bf16.gmra.mrb[0].mxu0 %v3277
  %v3494 = vpop.f32.mrb[0].mxu0
  %v3495 = vadd.f32 %v2898, %v3494
  %v3496 = vpop.f32.mrb[0].mxu0
  %v3497 = vpop.f32.mrb[0].mxu0
  %v3498 = vadd.f32 %v2901, %v3497
  %v3499 = vpop.f32.mrb[0].mxu0
  %3500 = vmatprep.mubr.bf16.mxu0 0
  %3501 = vmatmul.mubr.bf16.gmra.mrb[0].mxu0 %v3280
  %v3502 = vpop.f32.mrb[0].mxu0
  %v3503 = vadd.f32 %v2906, %v3502
  %v3504 = vpop.f32.mrb[0].mxu0
  %v3505 = vpop.f32.mrb[0].mxu0
  %v3506 = vadd.f32 %v2909, %v3505
  %v3507 = vpop.f32.mrb[0].mxu0
  %3508 = vmatprep.mubr.bf16.mxu0 0
  %3509 = vmatmul.mubr.bf16.gmra.mrb[0].mxu0 %v3283
  %v3510 = vpop.f32.mrb[0].mxu0
  %v3511 = vadd.f32 %v2914, %v3510
  %v3512 = vpop.f32.mrb[0].mxu0
  %v3513 = vpop.f32.mrb[0].mxu0
  %v3514 = vadd.f32 %v2917, %v3513
  %v3515 = vpop.f32.mrb[0].mxu0
  %3516 = vmatprep.mubr.bf16.mxu0 0
  %3517 = vmatmul.mubr.bf16.gmra.mrb[0].mxu0 %v3286
  %v3518 = vpop.f32.mrb[0].mxu0
  %v3519 = vadd.f32 %v2922, %v3518
  %v3520 = vpop.f32.mrb[0].mxu0
  %v3521 = vpop.f32.mrb[0].mxu0
  %v3522 = vadd.f32 %v2925, %v3521
  %v3523 = vpop.f32.mrb[0].mxu0
  %3524 = vmatprep.mubr.bf16.mxu0 0
  %3525 = vmatmul.mubr.bf16.gmra.mrb[0].mxu0 %v3289
  %v3526 = vpop.f32.mrb[0].mxu0
  %v3527 = vadd.f32 %v2930, %v3526
  %v3528 = vpop.f32.mrb[0].mxu0
  %v3529 = vpop.f32.mrb[0].mxu0
  %v3530 = vadd.f32 %v2933, %v3529
  %v3531 = vpop.f32.mrb[0].mxu0
  %3532 = vmatprep.mubr.bf16.mxu0 0
  %3533 = vmatmul.mubr.bf16.gmra.mrb[0].mxu0 %v3292
  %v3534 = vpop.f32.mrb[0].mxu0
  %v3535 = vadd.f32 %v2938, %v3534
  %v3536 = vpop.f32.mrb[0].mxu0
  %v3537 = vpop.f32.mrb[0].mxu0
  %v3538 = vadd.f32 %v2941, %v3537
  %v3539 = vpop.f32.mrb[0].mxu0
  %3540 = vmatprep.mubr.bf16.mxu0 0
  %3541 = vmatmul.mubr.bf16.gmra.mrb[0].mxu0 %v3295
  %v3542 = vpop.f32.mrb[0].mxu0
  %v3543 = vadd.f32 %v2946, %v3542
  %v3544 = vpop.f32.mrb[0].mxu0
  %v3545 = vpop.f32.mrb[0].mxu0
  %v3546 = vadd.f32 %v2949, %v3545
  %v3547 = vpop.f32.mrb[0].mxu0
  %3548 = vmatprep.mubr.bf16.mxu0 0
  %3549 = vmatmul.mubr.bf16.gmra.mrb[0].mxu0 %v3298
  %v3550 = vpop.f32.mrb[0].mxu0
  %v3551 = vadd.f32 %v2954, %v3550
  %v3552 = vpop.f32.mrb[0].mxu0
  %v3553 = vpop.f32.mrb[0].mxu0
  %v3554 = vadd.f32 %v2957, %v3553
  %v3555 = vpop.f32.mrb[0].mxu0
  %3556 = vmatprep.mubr.bf16.mxu0 0
  %3557 = vmatmul.mubr.bf16.gmra.mrb[0].mxu0 %v3301
  %v3558 = vpop.f32.mrb[0].mxu0
  %v3559 = vadd.f32 %v2962, %v3558
  %v3560 = vpop.f32.mrb[0].mxu0
  %v3561 = vpop.f32.mrb[0].mxu0
  %v3562 = vadd.f32 %v2965, %v3561
  %v3563 = vpop.f32.mrb[0].mxu0
  %3564 = vmatprep.mubr.bf16.mxu0 0
  %3565 = vmatmul.mubr.bf16.gmra.mrb[0].mxu0 %v3304
  %v3566 = vpop.f32.mrb[0].mxu0
  %v3567 = vadd.f32 %v2970, %v3566
  %v3568 = vpop.f32.mrb[0].mxu0
  %v3569 = vpop.f32.mrb[0].mxu0
  %v3570 = vadd.f32 %v2973, %v3569
  %v3571 = vpop.f32.mrb[0].mxu0
  %3572 = vmatprep.mubr.bf16.mxu0 0
  %3573 = vmatmul.mubr.bf16.gmra.mrb[0].mxu0 %v3307
  %v3574 = vpop.f32.mrb[0].mxu0
  %v3575 = vadd.f32 %v2978, %v3574
  %v3576 = vpop.f32.mrb[0].mxu0
  %v3577 = vpop.f32.mrb[0].mxu0
  %v3578 = vadd.f32 %v2981, %v3577
  %v3579 = vpop.f32.mrb[0].mxu0
  %3580 = vmatprep.mubr.bf16.mxu0 0
  %3581 = vmatmul.mubr.bf16.gmra.mrb[0].mxu0 %v3310
  %v3582 = vpop.f32.mrb[0].mxu0
  %v3583 = vadd.f32 %v2986, %v3582
  %v3584 = vpop.f32.mrb[0].mxu0
  %v3585 = vpop.f32.mrb[0].mxu0
  %v3586 = vadd.f32 %v2989, %v3585
  %v3587 = vpop.f32.mrb[0].mxu0
  %3588 = vmatprep.mubr.bf16.mxu0 0
  %3589 = vmatmul.mubr.bf16.gmra.mrb[0].mxu0 %v3313
  %v3590 = vpop.f32.mrb[0].mxu0
  %v3591 = vadd.f32 %v2994, %v3590
  %v3592 = vpop.f32.mrb[0].mxu0
  %v3593 = vpop.f32.mrb[0].mxu0
  %v3594 = vadd.f32 %v2997, %v3593
  %v3595 = vpop.f32.mrb[0].mxu0
  %3596 = vmatprep.mubr.bf16.mxu0 0
  %3597 = vmatmul.mubr.bf16.gmra.mrb[0].mxu0 %v3316
  %v3598 = vpop.f32.mrb[0].mxu0
  %v3599 = vadd.f32 %v3002, %v3598
  %v3600 = vpop.f32.mrb[0].mxu0
  %v3601 = vpop.f32.mrb[0].mxu0
  %v3602 = vadd.f32 %v3005, %v3601
  %v3603 = vpop.f32.mrb[0].mxu0
  %3604 = vmatprep.mubr.bf16.mxu0 0
  %3605 = vmatmul.mubr.bf16.gmra.mrb[0].mxu0 %v3319
  %v3606 = vpop.f32.mrb[0].mxu0
  %v3607 = vadd.f32 %v3010, %v3606
  %v3608 = vpop.f32.mrb[0].mxu0
  %v3609 = vpop.f32.mrb[0].mxu0
  %v3610 = vadd.f32 %v3013, %v3609
  %v3611 = vpop.f32.mrb[0].mxu0
  %3612 = vmatprep.mubr.bf16.mxu0 0
  %3613 = vmatmul.mubr.bf16.gmra.mrb[0].mxu0 %v3322
  %v3614 = vpop.f32.mrb[0].mxu0
  %v3615 = vadd.f32 %v3018, %v3614
  %v3616 = vpop.f32.mrb[0].mxu0
  %v3617 = vpop.f32.mrb[0].mxu0
  %v3618 = vadd.f32 %v3021, %v3617
  %v3619 = vpop.f32.mrb[0].mxu0
  %3620 = vmatprep.mubr.bf16.mxu0 0
  %3621 = vmatmul.mubr.bf16.gmra.mrb[0].mxu0 %v3325
  %v3622 = vpop.f32.mrb[0].mxu0
  %v3623 = vadd.f32 %v3026, %v3622
  %v3624 = vpop.f32.mrb[0].mxu0
  %v3625 = vpop.f32.mrb[0].mxu0
  %v3626 = vadd.f32 %v3029, %v3625
  %v3627 = vpop.f32.mrb[0].mxu0
  %3628 = vmatprep.mubr.bf16.mxu0 0
  %3629 = vmatmul.mubr.bf16.gmra.mrb[0].mxu0 %v3328
  %v3630 = vpop.f32.mrb[0].mxu0
  %v3631 = vadd.f32 %v3034, %v3630
  %v3632 = vpop.f32.mrb[0].mxu0
  %v3633 = vpop.f32.mrb[0].mxu0
  %v3634 = vadd.f32 %v3037, %v3633
  %v3635 = vpop.f32.mrb[0].mxu0
  %3636 = vmatprep.mubr.bf16.mxu0 0
  %3637 = vmatmul.mubr.bf16.gmra.mrb[0].mxu0 %v3331
  %v3638 = vpop.f32.mrb[0].mxu0
  %v3639 = vadd.f32 %v3042, %v3638
  %v3640 = vpop.f32.mrb[0].mxu0
  %v3641 = vpop.f32.mrb[0].mxu0
  %v3642 = vadd.f32 %v3045, %v3641
  %v3643 = vpop.f32.mrb[0].mxu0
  %3644 = vmatprep.mubr.bf16.mxu0 0
  %3645 = vmatmul.mubr.bf16.gmra.mrb[0].mxu0 %v3334
  %v3646 = vpop.f32.mrb[0].mxu0
  %v3647 = vadd.f32 %v3050, %v3646
  %v3648 = vpop.f32.mrb[0].mxu0
  %v3649 = vpop.f32.mrb[0].mxu0
  %v3650 = vadd.f32 %v3053, %v3649
  %v3651 = vpop.f32.mrb[0].mxu0
  %3652 = vmatprep.mubr.bf16.mxu0 0
  %3653 = vmatmul.mubr.bf16.gmra.mrb[0].mxu0 %v3337
  %v3654 = vpop.f32.mrb[0].mxu0
  %v3655 = vadd.f32 %v3058, %v3654
  %v3656 = vpop.f32.mrb[0].mxu0
  %v3657 = vpop.f32.mrb[0].mxu0
  %v3658 = vadd.f32 %v3061, %v3657
  %v3659 = vpop.f32.mrb[0].mxu0
  %3660 = vmatprep.mubr.bf16.mxu0 0
  %3661 = vmatmul.mubr.bf16.gmra.mrb[0].mxu0 %v3340
  %v3662 = vpop.f32.mrb[0].mxu0
  %v3663 = vadd.f32 %v3066, %v3662
  %v3664 = vpop.f32.mrb[0].mxu0
  %v3665 = vpop.f32.mrb[0].mxu0
  %v3666 = vadd.f32 %v3069, %v3665
  %v3667 = vpop.f32.mrb[0].mxu0
  %3668 = vmatprep.mubr.bf16.mxu0 0
  %3669 = vmatmul.mubr.bf16.gmra.mrb[0].mxu0 %v3343
  %v3670 = vpop.f32.mrb[0].mxu0
  %v3671 = vadd.f32 %v3074, %v3670
  %v3672 = vpop.f32.mrb[0].mxu0
  %v3673 = vpop.f32.mrb[0].mxu0
  %v3674 = vadd.f32 %v3077, %v3673
  %v3675 = vpop.f32.mrb[0].mxu0
  %3676 = vmatprep.mubr.bf16.mxu0 0
  %3677 = vmatmul.mubr.bf16.gmra.mrb[0].mxu0 %v3346
  %v3678 = vpop.f32.mrb[0].mxu0
  %v3679 = vadd.f32 %v3082, %v3678
  %v3680 = vpop.f32.mrb[0].mxu0
  %v3681 = vpop.f32.mrb[0].mxu0
  %v3682 = vadd.f32 %v3085, %v3681
  %v3683 = vpop.f32.mrb[0].mxu0
  %3684 = vmatprep.mubr.bf16.mxu0 0
  %3685 = vmatmul.mubr.bf16.gmra.mrb[0].mxu0 %v3349
  %v3686 = vpop.f32.mrb[0].mxu0
  %v3687 = vadd.f32 %v3090, %v3686
  %v3688 = vpop.f32.mrb[0].mxu0
  %v3689 = vpop.f32.mrb[0].mxu0
  %v3690 = vadd.f32 %v3093, %v3689
  %v3691 = vpop.f32.mrb[0].mxu0
  %3692 = vmatprep.mubr.bf16.mxu0 0
  %3693 = vmatmul.mubr.bf16.gmra.mrb[0].mxu0 %v3352
  %v3694 = vpop.f32.mrb[0].mxu0
  %v3695 = vadd.f32 %v3098, %v3694
  %v3696 = vpop.f32.mrb[0].mxu0
  %v3697 = vpop.f32.mrb[0].mxu0
  %v3698 = vadd.f32 %v3101, %v3697
  %v3699 = vpop.f32.mrb[0].mxu0
  %3700 = vmatprep.mubr.bf16.mxu0 0
  %3701 = vmatmul.mubr.bf16.gmra.mrb[0].mxu0 %v3355
  %v3702 = vpop.f32.mrb[0].mxu0
  %v3703 = vadd.f32 %v3106, %v3702
  %v3704 = vpop.f32.mrb[0].mxu0
  %v3705 = vpop.f32.mrb[0].mxu0
  %v3706 = vadd.f32 %v3109, %v3705
  %v3707 = vpop.f32.mrb[0].mxu0
  %3708 = vmatprep.mubr.bf16.mxu0 0
  %3709 = vmatmul.mubr.bf16.gmra.mrb[0].mxu0 %v3358
  %v3710 = vpop.f32.mrb[0].mxu0
  %v3711 = vadd.f32 %v3114, %v3710
  %v3712 = vpop.f32.mrb[0].mxu0
  %v3713 = vpop.f32.mrb[0].mxu0
  %v3714 = vadd.f32 %v3117, %v3713
  %v3715 = vpop.f32.mrb[0].mxu0
  %3716 = vmatprep.mubr.bf16.mxu0 0
  %3717 = vmatmul.mubr.bf16.gmra.mrb[0].mxu0 %v3361
  %v3718 = vpop.f32.mrb[0].mxu0
  %v3719 = vadd.f32 %v3122, %v3718
  %v3720 = vpop.f32.mrb[0].mxu0
  %v3721 = vpop.f32.mrb[0].mxu0
  %v3722 = vadd.f32 %v3125, %v3721
  %v3723 = vpop.f32.mrb[0].mxu0
  %3724 = vmatprep.mubr.bf16.mxu0 0
  %3725 = vmatmul.mubr.bf16.gmra.mrb[0].mxu0 %v3364
  %v3726 = vpop.f32.mrb[0].mxu0
  %v3727 = vadd.f32 %v3130, %v3726
  %v3728 = vpop.f32.mrb[0].mxu0
  %v3729 = vpop.f32.mrb[0].mxu0
  %v3730 = vadd.f32 %v3133, %v3729
  %v3731 = vpop.f32.mrb[0].mxu0
  %3732 = vmatprep.mubr.bf16.mxu0 0
  %3733 = vmatmul.mubr.bf16.gmra.mrb[0].mxu0 %v3367
  %v3734 = vpop.f32.mrb[0].mxu0
  %v3735 = vadd.f32 %v3138, %v3734
  %v3736 = vpop.f32.mrb[0].mxu0
  %v3737 = vpop.f32.mrb[0].mxu0
  %v3738 = vadd.f32 %v3141, %v3737
  %v3739 = vpop.f32.mrb[0].mxu0
  %3740 = vmatprep.mubr.bf16.mxu0 0
  %3741 = vmatmul.mubr.bf16.gmra.mrb[0].mxu0 %v3370
  %v3742 = vpop.f32.mrb[0].mxu0
  %v3743 = vadd.f32 %v3146, %v3742
  %v3744 = vpop.f32.mrb[0].mxu0
  %v3745 = vpop.f32.mrb[0].mxu0
  %v3746 = vadd.f32 %v3149, %v3745
  %v3747 = vpop.f32.mrb[0].mxu0
  %3748 = vmatprep.mubr.bf16.mxu0 0
  %3749 = vmatmul.mubr.bf16.gmra.mrb[0].mxu0 %v3373
  %v3750 = vpop.f32.mrb[0].mxu0
  %v3751 = vadd.f32 %v3154, %v3750
  %v3752 = vpop.f32.mrb[0].mxu0
  %v3753 = vpop.f32.mrb[0].mxu0
  %v3754 = vadd.f32 %v3157, %v3753
  %v3755 = vpop.f32.mrb[0].mxu0
  %3756 = vmatprep.mubr.bf16.mxu0 0
  %3757 = vmatmul.mubr.bf16.gmra.mrb[0].mxu0 %v3376
  %v3758 = vpop.f32.mrb[0].mxu0
  %v3759 = vadd.f32 %v3162, %v3758
  %v3760 = vpop.f32.mrb[0].mxu0
  %v3761 = vpop.f32.mrb[0].mxu0
  %v3762 = vadd.f32 %v3165, %v3761
  %v3763 = vpop.f32.mrb[0].mxu0
  %3764 = vmatprep.mubr.bf16.mxu0 0
  %3765 = vmatmul.mubr.bf16.gmra.mrb[0].mxu0 %v3379
  %v3766 = vpop.f32.mrb[0].mxu0
  %v3767 = vadd.f32 %v3170, %v3766
  %v3768 = vpop.f32.mrb[0].mxu0
  %v3769 = vpop.f32.mrb[0].mxu0
  %v3770 = vadd.f32 %v3173, %v3769
  %v3771 = vpop.f32.mrb[0].mxu0
  %3772 = vmatprep.mubr.bf16.mxu0 0
  %3773 = vmatmul.mubr.bf16.gmra.mrb[0].mxu0 %v3382
  %v3774 = vpop.f32.mrb[0].mxu0
  %v3775 = vadd.f32 %v3178, %v3774
  %v3776 = vpop.f32.mrb[0].mxu0
  %v3777 = vpop.f32.mrb[0].mxu0
  %v3778 = vadd.f32 %v3181, %v3777
  %v3779 = vpop.f32.mrb[0].mxu0
  %3780 = vmatprep.mubr.bf16.mxu0 0
  %3781 = vmatmul.mubr.bf16.gmra.mrb[0].mxu0 %v3385
  %v3782 = vpop.f32.mrb[0].mxu0
  %v3783 = vadd.f32 %v3186, %v3782
  %v3784 = vpop.f32.mrb[0].mxu0
  %v3785 = vpop.f32.mrb[0].mxu0
  %v3786 = vadd.f32 %v3189, %v3785
  %v3787 = vpop.f32.mrb[0].mxu0
  %3788 = vmatprep.mubr.bf16.mxu0 0
  %3789 = vmatmul.mubr.bf16.gmra.mrb[0].mxu0 %v3388
  %v3790 = vpop.f32.mrb[0].mxu0
  %v3791 = vadd.f32 %v3194, %v3790
  %v3792 = vpop.f32.mrb[0].mxu0
  %v3793 = vpop.f32.mrb[0].mxu0
  %v3794 = vadd.f32 %v3197, %v3793
  %v3795 = vpop.f32.mrb[0].mxu0
  %3796 = vmatprep.mubr.bf16.mxu0 0
  %3797 = vmatmul.mubr.bf16.gmra.mrb[0].mxu0 %v3391
  %v3798 = vpop.f32.mrb[0].mxu0
  %v3799 = vadd.f32 %v3202, %v3798
  %v3800 = vpop.f32.mrb[0].mxu0
  %v3801 = vpop.f32.mrb[0].mxu0
  %v3802 = vadd.f32 %v3205, %v3801
  %v3803 = vpop.f32.mrb[0].mxu0
  %3804 = vmatprep.mubr.bf16.mxu0 0
  %3805 = vmatmul.mubr.bf16.gmra.mrb[0].mxu0 %v3394
  %v3806 = vpop.f32.mrb[0].mxu0
  %v3807 = vadd.f32 %v3210, %v3806
  %v3808 = vpop.f32.mrb[0].mxu0
  %v3809 = vpop.f32.mrb[0].mxu0
  %v3810 = vadd.f32 %v3213, %v3809
  %v3811 = vpop.f32.mrb[0].mxu0
  %3812 = vdwg.mxu0
  %v3813 = vld [vmem:[#allocation2 + $0x18] sm:$0xff]
  %v3814 = vld [vmem:[#allocation2 + $0x20] sm:$0xff]
  %v3815 = vld [vmem:[#allocation2 + $0x28] sm:$0xff]
  %v3816 = vld [vmem:[#allocation2 + $0x30] sm:$0xff]
  %v3817 = vld [vmem:[#allocation2 + $0x38] sm:$0xff]
  %v3818 = vld [vmem:[#allocation2 + $0x40] sm:$0xff]
  %v3819 = vld [vmem:[#allocation2 + $0x48] sm:$0xff]
  %v3820 = vld [vmem:[#allocation2 + $0x50] sm:$0xff]
  %v3821 = vld [vmem:[#allocation2 + $0x58] sm:$0xff]
  %v3822 = vld [vmem:[#allocation2 + $0x60] sm:$0xff]
  %v3823 = vld [vmem:[#allocation2 + $0x68] sm:$0xff]
  %v3824 = vld [vmem:[#allocation2 + $0x70] sm:$0xff]
  %v3825 = vld [vmem:[#allocation2 + $0x78] sm:$0xff]
  %v3826 = vld [vmem:[#allocation2 + $0x80] sm:$0xff]
  %v3827 = vld [vmem:[#allocation2 + $0x88] sm:$0xff]
  %v3828 = vld [vmem:[#allocation2 + $0x90] sm:$0xff]
  %v3829 = vld [vmem:[#allocation2 + $0x98] sm:$0xff]
  %v3830 = vld [vmem:[#allocation2 + $0xa0] sm:$0xff]
  %v3831 = vld [vmem:[#allocation2 + $0xa8] sm:$0xff]
  %v3832 = vld [vmem:[#allocation2 + $0xb0] sm:$0xff]
  %v3833 = vld [vmem:[#allocation2 + $0xb8] sm:$0xff]
  %v3834 = vld [vmem:[#allocation2 + $0xc0] sm:$0xff]
  %v3835 = vld [vmem:[#allocation2 + $0xc8] sm:$0xff]
  %v3836 = vld [vmem:[#allocation2 + $0xd0] sm:$0xff]
  %v3837 = vld [vmem:[#allocation2 + $0xf0] sm:$0xff]
  %v3838 = vld [vmem:[#allocation2 + $0xf8] sm:$0xff]
  %v3839 = vld [vmem:[#allocation2 + $0x100] sm:$0xff]
  %v3840 = vld [vmem:[#allocation2 + $0x108] sm:$0xff]
  %v3841 = vld [vmem:[#allocation2 + $0x110] sm:$0xff]
  %v3842 = vld [vmem:[#allocation2 + $0x118] sm:$0xff]
  %v3843 = vld [vmem:[#allocation2 + $0x120] sm:$0xff]
  %v3844 = vld [vmem:[#allocation2 + $0x128] sm:$0xff]
  %v3845 = vld [vmem:[#allocation2 + $0x130] sm:$0xff]
  %v3846 = vld [vmem:[#allocation2 + $0x138] sm:$0xff]
  %v3847 = vld [vmem:[#allocation2 + $0x140] sm:$0xff]
  %v3848 = vld [vmem:[#allocation2 + $0x148] sm:$0xff]
  %v3849 = vld [vmem:[#allocation2 + $0x150] sm:$0xff]
  %v3850 = vld [vmem:[#allocation2 + $0x158] sm:$0xff]
  %v3851 = vld [vmem:[#allocation2 + $0x160] sm:$0xff]
  %v3852 = vld [vmem:[#allocation2 + $0x168] sm:$0xff]
  %v3853 = vld [vmem:[#allocation2 + $0x170] sm:$0xff]
  %v3854 = vld [vmem:[#allocation2 + $0x178] sm:$0xff]
  %v3855 = vld [vmem:[#allocation2 + $0x180] sm:$0xff]
  %v3856 = vld [vmem:[#allocation2 + $0x188] sm:$0xff]
  %v3857 = vld [vmem:[#allocation2 + $0x190] sm:$0xff]
  %v3858 = vld [vmem:[#allocation2 + $0x198] sm:$0xff]
  %v3859 = vld [vmem:[#allocation2 + $0x1a0] sm:$0xff]
  %v3860 = vld [vmem:[#allocation2 + $0x1a8] sm:$0xff]
  %s3861 = scalar_lea.vmem %s2, 96
  %v3862 = vld [vmem:[%s3861] sm:$0xf]
  %v3863 = vld [vmem:[%s3861 + $0x4] sm:$0xf]
  %v3864 = vld [vmem:[%s3861 + $0x8] sm:$0xf]
  %v3865 = vld [vmem:[%s3861 + $0xc] sm:$0xf]
  %v3866 = vld [vmem:[%s3861 + $0x10] sm:$0xf]
  %v3867 = vld [vmem:[%s3861 + $0x14] sm:$0xf]
  %v3868 = vld [vmem:[%s3861 + $0x18] sm:$0xf]
  %v3869 = vld [vmem:[%s3861 + $0x1c] sm:$0xf]
  %v3870 = vld [vmem:[%s3861 + $0x20] sm:$0xf]
  %v3871 = vld [vmem:[%s3861 + $0x24] sm:$0xf]
  %v3872 = vld [vmem:[%s3861 + $0x28] sm:$0xf]
  %v3873 = vld [vmem:[%s3861 + $0x2c] sm:$0xf]
  %v3886 = vunpack.c.l.b16 %v3862
  %v3887 = vunpack.c.l.b16 %v3863
  %v3888 = vunpack.c.l.b16 %v3864
  %v3889 = vunpack.c.l.b16 %v3865
  %v3890 = vunpack.c.l.b16 %v3866
  %v3891 = vunpack.c.l.b16 %v3867
  %v3892 = vunpack.c.l.b16 %v3868
  %v3893 = vunpack.c.l.b16 %v3869
  %v3894 = vunpack.c.l.b16 %v3870
  %v3895 = vunpack.c.l.b16 %v3871
  %v3896 = vunpack.c.l.b16 %v3872
  %v3897 = vunpack.c.l.b16 %v3873
  %v3898 = vpack.c.b16 %v3887, %v3886
  %v3899 = vpack.c.b16 %v3889, %v3888
  %v3900 = vpack.c.b16 %v3891, %v3890
  %v3901 = vpack.c.b16 %v3893, %v3892
  %v3902 = vpack.c.b16 %v3895, %v3894
  %v3903 = vpack.c.b16 %v3897, %v3896
  %v3911 = vsel %vm18, %v3813, 0
  %v3914 = vsel %vm18, %v3814, 0
  %v3917 = vsel %vm18, %v3815, 0
  %v3920 = vsel %vm18, %v3816, 0
  %v3923 = vsel %vm18, %v3817, 0
  %v3926 = vsel %vm18, %v3818, 0
  %v3929 = vsel %vm18, %v3819, 0
  %v3932 = vsel %vm18, %v3820, 0
  %v3935 = vsel %vm18, %v3821, 0
  %v3938 = vsel %vm18, %v3822, 0
  %v3941 = vsel %vm18, %v3823, 0
  %v3944 = vsel %vm18, %v3824, 0
  %v3947 = vsel %vm18, %v3825, 0
  %v3950 = vsel %vm18, %v3826, 0
  %v3953 = vsel %vm18, %v3827, 0
  %v3956 = vsel %vm18, %v3828, 0
  %v3959 = vsel %vm18, %v3829, 0
  %v3962 = vsel %vm18, %v3830, 0
  %v3965 = vsel %vm18, %v3831, 0
  %v3968 = vsel %vm18, %v3832, 0
  %v3971 = vsel %vm18, %v3833, 0
  %v3974 = vsel %vm18, %v3834, 0
  %v3977 = vsel %vm18, %v3835, 0
  %v3980 = vsel %vm18, %v3836, 0
  %v3983 = vsel %vm18, %v3837, 0
  %v3986 = vsel %vm18, %v3838, 0
  %v3989 = vsel %vm18, %v3839, 0
  %v3992 = vsel %vm18, %v3840, 0
  %v3995 = vsel %vm18, %v3841, 0
  %v3998 = vsel %vm18, %v3842, 0
  %v4001 = vsel %vm18, %v3843, 0
  %v4004 = vsel %vm18, %v3844, 0
  %v4007 = vsel %vm18, %v3845, 0
  %v4010 = vsel %vm18, %v3846, 0
  %v4013 = vsel %vm18, %v3847, 0
  %v4016 = vsel %vm18, %v3848, 0
  %v4019 = vsel %vm18, %v3849, 0
  %v4022 = vsel %vm18, %v3850, 0
  %v4025 = vsel %vm18, %v3851, 0
  %v4028 = vsel %vm18, %v3852, 0
  %v4031 = vsel %vm18, %v3853, 0
  %v4034 = vsel %vm18, %v3854, 0
  %v4037 = vsel %vm18, %v3855, 0
  %v4040 = vsel %vm18, %v3856, 0
  %v4043 = vsel %vm18, %v3857, 0
  %v4046 = vsel %vm18, %v3858, 0
  %v4049 = vsel %vm18, %v3859, 0
  %v4052 = vsel %vm18, %v3860, 0
  %4054 = vmatprep.subr.bf16.mxu0 0
  %4055 = vmatpush1.bf16.msra.mxu0 %v3898
  %4056 = vmatprep.subr.bf16.mxu0 0
  %4057 = vmatpush1.bf16.msra.mxu0 %v3899
  %4058 = vmatprep.subr.bf16.mxu0 0
  %4059 = vmatpush1.bf16.msra.mxu0 %v3900
  %4060 = vmatprep.subr.bf16.mxu0 0
  %4061 = vmatpush1.bf16.msra.mxu0 %v3901
  %4062 = vmatprep.subr.bf16.mxu0 0
  %4063 = vmatpush1.bf16.msra.mxu0 %v3902
  %4064 = vmatprep.subr.bf16.mxu0 0
  %4065 = vmatpush1.bf16.msra.mxu0 %v3903
  %4066 = vmatprep.subr.bf16.mxu0 0
  %4067 = vmatpush1.bf16.msra.mxu0 0
  %4068 = vmatprep.subr.bf16.mxu0 0
  %4069 = vmatpush1.bf16.msra.mxu0 0
  %4070 = vmatprep.subr.bf16.mxu0 0
  %4071 = vmatpush1.bf16.msra.mxu0 0
  %4072 = vmatprep.subr.bf16.mxu0 0
  %4073 = vmatpush1.bf16.msra.mxu0 0
  %4074 = vmatprep.subr.bf16.mxu0 0
  %4075 = vmatpush1.bf16.msra.mxu0 0
  %4076 = vmatprep.subr.bf16.mxu0 0
  %4077 = vmatpush1.bf16.msra.mxu0 0
  %4078 = vmatprep.subr.bf16.mxu0 0
  %4079 = vmatpush1.bf16.msra.mxu0 0
  %4080 = vmatprep.subr.bf16.mxu0 0
  %4081 = vmatpush1.bf16.msra.mxu0 0
  %4082 = vmatprep.subr.bf16.mxu0 0
  %4083 = vmatpush1.bf16.msra.mxu0 0
  %4084 = vmatprep.subr.bf16.mxu0 0
  %4085 = vmatpush1.bf16.msra.mxu0 0
  %4086 = vmatprep.mubr.bf16.mxu0 0
  %4087 = vmatmul.mubr.bf16.gmra.mrb[0].mxu0 %v3911
  %v4088 = vpop.f32.mrb[0].mxu0
  %v4089 = vadd.f32 0.0, %v4088
  %v4090 = vpop.f32.mrb[0].mxu0
  %v4091 = vpop.f32.mrb[0].mxu0
  %v4092 = vadd.f32 0.0, %v4091
  %v4093 = vpop.f32.mrb[0].mxu0
  %4094 = vmatprep.mubr.bf16.mxu0 0
  %4095 = vmatmul.mubr.bf16.gmra.mrb[0].mxu0 %v3914
  %v4096 = vpop.f32.mrb[0].mxu0
  %v4097 = vadd.f32 0.0, %v4096
  %v4098 = vpop.f32.mrb[0].mxu0
  %v4099 = vpop.f32.mrb[0].mxu0
  %v4100 = vadd.f32 0.0, %v4099
  %v4101 = vpop.f32.mrb[0].mxu0
  %4102 = vmatprep.mubr.bf16.mxu0 0
  %4103 = vmatmul.mubr.bf16.gmra.mrb[0].mxu0 %v3917
  %v4104 = vpop.f32.mrb[0].mxu0
  %v4105 = vadd.f32 0.0, %v4104
  %v4106 = vpop.f32.mrb[0].mxu0
  %v4107 = vpop.f32.mrb[0].mxu0
  %v4108 = vadd.f32 0.0, %v4107
  %v4109 = vpop.f32.mrb[0].mxu0
  %4110 = vmatprep.mubr.bf16.mxu0 0
  %4111 = vmatmul.mubr.bf16.gmra.mrb[0].mxu0 %v3920
  %v4112 = vpop.f32.mrb[0].mxu0
  %v4113 = vadd.f32 0.0, %v4112
  %v4114 = vpop.f32.mrb[0].mxu0
  %v4115 = vpop.f32.mrb[0].mxu0
  %v4116 = vadd.f32 0.0, %v4115
  %v4117 = vpop.f32.mrb[0].mxu0
  %4118 = vmatprep.mubr.bf16.mxu0 0
  %4119 = vmatmul.mubr.bf16.gmra.mrb[0].mxu0 %v3923
  %v4120 = vpop.f32.mrb[0].mxu0
  %v4121 = vadd.f32 0.0, %v4120
  %v4122 = vpop.f32.mrb[0].mxu0
  %v4123 = vpop.f32.mrb[0].mxu0
  %v4124 = vadd.f32 0.0, %v4123
  %v4125 = vpop.f32.mrb[0].mxu0
  %4126 = vmatprep.mubr.bf16.mxu0 0
  %4127 = vmatmul.mubr.bf16.gmra.mrb[0].mxu0 %v3926
  %v4128 = vpop.f32.mrb[0].mxu0
  %v4129 = vadd.f32 0.0, %v4128
  %v4130 = vpop.f32.mrb[0].mxu0
  %v4131 = vpop.f32.mrb[0].mxu0
  %v4132 = vadd.f32 0.0, %v4131
  %v4133 = vpop.f32.mrb[0].mxu0
  %4134 = vmatprep.mubr.bf16.mxu0 0
  %4135 = vmatmul.mubr.bf16.gmra.mrb[0].mxu0 %v3929
  %v4136 = vpop.f32.mrb[0].mxu0
  %v4137 = vadd.f32 0.0, %v4136
  %v4138 = vpop.f32.mrb[0].mxu0
  %v4139 = vpop.f32.mrb[0].mxu0
  %v4140 = vadd.f32 0.0, %v4139
  %v4141 = vpop.f32.mrb[0].mxu0
  %4142 = vmatprep.mubr.bf16.mxu0 0
  %4143 = vmatmul.mubr.bf16.gmra.mrb[0].mxu0 %v3932
  %v4144 = vpop.f32.mrb[0].mxu0
  %v4145 = vadd.f32 0.0, %v4144
  %v4146 = vpop.f32.mrb[0].mxu0
  %v4147 = vpop.f32.mrb[0].mxu0
  %v4148 = vadd.f32 0.0, %v4147
  %v4149 = vpop.f32.mrb[0].mxu0
  %4150 = vmatprep.mubr.bf16.mxu0 0
  %4151 = vmatmul.mubr.bf16.gmra.mrb[0].mxu0 %v3935
  %v4152 = vpop.f32.mrb[0].mxu0
  %v4153 = vadd.f32 0.0, %v4152
  %v4154 = vpop.f32.mrb[0].mxu0
  %v4155 = vpop.f32.mrb[0].mxu0
  %v4156 = vadd.f32 0.0, %v4155
  %v4157 = vpop.f32.mrb[0].mxu0
  %4158 = vmatprep.mubr.bf16.mxu0 0
  %4159 = vmatmul.mubr.bf16.gmra.mrb[0].mxu0 %v3938
  %v4160 = vpop.f32.mrb[0].mxu0
  %v4161 = vadd.f32 0.0, %v4160
  %v4162 = vpop.f32.mrb[0].mxu0
  %v4163 = vpop.f32.mrb[0].mxu0
  %v4164 = vadd.f32 0.0, %v4163
  %v4165 = vpop.f32.mrb[0].mxu0
  %4166 = vmatprep.mubr.bf16.mxu0 0
  %4167 = vmatmul.mubr.bf16.gmra.mrb[0].mxu0 %v3941
  %v4168 = vpop.f32.mrb[0].mxu0
  %v4169 = vadd.f32 0.0, %v4168
  %v4170 = vpop.f32.mrb[0].mxu0
  %v4171 = vpop.f32.mrb[0].mxu0
  %v4172 = vadd.f32 0.0, %v4171
  %v4173 = vpop.f32.mrb[0].mxu0
  %4174 = vmatprep.mubr.bf16.mxu0 0
  %4175 = vmatmul.mubr.bf16.gmra.mrb[0].mxu0 %v3944
  %v4176 = vpop.f32.mrb[0].mxu0
  %v4177 = vadd.f32 0.0, %v4176
  %v4178 = vpop.f32.mrb[0].mxu0
  %v4179 = vpop.f32.mrb[0].mxu0
  %v4180 = vadd.f32 0.0, %v4179
  %v4181 = vpop.f32.mrb[0].mxu0
  %4182 = vmatprep.mubr.bf16.mxu0 0
  %4183 = vmatmul.mubr.bf16.gmra.mrb[0].mxu0 %v3947
  %v4184 = vpop.f32.mrb[0].mxu0
  %v4185 = vadd.f32 0.0, %v4184
  %v4186 = vpop.f32.mrb[0].mxu0
  %v4187 = vpop.f32.mrb[0].mxu0
  %v4188 = vadd.f32 0.0, %v4187
  %v4189 = vpop.f32.mrb[0].mxu0
  %4190 = vmatprep.mubr.bf16.mxu0 0
  %4191 = vmatmul.mubr.bf16.gmra.mrb[0].mxu0 %v3950
  %v4192 = vpop.f32.mrb[0].mxu0
  %v4193 = vadd.f32 0.0, %v4192
  %v4194 = vpop.f32.mrb[0].mxu0
  %v4195 = vpop.f32.mrb[0].mxu0
  %v4196 = vadd.f32 0.0, %v4195
  %v4197 = vpop.f32.mrb[0].mxu0
  %4198 = vmatprep.mubr.bf16.mxu0 0
  %4199 = vmatmul.mubr.bf16.gmra.mrb[0].mxu0 %v3953
  %v4200 = vpop.f32.mrb[0].mxu0
  %v4201 = vadd.f32 0.0, %v4200
  %v4202 = vpop.f32.mrb[0].mxu0
  %v4203 = vpop.f32.mrb[0].mxu0
  %v4204 = vadd.f32 0.0, %v4203
  %v4205 = vpop.f32.mrb[0].mxu0
  %4206 = vmatprep.mubr.bf16.mxu0 0
  %4207 = vmatmul.mubr.bf16.gmra.mrb[0].mxu0 %v3956
  %v4208 = vpop.f32.mrb[0].mxu0
  %v4209 = vadd.f32 0.0, %v4208
  %v4210 = vpop.f32.mrb[0].mxu0
  %v4211 = vpop.f32.mrb[0].mxu0
  %v4212 = vadd.f32 0.0, %v4211
  %v4213 = vpop.f32.mrb[0].mxu0
  %4214 = vmatprep.mubr.bf16.mxu0 0
  %4215 = vmatmul.mubr.bf16.gmra.mrb[0].mxu0 %v3959
  %v4216 = vpop.f32.mrb[0].mxu0
  %v4217 = vadd.f32 0.0, %v4216
  %v4218 = vpop.f32.mrb[0].mxu0
  %v4219 = vpop.f32.mrb[0].mxu0
  %v4220 = vadd.f32 0.0, %v4219
  %v4221 = vpop.f32.mrb[0].mxu0
  %4222 = vmatprep.mubr.bf16.mxu0 0
  %4223 = vmatmul.mubr.bf16.gmra.mrb[0].mxu0 %v3962
  %v4224 = vpop.f32.mrb[0].mxu0
  %v4225 = vadd.f32 0.0, %v4224
  %v4226 = vpop.f32.mrb[0].mxu0
  %v4227 = vpop.f32.mrb[0].mxu0
  %v4228 = vadd.f32 0.0, %v4227
  %v4229 = vpop.f32.mrb[0].mxu0
  %4230 = vmatprep.mubr.bf16.mxu0 0
  %4231 = vmatmul.mubr.bf16.gmra.mrb[0].mxu0 %v3965
  %v4232 = vpop.f32.mrb[0].mxu0
  %v4233 = vadd.f32 0.0, %v4232
  %v4234 = vpop.f32.mrb[0].mxu0
  %v4235 = vpop.f32.mrb[0].mxu0
  %v4236 = vadd.f32 0.0, %v4235
  %v4237 = vpop.f32.mrb[0].mxu0
  %4238 = vmatprep.mubr.bf16.mxu0 0
  %4239 = vmatmul.mubr.bf16.gmra.mrb[0].mxu0 %v3968
  %v4240 = vpop.f32.mrb[0].mxu0
  %v4241 = vadd.f32 0.0, %v4240
  %v4242 = vpop.f32.mrb[0].mxu0
  %v4243 = vpop.f32.mrb[0].mxu0
  %v4244 = vadd.f32 0.0, %v4243
  %v4245 = vpop.f32.mrb[0].mxu0
  %4246 = vmatprep.mubr.bf16.mxu0 0
  %4247 = vmatmul.mubr.bf16.gmra.mrb[0].mxu0 %v3971
  %v4248 = vpop.f32.mrb[0].mxu0
  %v4249 = vadd.f32 0.0, %v4248
  %v4250 = vpop.f32.mrb[0].mxu0
  %v4251 = vpop.f32.mrb[0].mxu0
  %v4252 = vadd.f32 0.0, %v4251
  %v4253 = vpop.f32.mrb[0].mxu0
  %4254 = vmatprep.mubr.bf16.mxu0 0
  %4255 = vmatmul.mubr.bf16.gmra.mrb[0].mxu0 %v3974
  %v4256 = vpop.f32.mrb[0].mxu0
  %v4257 = vadd.f32 0.0, %v4256
  %v4258 = vpop.f32.mrb[0].mxu0
  %v4259 = vpop.f32.mrb[0].mxu0
  %v4260 = vadd.f32 0.0, %v4259
  %v4261 = vpop.f32.mrb[0].mxu0
  %4262 = vmatprep.mubr.bf16.mxu0 0
  %4263 = vmatmul.mubr.bf16.gmra.mrb[0].mxu0 %v3977
  %v4264 = vpop.f32.mrb[0].mxu0
  %v4265 = vadd.f32 0.0, %v4264
  %v4266 = vpop.f32.mrb[0].mxu0
  %v4267 = vpop.f32.mrb[0].mxu0
  %v4268 = vadd.f32 0.0, %v4267
  %v4269 = vpop.f32.mrb[0].mxu0
  %4270 = vmatprep.mubr.bf16.mxu0 0
  %4271 = vmatmul.mubr.bf16.gmra.mrb[0].mxu0 %v3980
  %v4272 = vpop.f32.mrb[0].mxu0
  %v4273 = vadd.f32 0.0, %v4272
  %v4274 = vpop.f32.mrb[0].mxu0
  %v4275 = vpop.f32.mrb[0].mxu0
  %v4276 = vadd.f32 0.0, %v4275
  %v4277 = vpop.f32.mrb[0].mxu0
  %4278 = vmatprep.mubr.bf16.mxu0 0
  %4279 = vmatmul.mubr.bf16.gmra.mrb[0].mxu0 %v3983
  %v4280 = vpop.f32.mrb[0].mxu0
  %v4281 = vadd.f32 0.0, %v4280
  %v4282 = vpop.f32.mrb[0].mxu0
  %v4283 = vpop.f32.mrb[0].mxu0
  %v4284 = vadd.f32 0.0, %v4283
  %v4285 = vpop.f32.mrb[0].mxu0
  %4286 = vmatprep.mubr.bf16.mxu0 0
  %4287 = vmatmul.mubr.bf16.gmra.mrb[0].mxu0 %v3986
  %v4288 = vpop.f32.mrb[0].mxu0
  %v4289 = vadd.f32 0.0, %v4288
  %v4290 = vpop.f32.mrb[0].mxu0
  %v4291 = vpop.f32.mrb[0].mxu0
  %v4292 = vadd.f32 0.0, %v4291
  %v4293 = vpop.f32.mrb[0].mxu0
  %4294 = vmatprep.mubr.bf16.mxu0 0
  %4295 = vmatmul.mubr.bf16.gmra.mrb[0].mxu0 %v3989
  %v4296 = vpop.f32.mrb[0].mxu0
  %v4297 = vadd.f32 0.0, %v4296
  %v4298 = vpop.f32.mrb[0].mxu0
  %v4299 = vpop.f32.mrb[0].mxu0
  %v4300 = vadd.f32 0.0, %v4299
  %v4301 = vpop.f32.mrb[0].mxu0
  %4302 = vmatprep.mubr.bf16.mxu0 0
  %4303 = vmatmul.mubr.bf16.gmra.mrb[0].mxu0 %v3992
  %v4304 = vpop.f32.mrb[0].mxu0
  %v4305 = vadd.f32 0.0, %v4304
  %v4306 = vpop.f32.mrb[0].mxu0
  %v4307 = vpop.f32.mrb[0].mxu0
  %v4308 = vadd.f32 0.0, %v4307
  %v4309 = vpop.f32.mrb[0].mxu0
  %4310 = vmatprep.mubr.bf16.mxu0 0
  %4311 = vmatmul.mubr.bf16.gmra.mrb[0].mxu0 %v3995
  %v4312 = vpop.f32.mrb[0].mxu0
  %v4313 = vadd.f32 0.0, %v4312
  %v4314 = vpop.f32.mrb[0].mxu0
  %v4315 = vpop.f32.mrb[0].mxu0
  %v4316 = vadd.f32 0.0, %v4315
  %v4317 = vpop.f32.mrb[0].mxu0
  %4318 = vmatprep.mubr.bf16.mxu0 0
  %4319 = vmatmul.mubr.bf16.gmra.mrb[0].mxu0 %v3998
  %v4320 = vpop.f32.mrb[0].mxu0
  %v4321 = vadd.f32 0.0, %v4320
  %v4322 = vpop.f32.mrb[0].mxu0
  %v4323 = vpop.f32.mrb[0].mxu0
  %v4324 = vadd.f32 0.0, %v4323
  %v4325 = vpop.f32.mrb[0].mxu0
  %4326 = vmatprep.mubr.bf16.mxu0 0
  %4327 = vmatmul.mubr.bf16.gmra.mrb[0].mxu0 %v4001
  %v4328 = vpop.f32.mrb[0].mxu0
  %v4329 = vadd.f32 0.0, %v4328
  %v4330 = vpop.f32.mrb[0].mxu0
  %v4331 = vpop.f32.mrb[0].mxu0
  %v4332 = vadd.f32 0.0, %v4331
  %v4333 = vpop.f32.mrb[0].mxu0
  %4334 = vmatprep.mubr.bf16.mxu0 0
  %4335 = vmatmul.mubr.bf16.gmra.mrb[0].mxu0 %v4004
  %v4336 = vpop.f32.mrb[0].mxu0
  %v4337 = vadd.f32 0.0, %v4336
  %v4338 = vpop.f32.mrb[0].mxu0
  %v4339 = vpop.f32.mrb[0].mxu0
  %v4340 = vadd.f32 0.0, %v4339
  %v4341 = vpop.f32.mrb[0].mxu0
  %4342 = vmatprep.mubr.bf16.mxu0 0
  %4343 = vmatmul.mubr.bf16.gmra.mrb[0].mxu0 %v4007
  %v4344 = vpop.f32.mrb[0].mxu0
  %v4345 = vadd.f32 0.0, %v4344
  %v4346 = vpop.f32.mrb[0].mxu0
  %v4347 = vpop.f32.mrb[0].mxu0
  %v4348 = vadd.f32 0.0, %v4347
  %v4349 = vpop.f32.mrb[0].mxu0
  %4350 = vmatprep.mubr.bf16.mxu0 0
  %4351 = vmatmul.mubr.bf16.gmra.mrb[0].mxu0 %v4010
  %v4352 = vpop.f32.mrb[0].mxu0
  %v4353 = vadd.f32 0.0, %v4352
  %v4354 = vpop.f32.mrb[0].mxu0
  %v4355 = vpop.f32.mrb[0].mxu0
  %v4356 = vadd.f32 0.0, %v4355
  %v4357 = vpop.f32.mrb[0].mxu0
  %4358 = vmatprep.mubr.bf16.mxu0 0
  %4359 = vmatmul.mubr.bf16.gmra.mrb[0].mxu0 %v4013
  %v4360 = vpop.f32.mrb[0].mxu0
  %v4361 = vadd.f32 0.0, %v4360
  %v4362 = vpop.f32.mrb[0].mxu0
  %v4363 = vpop.f32.mrb[0].mxu0
  %v4364 = vadd.f32 0.0, %v4363
  %v4365 = vpop.f32.mrb[0].mxu0
  %4366 = vmatprep.mubr.bf16.mxu0 0
  %4367 = vmatmul.mubr.bf16.gmra.mrb[0].mxu0 %v4016
  %v4368 = vpop.f32.mrb[0].mxu0
  %v4369 = vadd.f32 0.0, %v4368
  %v4370 = vpop.f32.mrb[0].mxu0
  %v4371 = vpop.f32.mrb[0].mxu0
  %v4372 = vadd.f32 0.0, %v4371
  %v4373 = vpop.f32.mrb[0].mxu0
  %4374 = vmatprep.mubr.bf16.mxu0 0
  %4375 = vmatmul.mubr.bf16.gmra.mrb[0].mxu0 %v4019
  %v4376 = vpop.f32.mrb[0].mxu0
  %v4377 = vadd.f32 0.0, %v4376
  %v4378 = vpop.f32.mrb[0].mxu0
  %v4379 = vpop.f32.mrb[0].mxu0
  %v4380 = vadd.f32 0.0, %v4379
  %v4381 = vpop.f32.mrb[0].mxu0
  %4382 = vmatprep.mubr.bf16.mxu0 0
  %4383 = vmatmul.mubr.bf16.gmra.mrb[0].mxu0 %v4022
  %v4384 = vpop.f32.mrb[0].mxu0
  %v4385 = vadd.f32 0.0, %v4384
  %v4386 = vpop.f32.mrb[0].mxu0
  %v4387 = vpop.f32.mrb[0].mxu0
  %v4388 = vadd.f32 0.0, %v4387
  %v4389 = vpop.f32.mrb[0].mxu0
  %4390 = vmatprep.mubr.bf16.mxu0 0
  %4391 = vmatmul.mubr.bf16.gmra.mrb[0].mxu0 %v4025
  %v4392 = vpop.f32.mrb[0].mxu0
  %v4393 = vadd.f32 0.0, %v4392
  %v4394 = vpop.f32.mrb[0].mxu0
  %v4395 = vpop.f32.mrb[0].mxu0
  %v4396 = vadd.f32 0.0, %v4395
  %v4397 = vpop.f32.mrb[0].mxu0
  %4398 = vmatprep.mubr.bf16.mxu0 0
  %4399 = vmatmul.mubr.bf16.gmra.mrb[0].mxu0 %v4028
  %v4400 = vpop.f32.mrb[0].mxu0
  %v4401 = vadd.f32 0.0, %v4400
  %v4402 = vpop.f32.mrb[0].mxu0
  %v4403 = vpop.f32.mrb[0].mxu0
  %v4404 = vadd.f32 0.0, %v4403
  %v4405 = vpop.f32.mrb[0].mxu0
  %4406 = vmatprep.mubr.bf16.mxu0 0
  %4407 = vmatmul.mubr.bf16.gmra.mrb[0].mxu0 %v4031
  %v4408 = vpop.f32.mrb[0].mxu0
  %v4409 = vadd.f32 0.0, %v4408
  %v4410 = vpop.f32.mrb[0].mxu0
  %v4411 = vpop.f32.mrb[0].mxu0
  %v4412 = vadd.f32 0.0, %v4411
  %v4413 = vpop.f32.mrb[0].mxu0
  %4414 = vmatprep.mubr.bf16.mxu0 0
  %4415 = vmatmul.mubr.bf16.gmra.mrb[0].mxu0 %v4034
  %v4416 = vpop.f32.mrb[0].mxu0
  %v4417 = vadd.f32 0.0, %v4416
  %v4418 = vpop.f32.mrb[0].mxu0
  %v4419 = vpop.f32.mrb[0].mxu0
  %v4420 = vadd.f32 0.0, %v4419
  %v4421 = vpop.f32.mrb[0].mxu0
  %4422 = vmatprep.mubr.bf16.mxu0 0
  %4423 = vmatmul.mubr.bf16.gmra.mrb[0].mxu0 %v4037
  %v4424 = vpop.f32.mrb[0].mxu0
  %v4425 = vadd.f32 0.0, %v4424
  %v4426 = vpop.f32.mrb[0].mxu0
  %v4427 = vpop.f32.mrb[0].mxu0
  %v4428 = vadd.f32 0.0, %v4427
  %v4429 = vpop.f32.mrb[0].mxu0
  %4430 = vmatprep.mubr.bf16.mxu0 0
  %4431 = vmatmul.mubr.bf16.gmra.mrb[0].mxu0 %v4040
  %v4432 = vpop.f32.mrb[0].mxu0
  %v4433 = vadd.f32 0.0, %v4432
  %v4434 = vpop.f32.mrb[0].mxu0
  %v4435 = vpop.f32.mrb[0].mxu0
  %v4436 = vadd.f32 0.0, %v4435
  %v4437 = vpop.f32.mrb[0].mxu0
  %4438 = vmatprep.mubr.bf16.mxu0 0
  %4439 = vmatmul.mubr.bf16.gmra.mrb[0].mxu0 %v4043
  %v4440 = vpop.f32.mrb[0].mxu0
  %v4441 = vadd.f32 0.0, %v4440
  %v4442 = vpop.f32.mrb[0].mxu0
  %v4443 = vpop.f32.mrb[0].mxu0
  %v4444 = vadd.f32 0.0, %v4443
  %v4445 = vpop.f32.mrb[0].mxu0
  %4446 = vmatprep.mubr.bf16.mxu0 0
  %4447 = vmatmul.mubr.bf16.gmra.mrb[0].mxu0 %v4046
  %v4448 = vpop.f32.mrb[0].mxu0
  %v4449 = vadd.f32 0.0, %v4448
  %v4450 = vpop.f32.mrb[0].mxu0
  %v4451 = vpop.f32.mrb[0].mxu0
  %v4452 = vadd.f32 0.0, %v4451
  %v4453 = vpop.f32.mrb[0].mxu0
  %4454 = vmatprep.mubr.bf16.mxu0 0
  %4455 = vmatmul.mubr.bf16.gmra.mrb[0].mxu0 %v4049
  %v4456 = vpop.f32.mrb[0].mxu0
  %v4457 = vadd.f32 0.0, %v4456
  %v4458 = vpop.f32.mrb[0].mxu0
  %v4459 = vpop.f32.mrb[0].mxu0
  %v4460 = vadd.f32 0.0, %v4459
  %v4461 = vpop.f32.mrb[0].mxu0
  %4462 = vmatprep.mubr.bf16.mxu0 0
  %4463 = vmatmul.mubr.bf16.gmra.mrb[0].mxu0 %v4052
  %v4464 = vpop.f32.mrb[0].mxu0
  %v4465 = vadd.f32 0.0, %v4464
  %v4466 = vpop.f32.mrb[0].mxu0
  %v4467 = vpop.f32.mrb[0].mxu0
  %v4468 = vadd.f32 0.0, %v4467
  %v4469 = vpop.f32.mrb[0].mxu0
  %4470 = vdwg.mxu0
  %v4471 = vadd.f32 %v3431, %v4089
  %v4472 = vadd.f32 %v3434, %v4092
  %v4473 = vadd.f32 %v3439, %v4097
  %v4474 = vadd.f32 %v3442, %v4100
  %v4475 = vadd.f32 %v3447, %v4105
  %v4476 = vadd.f32 %v3450, %v4108
  %v4477 = vadd.f32 %v3455, %v4113
  %v4478 = vadd.f32 %v3458, %v4116
  %v4479 = vadd.f32 %v3463, %v4121
  %v4480 = vadd.f32 %v3466, %v4124
  %v4481 = vadd.f32 %v3471, %v4129
  %v4482 = vadd.f32 %v3474, %v4132
  %v4483 = vadd.f32 %v3479, %v4137
  %v4484 = vadd.f32 %v3482, %v4140
  %v4485 = vadd.f32 %v3487, %v4145
  %v4486 = vadd.f32 %v3490, %v4148
  %v4487 = vadd.f32 %v3495, %v4153
  %v4488 = vadd.f32 %v3498, %v4156
  %v4489 = vadd.f32 %v3503, %v4161
  %v4490 = vadd.f32 %v3506, %v4164
  %v4491 = vadd.f32 %v3511, %v4169
  %v4492 = vadd.f32 %v3514, %v4172
  %v4493 = vadd.f32 %v3519, %v4177
  %v4494 = vadd.f32 %v3522, %v4180
  %v4495 = vadd.f32 %v3527, %v4185
  %v4496 = vadd.f32 %v3530, %v4188
  %v4497 = vadd.f32 %v3535, %v4193
  %v4498 = vadd.f32 %v3538, %v4196
  %v4499 = vadd.f32 %v3543, %v4201
  %v4500 = vadd.f32 %v3546, %v4204
  %v4501 = vadd.f32 %v3551, %v4209
  %v4502 = vadd.f32 %v3554, %v4212
  %v4503 = vadd.f32 %v3559, %v4217
  %v4504 = vadd.f32 %v3562, %v4220
  %v4505 = vadd.f32 %v3567, %v4225
  %v4506 = vadd.f32 %v3570, %v4228
  %v4507 = vadd.f32 %v3575, %v4233
  %v4508 = vadd.f32 %v3578, %v4236
  %v4509 = vadd.f32 %v3583, %v4241
  %v4510 = vadd.f32 %v3586, %v4244
  %v4511 = vadd.f32 %v3591, %v4249
  %v4512 = vadd.f32 %v3594, %v4252
  %v4513 = vadd.f32 %v3599, %v4257
  %v4514 = vadd.f32 %v3602, %v4260
  %v4515 = vadd.f32 %v3607, %v4265
  %v4516 = vadd.f32 %v3610, %v4268
  %v4517 = vadd.f32 %v3615, %v4273
  %v4518 = vadd.f32 %v3618, %v4276
  %v4519 = vadd.f32 %v3623, %v4281
  %v4520 = vadd.f32 %v3626, %v4284
  %v4521 = vadd.f32 %v3631, %v4289
  %v4522 = vadd.f32 %v3634, %v4292
  %v4523 = vadd.f32 %v3639, %v4297
  %v4524 = vadd.f32 %v3642, %v4300
  %v4525 = vadd.f32 %v3647, %v4305
  %v4526 = vadd.f32 %v3650, %v4308
  %v4527 = vadd.f32 %v3655, %v4313
  %v4528 = vadd.f32 %v3658, %v4316
  %v4529 = vadd.f32 %v3663, %v4321
  %v4530 = vadd.f32 %v3666, %v4324
  %v4531 = vadd.f32 %v3671, %v4329
  %v4532 = vadd.f32 %v3674, %v4332
  %v4533 = vadd.f32 %v3679, %v4337
  %v4534 = vadd.f32 %v3682, %v4340
  %v4535 = vadd.f32 %v3687, %v4345
  %v4536 = vadd.f32 %v3690, %v4348
  %v4537 = vadd.f32 %v3695, %v4353
  %v4538 = vadd.f32 %v3698, %v4356
  %v4539 = vadd.f32 %v3703, %v4361
  %v4540 = vadd.f32 %v3706, %v4364
  %v4541 = vadd.f32 %v3711, %v4369
  %v4542 = vadd.f32 %v3714, %v4372
  %v4543 = vadd.f32 %v3719, %v4377
  %v4544 = vadd.f32 %v3722, %v4380
  %v4545 = vadd.f32 %v3727, %v4385
  %v4546 = vadd.f32 %v3730, %v4388
  %v4547 = vadd.f32 %v3735, %v4393
  %v4548 = vadd.f32 %v3738, %v4396
  %v4549 = vadd.f32 %v3743, %v4401
  %v4550 = vadd.f32 %v3746, %v4404
  %v4551 = vadd.f32 %v3751, %v4409
  %v4552 = vadd.f32 %v3754, %v4412
  %v4553 = vadd.f32 %v3759, %v4417
  %v4554 = vadd.f32 %v3762, %v4420
  %v4555 = vadd.f32 %v3767, %v4425
  %v4556 = vadd.f32 %v3770, %v4428
  %v4557 = vadd.f32 %v3775, %v4433
  %v4558 = vadd.f32 %v3778, %v4436
  %v4559 = vadd.f32 %v3783, %v4441
  %v4560 = vadd.f32 %v3786, %v4444
  %v4561 = vadd.f32 %v3791, %v4449
  %v4562 = vadd.f32 %v3794, %v4452
  %v4563 = vadd.f32 %v3799, %v4457
  %v4564 = vadd.f32 %v3802, %v4460
  %v4565 = vadd.f32 %v3807, %v4465
  %v4566 = vadd.f32 %v3810, %v4468
  %v4567 = vld [vmem:[%s3] sm:$0x1]
  %v4569 = vlaneseq
  %v4570 = vshrl.u32 %v4569, 7
  %v4571 = vsub.s32 0, %v4570
  %v4572 = vrot.slane %v4567, %v4571
  %v4574 = vadd.f32 %v4471, %v4572
  %v4575 = vadd.f32 %v4472, %v4572
  %v4576 = vadd.f32 %v4473, %v4572
  %v4577 = vadd.f32 %v4474, %v4572
  %v4578 = vadd.f32 %v4475, %v4572
  %v4579 = vadd.f32 %v4476, %v4572
  %v4580 = vadd.f32 %v4477, %v4572
  %v4581 = vadd.f32 %v4478, %v4572
  %v4582 = vadd.f32 %v4479, %v4572
  %v4583 = vadd.f32 %v4480, %v4572
  %v4584 = vadd.f32 %v4481, %v4572
  %v4585 = vadd.f32 %v4482, %v4572
  %v4586 = vadd.f32 %v4483, %v4572
  %v4587 = vadd.f32 %v4484, %v4572
  %v4588 = vadd.f32 %v4485, %v4572
  %v4589 = vadd.f32 %v4486, %v4572
  %v4590 = vadd.f32 %v4487, %v4572
  %v4591 = vadd.f32 %v4488, %v4572
  %v4592 = vadd.f32 %v4489, %v4572
  %v4593 = vadd.f32 %v4490, %v4572
  %v4594 = vadd.f32 %v4491, %v4572
  %v4595 = vadd.f32 %v4492, %v4572
  %v4596 = vadd.f32 %v4493, %v4572
  %v4597 = vadd.f32 %v4494, %v4572
  %v4598 = vadd.f32 %v4495, %v4572
  %v4599 = vadd.f32 %v4496, %v4572
  %v4600 = vadd.f32 %v4497, %v4572
  %v4601 = vadd.f32 %v4498, %v4572
  %v4602 = vadd.f32 %v4499, %v4572
  %v4603 = vadd.f32 %v4500, %v4572
  %v4604 = vadd.f32 %v4501, %v4572
  %v4605 = vadd.f32 %v4502, %v4572
  %v4606 = vadd.f32 %v4503, %v4572
  %v4607 = vadd.f32 %v4504, %v4572
  %v4608 = vadd.f32 %v4505, %v4572
  %v4609 = vadd.f32 %v4506, %v4572
  %v4610 = vadd.f32 %v4507, %v4572
  %v4611 = vadd.f32 %v4508, %v4572
  %v4612 = vadd.f32 %v4509, %v4572
  %v4613 = vadd.f32 %v4510, %v4572
  %v4614 = vadd.f32 %v4511, %v4572
  %v4615 = vadd.f32 %v4512, %v4572
  %v4616 = vadd.f32 %v4513, %v4572
  %v4617 = vadd.f32 %v4514, %v4572
  %v4618 = vadd.f32 %v4515, %v4572
  %v4619 = vadd.f32 %v4516, %v4572
  %v4620 = vadd.f32 %v4517, %v4572
  %v4621 = vadd.f32 %v4518, %v4572
  %v4622 = vadd.f32 %v4519, %v4572
  %v4623 = vadd.f32 %v4520, %v4572
  %v4624 = vadd.f32 %v4521, %v4572
  %v4625 = vadd.f32 %v4522, %v4572
  %v4626 = vadd.f32 %v4523, %v4572
  %v4627 = vadd.f32 %v4524, %v4572
  %v4628 = vadd.f32 %v4525, %v4572
  %v4629 = vadd.f32 %v4526, %v4572
  %v4630 = vadd.f32 %v4527, %v4572
  %v4631 = vadd.f32 %v4528, %v4572
  %v4632 = vadd.f32 %v4529, %v4572
  %v4633 = vadd.f32 %v4530, %v4572
  %v4634 = vadd.f32 %v4531, %v4572
  %v4635 = vadd.f32 %v4532, %v4572
  %v4636 = vadd.f32 %v4533, %v4572
  %v4637 = vadd.f32 %v4534, %v4572
  %v4638 = vadd.f32 %v4535, %v4572
  %v4639 = vadd.f32 %v4536, %v4572
  %v4640 = vadd.f32 %v4537, %v4572
  %v4641 = vadd.f32 %v4538, %v4572
  %v4642 = vadd.f32 %v4539, %v4572
  %v4643 = vadd.f32 %v4540, %v4572
  %v4644 = vadd.f32 %v4541, %v4572
  %v4645 = vadd.f32 %v4542, %v4572
  %v4646 = vadd.f32 %v4543, %v4572
  %v4647 = vadd.f32 %v4544, %v4572
  %v4648 = vadd.f32 %v4545, %v4572
  %v4649 = vadd.f32 %v4546, %v4572
  %v4650 = vadd.f32 %v4547, %v4572
  %v4651 = vadd.f32 %v4548, %v4572
  %v4652 = vadd.f32 %v4549, %v4572
  %v4653 = vadd.f32 %v4550, %v4572
  %v4654 = vadd.f32 %v4551, %v4572
  %v4655 = vadd.f32 %v4552, %v4572
  %v4656 = vadd.f32 %v4553, %v4572
  %v4657 = vadd.f32 %v4554, %v4572
  %v4658 = vadd.f32 %v4555, %v4572
  %v4659 = vadd.f32 %v4556, %v4572
  %v4660 = vadd.f32 %v4557, %v4572
  %v4661 = vadd.f32 %v4558, %v4572
  %v4662 = vadd.f32 %v4559, %v4572
  %v4663 = vadd.f32 %v4560, %v4572
  %v4664 = vadd.f32 %v4561, %v4572
  %v4665 = vadd.f32 %v4562, %v4572
  %v4666 = vadd.f32 %v4563, %v4572
  %v4667 = vadd.f32 %v4564, %v4572
  %v4668 = vadd.f32 %v4565, %v4572
  %v4669 = vadd.f32 %v4566, %v4572
  %v4670 = vmax.f32 %v4574, 0.0
  %v4671 = vmax.f32 %v4575, 0.0
  %v4672 = vmax.f32 %v4576, 0.0
  %v4673 = vmax.f32 %v4577, 0.0
  %v4674 = vmax.f32 %v4578, 0.0
  %v4675 = vmax.f32 %v4579, 0.0
  %v4676 = vmax.f32 %v4580, 0.0
  %v4677 = vmax.f32 %v4581, 0.0
  %v4678 = vmax.f32 %v4582, 0.0
  %v4679 = vmax.f32 %v4583, 0.0
  %v4680 = vmax.f32 %v4584, 0.0
  %v4681 = vmax.f32 %v4585, 0.0
  %v4682 = vmax.f32 %v4586, 0.0
  %v4683 = vmax.f32 %v4587, 0.0
  %v4684 = vmax.f32 %v4588, 0.0
  %v4685 = vmax.f32 %v4589, 0.0
  %v4686 = vmax.f32 %v4590, 0.0
  %v4687 = vmax.f32 %v4591, 0.0
  %v4688 = vmax.f32 %v4592, 0.0
  %v4689 = vmax.f32 %v4593, 0.0
  %v4690 = vmax.f32 %v4594, 0.0
  %v4691 = vmax.f32 %v4595, 0.0
  %v4692 = vmax.f32 %v4596, 0.0
  %v4693 = vmax.f32 %v4597, 0.0
  %v4694 = vmax.f32 %v4598, 0.0
  %v4695 = vmax.f32 %v4599, 0.0
  %v4696 = vmax.f32 %v4600, 0.0
  %v4697 = vmax.f32 %v4601, 0.0
  %v4698 = vmax.f32 %v4602, 0.0
  %v4699 = vmax.f32 %v4603, 0.0
  %v4700 = vmax.f32 %v4604, 0.0
  %v4701 = vmax.f32 %v4605, 0.0
  %v4702 = vmax.f32 %v4606, 0.0
  %v4703 = vmax.f32 %v4607, 0.0
  %v4704 = vmax.f32 %v4608, 0.0
  %v4705 = vmax.f32 %v4609, 0.0
  %v4706 = vmax.f32 %v4610, 0.0
  %v4707 = vmax.f32 %v4611, 0.0
  %v4708 = vmax.f32 %v4612, 0.0
  %v4709 = vmax.f32 %v4613, 0.0
  %v4710 = vmax.f32 %v4614, 0.0
  %v4711 = vmax.f32 %v4615, 0.0
  %v4712 = vmax.f32 %v4616, 0.0
  %v4713 = vmax.f32 %v4617, 0.0
  %v4714 = vmax.f32 %v4618, 0.0
  %v4715 = vmax.f32 %v4619, 0.0
  %v4716 = vmax.f32 %v4620, 0.0
  %v4717 = vmax.f32 %v4621, 0.0
  %v4718 = vmax.f32 %v4622, 0.0
  %v4719 = vmax.f32 %v4623, 0.0
  %v4720 = vmax.f32 %v4624, 0.0
  %v4721 = vmax.f32 %v4625, 0.0
  %v4722 = vmax.f32 %v4626, 0.0
  %v4723 = vmax.f32 %v4627, 0.0
  %v4724 = vmax.f32 %v4628, 0.0
  %v4725 = vmax.f32 %v4629, 0.0
  %v4726 = vmax.f32 %v4630, 0.0
  %v4727 = vmax.f32 %v4631, 0.0
  %v4728 = vmax.f32 %v4632, 0.0
  %v4729 = vmax.f32 %v4633, 0.0
  %v4730 = vmax.f32 %v4634, 0.0
  %v4731 = vmax.f32 %v4635, 0.0
  %v4732 = vmax.f32 %v4636, 0.0
  %v4733 = vmax.f32 %v4637, 0.0
  %v4734 = vmax.f32 %v4638, 0.0
  %v4735 = vmax.f32 %v4639, 0.0
  %v4736 = vmax.f32 %v4640, 0.0
  %v4737 = vmax.f32 %v4641, 0.0
  %v4738 = vmax.f32 %v4642, 0.0
  %v4739 = vmax.f32 %v4643, 0.0
  %v4740 = vmax.f32 %v4644, 0.0
  %v4741 = vmax.f32 %v4645, 0.0
  %v4742 = vmax.f32 %v4646, 0.0
  %v4743 = vmax.f32 %v4647, 0.0
  %v4744 = vmax.f32 %v4648, 0.0
  %v4745 = vmax.f32 %v4649, 0.0
  %v4746 = vmax.f32 %v4650, 0.0
  %v4747 = vmax.f32 %v4651, 0.0
  %v4748 = vmax.f32 %v4652, 0.0
  %v4749 = vmax.f32 %v4653, 0.0
  %v4750 = vmax.f32 %v4654, 0.0
  %v4751 = vmax.f32 %v4655, 0.0
  %v4752 = vmax.f32 %v4656, 0.0
  %v4753 = vmax.f32 %v4657, 0.0
  %v4754 = vmax.f32 %v4658, 0.0
  %v4755 = vmax.f32 %v4659, 0.0
  %v4756 = vmax.f32 %v4660, 0.0
  %v4757 = vmax.f32 %v4661, 0.0
  %v4758 = vmax.f32 %v4662, 0.0
  %v4759 = vmax.f32 %v4663, 0.0
  %v4760 = vmax.f32 %v4664, 0.0
  %v4761 = vmax.f32 %v4665, 0.0
  %v4762 = vmax.f32 %v4666, 0.0
  %v4763 = vmax.f32 %v4667, 0.0
  %v4764 = vmax.f32 %v4668, 0.0
  %v4765 = vmax.f32 %v4669, 0.0
  %v4766 = vpack.c.bf16 %v4671, %v4670
  %v4767 = vpack.c.bf16 %v4673, %v4672
  %v4768 = vpack.c.bf16 %v4675, %v4674
  %v4769 = vpack.c.bf16 %v4677, %v4676
  %v4770 = vpack.c.bf16 %v4679, %v4678
  %v4771 = vpack.c.bf16 %v4681, %v4680
  %v4772 = vpack.c.bf16 %v4683, %v4682
  %v4773 = vpack.c.bf16 %v4685, %v4684
  %v4774 = vpack.c.bf16 %v4687, %v4686
  %v4775 = vpack.c.bf16 %v4689, %v4688
  %v4776 = vpack.c.bf16 %v4691, %v4690
  %v4777 = vpack.c.bf16 %v4693, %v4692
  %v4778 = vpack.c.bf16 %v4695, %v4694
  %v4779 = vpack.c.bf16 %v4697, %v4696
  %v4780 = vpack.c.bf16 %v4699, %v4698
  %v4781 = vpack.c.bf16 %v4701, %v4700
  %v4782 = vpack.c.bf16 %v4703, %v4702
  %v4783 = vpack.c.bf16 %v4705, %v4704
  %v4784 = vpack.c.bf16 %v4707, %v4706
  %v4785 = vpack.c.bf16 %v4709, %v4708
  %v4786 = vpack.c.bf16 %v4711, %v4710
  %v4787 = vpack.c.bf16 %v4713, %v4712
  %v4788 = vpack.c.bf16 %v4715, %v4714
  %v4789 = vpack.c.bf16 %v4717, %v4716
  %v4790 = vpack.c.bf16 %v4719, %v4718
  %v4791 = vpack.c.bf16 %v4721, %v4720
  %v4792 = vpack.c.bf16 %v4723, %v4722
  %v4793 = vpack.c.bf16 %v4725, %v4724
  %v4794 = vpack.c.bf16 %v4727, %v4726
  %v4795 = vpack.c.bf16 %v4729, %v4728
  %v4796 = vpack.c.bf16 %v4731, %v4730
  %v4797 = vpack.c.bf16 %v4733, %v4732
  %v4798 = vpack.c.bf16 %v4735, %v4734
  %v4799 = vpack.c.bf16 %v4737, %v4736
  %v4800 = vpack.c.bf16 %v4739, %v4738
  %v4801 = vpack.c.bf16 %v4741, %v4740
  %v4802 = vpack.c.bf16 %v4743, %v4742
  %v4803 = vpack.c.bf16 %v4745, %v4744
  %v4804 = vpack.c.bf16 %v4747, %v4746
  %v4805 = vpack.c.bf16 %v4749, %v4748
  %v4806 = vpack.c.bf16 %v4751, %v4750
  %v4807 = vpack.c.bf16 %v4753, %v4752
  %v4808 = vpack.c.bf16 %v4755, %v4754
  %v4809 = vpack.c.bf16 %v4757, %v4756
  %v4810 = vpack.c.bf16 %v4759, %v4758
  %v4811 = vpack.c.bf16 %v4761, %v4760
  %v4812 = vpack.c.bf16 %v4763, %v4762
  %v4813 = vpack.c.bf16 %v4765, %v4764
  %v4816 = vsel %vm1583, %v4766, 0
  %v4818 = vsel %vm1583, %v4767, 0
  %v4820 = vsel %vm1583, %v4768, 0
  %v4822 = vsel %vm1583, %v4769, 0
  %v4824 = vsel %vm1583, %v4770, 0
  %v4826 = vsel %vm1583, %v4771, 0
  %v4828 = vsel %vm1583, %v4772, 0
  %v4830 = vsel %vm1583, %v4773, 0
  %v4832 = vsel %vm1583, %v4774, 0
  %v4834 = vsel %vm1583, %v4775, 0
  %v4836 = vsel %vm1583, %v4776, 0
  %v4838 = vsel %vm1583, %v4777, 0
  %v4840 = vsel %vm1583, %v4778, 0
  %v4842 = vsel %vm1583, %v4779, 0
  %v4844 = vsel %vm1583, %v4780, 0
  %v4846 = vsel %vm1583, %v4781, 0
  %v4848 = vsel %vm1583, %v4782, 0
  %v4850 = vsel %vm1583, %v4783, 0
  %v4852 = vsel %vm1583, %v4784, 0
  %v4854 = vsel %vm1583, %v4785, 0
  %v4856 = vsel %vm1583, %v4786, 0
  %v4858 = vsel %vm1583, %v4787, 0
  %v4860 = vsel %vm1583, %v4788, 0
  %v4862 = vsel %vm1583, %v4789, 0
  %v4864 = vsel %vm1583, %v4790, 0
  %v4866 = vsel %vm1583, %v4791, 0
  %v4868 = vsel %vm1583, %v4792, 0
  %v4870 = vsel %vm1583, %v4793, 0
  %v4872 = vsel %vm1583, %v4794, 0
  %v4874 = vsel %vm1583, %v4795, 0
  %v4876 = vsel %vm1583, %v4796, 0
  %v4878 = vsel %vm1583, %v4797, 0
  %v4880 = vsel %vm1583, %v4798, 0
  %v4882 = vsel %vm1583, %v4799, 0
  %v4884 = vsel %vm1583, %v4800, 0
  %v4886 = vsel %vm1583, %v4801, 0
  %v4888 = vsel %vm1583, %v4802, 0
  %v4890 = vsel %vm1583, %v4803, 0
  %v4892 = vsel %vm1583, %v4804, 0
  %v4894 = vsel %vm1583, %v4805, 0
  %v4896 = vsel %vm1583, %v4806, 0
  %v4898 = vsel %vm1583, %v4807, 0
  %v4900 = vsel %vm1583, %v4808, 0
  %v4902 = vsel %vm1583, %v4809, 0
  %v4904 = vsel %vm1583, %v4810, 0
  %v4906 = vsel %vm1583, %v4811, 0
  %v4908 = vsel %vm1583, %v4812, 0
  %v4910 = vsel %vm1583, %v4813, 0
  %v4959 = vunpack.c.l.b16 %v4816
  %v4960 = vunpack.c.h.b16 %v4816
  %v4961 = vunpack.c.l.b16 %v4818
  %v4962 = vunpack.c.h.b16 %v4818
  %v4963 = vunpack.c.l.b16 %v4820
  %v4964 = vunpack.c.h.b16 %v4820
  %v4965 = vunpack.c.l.b16 %v4822
  %v4966 = vunpack.c.h.b16 %v4822
  %v4967 = vunpack.c.l.b16 %v4824
  %v4968 = vunpack.c.h.b16 %v4824
  %v4969 = vunpack.c.l.b16 %v4826
  %v4970 = vunpack.c.h.b16 %v4826
  %v4971 = vunpack.c.l.b16 %v4828
  %v4972 = vunpack.c.h.b16 %v4828
  %v4973 = vunpack.c.l.b16 %v4830
  %v4974 = vunpack.c.h.b16 %v4830
  %v4975 = vunpack.c.l.b16 %v4832
  %v4976 = vunpack.c.h.b16 %v4832
  %v4977 = vunpack.c.l.b16 %v4834
  %v4978 = vunpack.c.h.b16 %v4834
  %v4979 = vunpack.c.l.b16 %v4836
  %v4980 = vunpack.c.h.b16 %v4836
  %v4981 = vunpack.c.l.b16 %v4838
  %v4982 = vunpack.c.h.b16 %v4838
  %v4983 = vunpack.c.l.b16 %v4840
  %v4984 = vunpack.c.h.b16 %v4840
  %v4985 = vunpack.c.l.b16 %v4842
  %v4986 = vunpack.c.h.b16 %v4842
  %v4987 = vunpack.c.l.b16 %v4844
  %v4988 = vunpack.c.h.b16 %v4844
  %v4989 = vunpack.c.l.b16 %v4846
  %v4990 = vunpack.c.h.b16 %v4846
  %v4991 = vunpack.c.l.b16 %v4848
  %v4992 = vunpack.c.h.b16 %v4848
  %v4993 = vunpack.c.l.b16 %v4850
  %v4994 = vunpack.c.h.b16 %v4850
  %v4995 = vunpack.c.l.b16 %v4852
  %v4996 = vunpack.c.h.b16 %v4852
  %v4997 = vunpack.c.l.b16 %v4854
  %v4998 = vunpack.c.h.b16 %v4854
  %v4999 = vunpack.c.l.b16 %v4856
  %v5000 = vunpack.c.h.b16 %v4856
  %v5001 = vunpack.c.l.b16 %v4858
  %v5002 = vunpack.c.h.b16 %v4858
  %v5003 = vunpack.c.l.b16 %v4860
  %v5004 = vunpack.c.h.b16 %v4860
  %v5005 = vunpack.c.l.b16 %v4862
  %v5006 = vunpack.c.h.b16 %v4862
  %v5007 = vunpack.c.l.b16 %v4864
  %v5008 = vunpack.c.h.b16 %v4864
  %v5009 = vunpack.c.l.b16 %v4866
  %v5010 = vunpack.c.h.b16 %v4866
  %v5011 = vunpack.c.l.b16 %v4868
  %v5012 = vunpack.c.h.b16 %v4868
  %v5013 = vunpack.c.l.b16 %v4870
  %v5014 = vunpack.c.h.b16 %v4870
  %v5015 = vunpack.c.l.b16 %v4872
  %v5016 = vunpack.c.h.b16 %v4872
  %v5017 = vunpack.c.l.b16 %v4874
  %v5018 = vunpack.c.h.b16 %v4874
  %v5019 = vunpack.c.l.b16 %v4876
  %v5020 = vunpack.c.h.b16 %v4876
  %v5021 = vunpack.c.l.b16 %v4878
  %v5022 = vunpack.c.h.b16 %v4878
  %v5023 = vunpack.c.l.b16 %v4880
  %v5024 = vunpack.c.h.b16 %v4880
  %v5025 = vunpack.c.l.b16 %v4882
  %v5026 = vunpack.c.h.b16 %v4882
  %v5027 = vunpack.c.l.b16 %v4884
  %v5028 = vunpack.c.h.b16 %v4884
  %v5029 = vunpack.c.l.b16 %v4886
  %v5030 = vunpack.c.h.b16 %v4886
  %v5031 = vunpack.c.l.b16 %v4888
  %v5032 = vunpack.c.h.b16 %v4888
  %v5033 = vunpack.c.l.b16 %v4890
  %v5034 = vunpack.c.h.b16 %v4890
  %v5035 = vunpack.c.l.b16 %v4892
  %v5036 = vunpack.c.h.b16 %v4892
  %v5037 = vunpack.c.l.b16 %v4894
  %v5038 = vunpack.c.h.b16 %v4894
  %v5039 = vunpack.c.l.b16 %v4896
  %v5040 = vunpack.c.h.b16 %v4896
  %v5041 = vunpack.c.l.b16 %v4898
  %v5042 = vunpack.c.h.b16 %v4898
  %v5043 = vunpack.c.l.b16 %v4900
  %v5044 = vunpack.c.h.b16 %v4900
  %v5045 = vunpack.c.l.b16 %v4902
  %v5046 = vunpack.c.h.b16 %v4902
  %v5047 = vunpack.c.l.b16 %v4904
  %v5048 = vunpack.c.h.b16 %v4904
  %v5049 = vunpack.c.l.b16 %v4906
  %v5050 = vunpack.c.h.b16 %v4906
  %v5051 = vunpack.c.l.b16 %v4908
  %v5052 = vunpack.c.h.b16 %v4908
  %v5053 = vunpack.c.l.b16 %v4910
  %v5054 = vunpack.c.h.b16 %v4910
  %v5055 = vpack.c.b16 %v4959, %v4959
  %v5056 = vpack.c.b16 %v4960, %v4960
  %v5057 = vpack.c.b16 %v4961, %v4961
  %v5058 = vpack.c.b16 %v4962, %v4962
  %v5059 = vpack.c.b16 %v4963, %v4963
  %v5060 = vpack.c.b16 %v4964, %v4964
  %v5061 = vpack.c.b16 %v4965, %v4965
  %v5062 = vpack.c.b16 %v4966, %v4966
  %v5063 = vpack.c.b16 %v4967, %v4967
  %v5064 = vpack.c.b16 %v4968, %v4968
  %v5065 = vpack.c.b16 %v4969, %v4969
  %v5066 = vpack.c.b16 %v4970, %v4970
  %v5067 = vpack.c.b16 %v4971, %v4971
  %v5068 = vpack.c.b16 %v4972, %v4972
  %v5069 = vpack.c.b16 %v4973, %v4973
  %v5070 = vpack.c.b16 %v4974, %v4974
  %v5071 = vpack.c.b16 %v4975, %v4975
  %v5072 = vpack.c.b16 %v4976, %v4976
  %v5073 = vpack.c.b16 %v4977, %v4977
  %v5074 = vpack.c.b16 %v4978, %v4978
  %v5075 = vpack.c.b16 %v4979, %v4979
  %v5076 = vpack.c.b16 %v4980, %v4980
  %v5077 = vpack.c.b16 %v4981, %v4981
  %v5078 = vpack.c.b16 %v4982, %v4982
  %v5079 = vpack.c.b16 %v4983, %v4983
  %v5080 = vpack.c.b16 %v4984, %v4984
  %v5081 = vpack.c.b16 %v4985, %v4985
  %v5082 = vpack.c.b16 %v4986, %v4986
  %v5083 = vpack.c.b16 %v4987, %v4987
  %v5084 = vpack.c.b16 %v4988, %v4988
  %v5085 = vpack.c.b16 %v4989, %v4989
  %v5086 = vpack.c.b16 %v4990, %v4990
  %v5087 = vpack.c.b16 %v4991, %v4991
  %v5088 = vpack.c.b16 %v4992, %v4992
  %v5089 = vpack.c.b16 %v4993, %v4993
  %v5090 = vpack.c.b16 %v4994, %v4994
  %v5091 = vpack.c.b16 %v4995, %v4995
  %v5092 = vpack.c.b16 %v4996, %v4996
  %v5093 = vpack.c.b16 %v4997, %v4997
  %v5094 = vpack.c.b16 %v4998, %v4998
  %v5095 = vpack.c.b16 %v4999, %v4999
  %v5096 = vpack.c.b16 %v5000, %v5000
  %v5097 = vpack.c.b16 %v5001, %v5001
  %v5098 = vpack.c.b16 %v5002, %v5002
  %v5099 = vpack.c.b16 %v5003, %v5003
  %v5100 = vpack.c.b16 %v5004, %v5004
  %v5101 = vpack.c.b16 %v5005, %v5005
  %v5102 = vpack.c.b16 %v5006, %v5006
  %v5103 = vpack.c.b16 %v5007, %v5007
  %v5104 = vpack.c.b16 %v5008, %v5008
  %v5105 = vpack.c.b16 %v5009, %v5009
  %v5106 = vpack.c.b16 %v5010, %v5010
  %v5107 = vpack.c.b16 %v5011, %v5011
  %v5108 = vpack.c.b16 %v5012, %v5012
  %v5109 = vpack.c.b16 %v5013, %v5013
  %v5110 = vpack.c.b16 %v5014, %v5014
  %v5111 = vpack.c.b16 %v5015, %v5015
  %v5112 = vpack.c.b16 %v5016, %v5016
  %v5113 = vpack.c.b16 %v5017, %v5017
  %v5114 = vpack.c.b16 %v5018, %v5018
  %v5115 = vpack.c.b16 %v5019, %v5019
  %v5116 = vpack.c.b16 %v5020, %v5020
  %v5117 = vpack.c.b16 %v5021, %v5021
  %v5118 = vpack.c.b16 %v5022, %v5022
  %v5119 = vpack.c.b16 %v5023, %v5023
  %v5120 = vpack.c.b16 %v5024, %v5024
  %v5121 = vpack.c.b16 %v5025, %v5025
  %v5122 = vpack.c.b16 %v5026, %v5026
  %v5123 = vpack.c.b16 %v5027, %v5027
  %v5124 = vpack.c.b16 %v5028, %v5028
  %v5125 = vpack.c.b16 %v5029, %v5029
  %v5126 = vpack.c.b16 %v5030, %v5030
  %v5127 = vpack.c.b16 %v5031, %v5031
  %v5128 = vpack.c.b16 %v5032, %v5032
  %v5129 = vpack.c.b16 %v5033, %v5033
  %v5130 = vpack.c.b16 %v5034, %v5034
  %v5131 = vpack.c.b16 %v5035, %v5035
  %v5132 = vpack.c.b16 %v5036, %v5036
  %v5133 = vpack.c.b16 %v5037, %v5037
  %v5134 = vpack.c.b16 %v5038, %v5038
  %v5135 = vpack.c.b16 %v5039, %v5039
  %v5136 = vpack.c.b16 %v5040, %v5040
  %v5137 = vpack.c.b16 %v5041, %v5041
  %v5138 = vpack.c.b16 %v5042, %v5042
  %v5139 = vpack.c.b16 %v5043, %v5043
  %v5140 = vpack.c.b16 %v5044, %v5044
  %v5141 = vpack.c.b16 %v5045, %v5045
  %v5142 = vpack.c.b16 %v5046, %v5046
  %v5143 = vpack.c.b16 %v5047, %v5047
  %v5144 = vpack.c.b16 %v5048, %v5048
  %v5145 = vpack.c.b16 %v5049, %v5049
  %v5146 = vpack.c.b16 %v5050, %v5050
  %v5147 = vpack.c.b16 %v5051, %v5051
  %v5148 = vpack.c.b16 %v5052, %v5052
  %v5149 = vpack.c.b16 %v5053, %v5053
  %v5150 = vpack.c.b16 %v5054, %v5054
  %5247 = vst [vmem:[%s4] sm:$0xf] %v5055
  %5248 = vst [vmem:[%s4 + $0x4] sm:$0xf] %v5056
  %5249 = vst [vmem:[%s4 + $0x8] sm:$0xf] %v5057
  %5250 = vst [vmem:[%s4 + $0xc] sm:$0xf] %v5058
  %5251 = vst [vmem:[%s4 + $0x10] sm:$0xf] %v5059
  %5252 = vst [vmem:[%s4 + $0x14] sm:$0xf] %v5060
  %5253 = vst [vmem:[%s4 + $0x18] sm:$0xf] %v5061
  %5254 = vst [vmem:[%s4 + $0x1c] sm:$0xf] %v5062
  %5255 = vst [vmem:[%s4 + $0x20] sm:$0xf] %v5063
  %5256 = vst [vmem:[%s4 + $0x24] sm:$0xf] %v5064
  %5257 = vst [vmem:[%s4 + $0x28] sm:$0xf] %v5065
  %5258 = vst [vmem:[%s4 + $0x2c] sm:$0xf] %v5066
  %5259 = vst [vmem:[%s4 + $0x30] sm:$0xf] %v5067
  %5260 = vst [vmem:[%s4 + $0x34] sm:$0xf] %v5068
  %5261 = vst [vmem:[%s4 + $0x38] sm:$0xf] %v5069
  %5262 = vst [vmem:[%s4 + $0x3c] sm:$0xf] %v5070
  %5263 = vst [vmem:[%s4 + $0x40] sm:$0xf] %v5071
  %5264 = vst [vmem:[%s4 + $0x44] sm:$0xf] %v5072
  %5265 = vst [vmem:[%s4 + $0x48] sm:$0xf] %v5073
  %5266 = vst [vmem:[%s4 + $0x4c] sm:$0xf] %v5074
  %5267 = vst [vmem:[%s4 + $0x50] sm:$0xf] %v5075
  %5268 = vst [vmem:[%s4 + $0x54] sm:$0xf] %v5076
  %5269 = vst [vmem:[%s4 + $0x58] sm:$0xf] %v5077
  %5270 = vst [vmem:[%s4 + $0x5c] sm:$0xf] %v5078
  %5271 = vst [vmem:[%s4 + $0x60] sm:$0xf] %v5079
  %5272 = vst [vmem:[%s4 + $0x64] sm:$0xf] %v5080
  %5273 = vst [vmem:[%s4 + $0x68] sm:$0xf] %v5081
  %5274 = vst [vmem:[%s4 + $0x6c] sm:$0xf] %v5082
  %5275 = vst [vmem:[%s4 + $0x70] sm:$0xf] %v5083
  %5276 = vst [vmem:[%s4 + $0x74] sm:$0xf] %v5084
  %5277 = vst [vmem:[%s4 + $0x78] sm:$0xf] %v5085
  %5278 = vst [vmem:[%s4 + $0x7c] sm:$0xf] %v5086
  %5279 = vst [vmem:[%s4 + $0x80] sm:$0xf] %v5087
  %5280 = vst [vmem:[%s4 + $0x84] sm:$0xf] %v5088
  %5281 = vst [vmem:[%s4 + $0x88] sm:$0xf] %v5089
  %5282 = vst [vmem:[%s4 + $0x8c] sm:$0xf] %v5090
  %5283 = vst [vmem:[%s4 + $0x90] sm:$0xf] %v5091
  %5284 = vst [vmem:[%s4 + $0x94] sm:$0xf] %v5092
  %5285 = vst [vmem:[%s4 + $0x98] sm:$0xf] %v5093
  %5286 = vst [vmem:[%s4 + $0x9c] sm:$0xf] %v5094
  %5287 = vst [vmem:[%s4 + $0xa0] sm:$0xf] %v5095
  %5288 = vst [vmem:[%s4 + $0xa4] sm:$0xf] %v5096
  %5289 = vst [vmem:[%s4 + $0xa8] sm:$0xf] %v5097
  %5290 = vst [vmem:[%s4 + $0xac] sm:$0xf] %v5098
  %5291 = vst [vmem:[%s4 + $0xb0] sm:$0xf] %v5099
  %5292 = vst [vmem:[%s4 + $0xb4] sm:$0xf] %v5100
  %5293 = vst [vmem:[%s4 + $0xb8] sm:$0xf] %v5101
  %5294 = vst [vmem:[%s4 + $0xbc] sm:$0xf] %v5102
  %5295 = vst [vmem:[%s4 + $0xc0] sm:$0xf] %v5103
  %5296 = vst [vmem:[%s4 + $0xc4] sm:$0xf] %v5104
  %5297 = vst [vmem:[%s4 + $0xc8] sm:$0xf] %v5105
  %5298 = vst [vmem:[%s4 + $0xcc] sm:$0xf] %v5106
  %5299 = vst [vmem:[%s4 + $0xd0] sm:$0xf] %v5107
  %5300 = vst [vmem:[%s4 + $0xd4] sm:$0xf] %v5108
  %5301 = vst [vmem:[%s4 + $0xd8] sm:$0xf] %v5109
  %5302 = vst [vmem:[%s4 + $0xdc] sm:$0xf] %v5110
  %5303 = vst [vmem:[%s4 + $0xe0] sm:$0xf] %v5111
  %5304 = vst [vmem:[%s4 + $0xe4] sm:$0xf] %v5112
  %5305 = vst [vmem:[%s4 + $0xe8] sm:$0xf] %v5113
  %5306 = vst [vmem:[%s4 + $0xec] sm:$0xf] %v5114
  %5307 = vst [vmem:[%s4 + $0xf0] sm:$0xf] %v5115
  %5308 = vst [vmem:[%s4 + $0xf4] sm:$0xf] %v5116
  %5309 = vst [vmem:[%s4 + $0xf8] sm:$0xf] %v5117
  %5310 = vst [vmem:[%s4 + $0xfc] sm:$0xf] %v5118
  %5311 = vst [vmem:[%s4 + $0x100] sm:$0xf] %v5119
  %5312 = vst [vmem:[%s4 + $0x104] sm:$0xf] %v5120
  %5313 = vst [vmem:[%s4 + $0x108] sm:$0xf] %v5121
  %5314 = vst [vmem:[%s4 + $0x10c] sm:$0xf] %v5122
  %5315 = vst [vmem:[%s4 + $0x110] sm:$0xf] %v5123
  %5316 = vst [vmem:[%s4 + $0x114] sm:$0xf] %v5124
  %5317 = vst [vmem:[%s4 + $0x118] sm:$0xf] %v5125
  %5318 = vst [vmem:[%s4 + $0x11c] sm:$0xf] %v5126
  %5319 = vst [vmem:[%s4 + $0x120] sm:$0xf] %v5127
  %5320 = vst [vmem:[%s4 + $0x124] sm:$0xf] %v5128
  %5321 = vst [vmem:[%s4 + $0x128] sm:$0xf] %v5129
  %5322 = vst [vmem:[%s4 + $0x12c] sm:$0xf] %v5130
  %5323 = vst [vmem:[%s4 + $0x130] sm:$0xf] %v5131
  %5324 = vst [vmem:[%s4 + $0x134] sm:$0xf] %v5132
  %5325 = vst [vmem:[%s4 + $0x138] sm:$0xf] %v5133
  %5326 = vst [vmem:[%s4 + $0x13c] sm:$0xf] %v5134
  %5327 = vst [vmem:[%s4 + $0x140] sm:$0xf] %v5135
  %5328 = vst [vmem:[%s4 + $0x144] sm:$0xf] %v5136
  %5329 = vst [vmem:[%s4 + $0x148] sm:$0xf] %v5137
  %5330 = vst [vmem:[%s4 + $0x14c] sm:$0xf] %v5138
  %5331 = vst [vmem:[%s4 + $0x150] sm:$0xf] %v5139
  %5332 = vst [vmem:[%s4 + $0x154] sm:$0xf] %v5140
  %5333 = vst [vmem:[%s4 + $0x158] sm:$0xf] %v5141
  %5334 = vst [vmem:[%s4 + $0x15c] sm:$0xf] %v5142
  %5335 = vst [vmem:[%s4 + $0x160] sm:$0xf] %v5143
  %5336 = vst [vmem:[%s4 + $0x164] sm:$0xf] %v5144
  %5337 = vst [vmem:[%s4 + $0x168] sm:$0xf] %v5145
  %5338 = vst [vmem:[%s4 + $0x16c] sm:$0xf] %v5146
  %5339 = vst [vmem:[%s4 + $0x170] sm:$0xf] %v5147
  %5340 = vst [vmem:[%s4 + $0x174] sm:$0xf] %v5148
  %5341 = vst [vmem:[%s4 + $0x178] sm:$0xf] %v5149
  %5342 = vst [vmem:[%s4 + $0x17c] sm:$0xf] %v5150
  // Predicated region
  $region18: #{double_conv_forward.1} parent=0 // pred_check
    _
  $region19: #{double_conv_forward.1} parent=0 // pred_check_branch
    %5344 = sbr.rel (0) target = $region21
  $region20: #{double_conv_forward.1} parent=0 // pred_region
    _
  $region21: #{double_conv_forward.1} parent=0 // pred_fallthru
    _
  // Predicated region
  $region22: #{double_conv_forward.1} parent=0 // pred_check
    _
  $region23: #{double_conv_forward.1} parent=0 // pred_check_branch
    %5346 = sbr.rel (0) target = $region25
  $region24: #{double_conv_forward.1} parent=0 // pred_region
    _
  $region25: #{double_conv_forward.1} parent=0 // pred_fallthru
    _

</llo_original>
